<compile_context>
chip_gen: v7x
topology: tpu7x:2x2x1
jax: 0.10.0
libtpu: 0.0.40
codegen_flags: <defaults>
</compile_context>

<pallas_src>
import jax
import jax.numpy as jnp
from jax import lax
from jax.experimental import pallas as pl
from jax.experimental.pallas import tpu as pltpu

_INV_SQRT2 = 0.7071067811865476


def _erf(x):
    # Abramowitz & Stegun 7.1.26 rational approximation, |error| <= 1.5e-7.
    p = 0.3275911
    a1, a2, a3, a4, a5 = (0.254829592, -0.284496736, 1.421413741,
                          -1.453152027, 1.061405429)
    ax = jnp.abs(x)
    t = 1.0 / (1.0 + p * ax)
    poly = t * (a1 + t * (a2 + t * (a3 + t * (a4 + t * a5))))
    y = 1.0 - poly * jnp.exp(-(ax * ax))
    return jnp.where(x >= 0, y, -y)


def _gelu(x):
    # Exact (erf-based) GELU, matching PyTorch nn.GELU() default.
    return 0.5 * x * (1.0 + _erf(x * _INV_SQRT2))


def _make_mlp_kernel(H, W, C):
    N = H * W

    def kernel(x_ref, w1_ref, b1_ref, wdw_ref, bdw_ref, w2_ref, b2_ref,
               o_ref, pad_ref):
        # ---- fc1: (N, Cin) @ (Cin, C) on the MXU --------------------------
        h = jnp.dot(x_ref[0], w1_ref[...],
                    preferred_element_type=jnp.float32) + b1_ref[...]

        # ---- depthwise 3x3 conv, padding=1, channels on the lane dim ------
        # Zero-pad inside a VMEM scratch (no HBM round trip).
        pad_ref[...] = jnp.zeros((H + 2, W + 2, C), jnp.float32)
        pad_ref[1:H + 1, 1:W + 1, :] = h.reshape(H, W, C)

        acc = jnp.zeros((H, W, C), jnp.float32)
        for ky in range(3):              # fully unrolled: 9 shifted-tap FMAs
            for kx in range(3):
                tap = wdw_ref[3 * ky + kx, :].reshape(1, 1, C)
                acc = acc + pad_ref[ky:ky + H, kx:kx + W, :] * tap
        y = acc.reshape(N, C) + bdw_ref[...]

        # ---- GELU + fc2 on the MXU ----------------------------------------
        g = _gelu(y)
        o_ref[0] = jnp.dot(g, w2_ref[...],
                           preferred_element_type=jnp.float32) + b2_ref[...]

    return kernel


def mlp_forward(x, params, H, W):
    """x: (B, H*W, Cin) -> (B, H*W, Cout); matches Mlp.forward(x, H, W)."""
    w1, b1, w_dw, b_dw, w2, b2 = params
    B, N, Cin = x.shape
    assert N == H * W
    Chid = w1.shape[1]
    Cout = w2.shape[1]

    # TODO(synk): for large feature maps, additionally tile H with a 1-row
    # halo so a single block fits the v7x 64 MiB VMEM budget.
    return pl.pallas_call(
        _make_mlp_kernel(H, W, Chid),
        out_shape=jax.ShapeDtypeStruct((B, N, Cout), jnp.float32),
        grid=(B,),
        in_specs=[
            pl.BlockSpec((1, N, Cin), lambda b: (b, 0, 0)),   # x (per batch)
            pl.BlockSpec((Cin, Chid), lambda b: (0, 0)),      # fc1 weight
            pl.BlockSpec((1, Chid), lambda b: (0, 0)),        # fc1 bias
            pl.BlockSpec((9, Chid), lambda b: (0, 0)),        # dwconv taps
            pl.BlockSpec((1, Chid), lambda b: (0, 0)),        # dwconv bias
            pl.BlockSpec((Chid, Cout), lambda b: (0, 0)),     # fc2 weight
            pl.BlockSpec((1, Cout), lambda b: (0, 0)),        # fc2 bias
        ],
        out_specs=pl.BlockSpec((1, N, Cout), lambda b: (b, 0, 0)),
        scratch_shapes=[pltpu.VMEM((H + 2, W + 2, Chid), jnp.float32)],
        compiler_params=pltpu.CompilerParams(
            dimension_semantics=("parallel",)),
    )(x, w1, b1, w_dw, b_dw, w2, b2)


# ---------------------------------------------------------------------------
# Deterministic parameter init (shapes from Mlp.__init__)
# ---------------------------------------------------------------------------
def init_params(key, in_features, hidden_features, out_features):
    k1, k2, k3, k4, k5, k6 = jax.random.split(key, 6)
    w1 = jax.random.normal(k1, (in_features, hidden_features),
                           jnp.float32) / jnp.sqrt(float(in_features))
    b1 = 0.1 * jax.random.normal(k2, (1, hidden_features), jnp.float32)
    # conv1.weight has PyTorch shape (C, 1, 3, 3); stored here as (9, C) with
    # w_dw[3*ky + kx, c] == conv1.weight[c, 0, ky, kx]
    w_dw = jax.random.normal(k3, (9, hidden_features),
                             jnp.float32) * jnp.sqrt(2.0 / 9.0)
    b_dw = 0.1 * jax.random.normal(k4, (1, hidden_features), jnp.float32)
    w2 = jax.random.normal(k5, (hidden_features, out_features),
                           jnp.float32) / jnp.sqrt(float(hidden_features))
    b2 = 0.1 * jax.random.normal(k6, (1, out_features), jnp.float32)
    return (w1, b1, w_dw, b_dw, w2, b2)


# ---------------------------------------------------------------------------
# Pure-JAX reference (correctness check only)
# ---------------------------------------------------------------------------
def reference(x, params, H, W):
    w1, b1, w_dw, b_dw, w2, b2 = params
    B, N, Cin = x.shape
    C = w1.shape[1]
    HIGH = jax.lax.Precision.HIGHEST
    h = jnp.matmul(x, w1, precision=HIGH) + b1                   # fc1
    hm = h.reshape(B, H, W, C)
    hp = jnp.pad(hm, ((0, 0), (1, 1), (1, 1), (0, 0)))
    y = jnp.zeros((B, H, W, C), jnp.float32)
    for ky in range(3):                                          # depthwise 3x3
        for kx in range(3):
            y = y + hp[:, ky:ky + H, kx:kx + W, :] * \
                w_dw[3 * ky + kx].reshape(1, 1, 1, C)
    y = y.reshape(B, N, C) + b_dw
    g = jax.nn.gelu(y, approximate=False)                        # exact GELU
    return jnp.matmul(g, w2, precision=HIGH) + b2                # fc2


if __name__ == "__main__":
    key = jax.random.PRNGKey(0)
    kx, kp = jax.random.split(key)

    B, H, W = 2, 16, 16
    in_features, hidden_features, out_features = 32, 64, 32

    x = jax.random.normal(kx, (B, H * W, in_features), jnp.float32)
    params = init_params(kp, in_features, hidden_features, out_features)

    out = jax.block_until_ready(mlp_forward(x, params, H, W))
    ref = reference(x, params, H, W)

    assert out.shape == (B, H * W, out_features)
    err = float(jnp.max(jnp.abs(out - ref)))
    assert jnp.allclose(out, ref, atol=5e-3, rtol=5e-3), err
    print("KERNEL_OK")
</pallas_src>

<mosaic_0001>
module attributes {stable_mosaic.version = 11 : i64} {
  func.func @kernel(%arg0: i32, %arg1: memref<1x256x32xf32, #tpu.memory_space<vmem>>, %arg2: memref<32x64xf32, #tpu.memory_space<vmem>>, %arg3: memref<1x64xf32, #tpu.memory_space<vmem>>, %arg4: memref<9x64xf32, #tpu.memory_space<vmem>>, %arg5: memref<1x64xf32, #tpu.memory_space<vmem>>, %arg6: memref<64x32xf32, #tpu.memory_space<vmem>>, %arg7: memref<1x32xf32, #tpu.memory_space<vmem>>, %arg8: memref<1x256x32xf32, #tpu.memory_space<vmem>>, %arg9: memref<18x18x64xf32, #tpu.memory_space<vmem>>) attributes {dimension_semantics = [#tpu.dimension_semantics<parallel>], iteration_bounds = array<i64: 2>, scalar_prefetch = 0 : i64, scratch_operands = 1 : i64, tpu.core_type = #tpu.core_type<tc>, window_params = [{transform_indices = @transform_0, window_bounds = array<i64: 1, 256, 32>}, {pipeline_mode = #tpu.pipeline_mode<synchronous>, transform_indices = @transform_1, window_bounds = array<i64: 32, 64>}, {pipeline_mode = #tpu.pipeline_mode<synchronous>, transform_indices = @transform_2, window_bounds = array<i64: 1, 64>}, {pipeline_mode = #tpu.pipeline_mode<synchronous>, transform_indices = @transform_3, window_bounds = array<i64: 9, 64>}, {pipeline_mode = #tpu.pipeline_mode<synchronous>, transform_indices = @transform_4, window_bounds = array<i64: 1, 64>}, {pipeline_mode = #tpu.pipeline_mode<synchronous>, transform_indices = @transform_5, window_bounds = array<i64: 64, 32>}, {pipeline_mode = #tpu.pipeline_mode<synchronous>, transform_indices = @transform_6, window_bounds = array<i64: 1, 32>}, {transform_indices = @transform_7, window_bounds = array<i64: 1, 256, 32>}]} {
    %c0 = arith.constant 0 : index
    %c0_0 = arith.constant 0 : index
    %c0_1 = arith.constant 0 : index
    %0 = vector.load %arg1[%c0, %c0_0, %c0_1] : memref<1x256x32xf32, #tpu.memory_space<vmem>>, vector<1x256x32xf32>
    %1 = vector.shape_cast %0 : vector<1x256x32xf32> to vector<256x32xf32>
    %c0_2 = arith.constant 0 : index
    %c0_3 = arith.constant 0 : index
    %2 = vector.load %arg2[%c0_2, %c0_3] : memref<32x64xf32, #tpu.memory_space<vmem>>, vector<32x64xf32>
    %cst = arith.constant dense<0.000000e+00> : vector<256x64xf32>
    %3 = tpu.matmul %1, %2, %cst {dimension_numbers = #tpu.dot_dimension_numbers<[1], [0], [0], [1], [0, 0, 1, 1], [], []>} : vector<256x32xf32>, vector<32x64xf32>, vector<256x64xf32> -> vector<256x64xf32>
    %c0_4 = arith.constant 0 : index
    %c0_5 = arith.constant 0 : index
    %4 = vector.load %arg3[%c0_4, %c0_5] : memref<1x64xf32, #tpu.memory_space<vmem>>, vector<1x64xf32>
    %5 = vector.broadcast %4 : vector<1x64xf32> to vector<256x64xf32>
    %6 = arith.addf %3, %5 : vector<256x64xf32>
    %cst_6 = arith.constant 0.000000e+00 : f32
    %7 = vector.broadcast %cst_6 : f32 to vector<18x18x64xf32>
    %c0_7 = arith.constant 0 : index
    %c0_8 = arith.constant 0 : index
    %c0_9 = arith.constant 0 : index
    %8 = vector.load %arg9[%c0_7, %c0_8, %c0_9] : memref<18x18x64xf32, #tpu.memory_space<vmem>>, vector<18x18x64xf32>
    tpu.vector_store %arg9[%c0_7, %c0_8, %c0_9], %7 {strides = array<i32>} : memref<18x18x64xf32, #tpu.memory_space<vmem>>, vector<18x18x64xf32>,
    %9 = vector.shape_cast %6 : vector<256x64xf32> to vector<16x16x64xf32>
    %c1 = arith.constant 1 : index
    %c1_10 = arith.constant 1 : index
    %c0_11 = arith.constant 0 : index
    %10 = vector.load %arg9[%c1, %c1_10, %c0_11] : memref<18x18x64xf32, #tpu.memory_space<vmem>>, vector<16x16x64xf32>
    tpu.vector_store %arg9[%c1, %c1_10, %c0_11], %9 {strides = array<i32>} : memref<18x18x64xf32, #tpu.memory_space<vmem>>, vector<16x16x64xf32>,
    %cst_12 = arith.constant 0.000000e+00 : f32
    %11 = vector.broadcast %cst_12 : f32 to vector<16x16x64xf32>
    %c0_13 = arith.constant 0 : index
    %c0_14 = arith.constant 0 : index
    %12 = vector.load %arg4[%c0_13, %c0_14] : memref<9x64xf32, #tpu.memory_space<vmem>>, vector<1x64xf32>
    %13 = vector.shape_cast %12 : vector<1x64xf32> to vector<64xf32>
    %14 = vector.shape_cast %13 : vector<64xf32> to vector<1x1x64xf32>
    %c0_15 = arith.constant 0 : index
    %c0_16 = arith.constant 0 : index
    %c0_17 = arith.constant 0 : index
    %15 = vector.load %arg9[%c0_15, %c0_16, %c0_17] : memref<18x18x64xf32, #tpu.memory_space<vmem>>, vector<16x16x64xf32>
    %16 = vector.broadcast %14 : vector<1x1x64xf32> to vector<16x16x64xf32>
    %17 = arith.mulf %15, %16 : vector<16x16x64xf32>
    %18 = arith.addf %11, %17 : vector<16x16x64xf32>
    %c1_18 = arith.constant 1 : index
    %c0_19 = arith.constant 0 : index
    %19 = vector.load %arg4[%c1_18, %c0_19] : memref<9x64xf32, #tpu.memory_space<vmem>>, vector<1x64xf32>
    %20 = vector.shape_cast %19 : vector<1x64xf32> to vector<64xf32>
    %21 = vector.shape_cast %20 : vector<64xf32> to vector<1x1x64xf32>
    %c0_20 = arith.constant 0 : index
    %c1_21 = arith.constant 1 : index
    %c0_22 = arith.constant 0 : index
    %22 = vector.load %arg9[%c0_20, %c1_21, %c0_22] : memref<18x18x64xf32, #tpu.memory_space<vmem>>, vector<16x16x64xf32>
    %23 = vector.broadcast %21 : vector<1x1x64xf32> to vector<16x16x64xf32>
    %24 = arith.mulf %22, %23 : vector<16x16x64xf32>
    %25 = arith.addf %18, %24 : vector<16x16x64xf32>
    %c2 = arith.constant 2 : index
    %c0_23 = arith.constant 0 : index
    %26 = vector.load %arg4[%c2, %c0_23] : memref<9x64xf32, #tpu.memory_space<vmem>>, vector<1x64xf32>
    %27 = vector.shape_cast %26 : vector<1x64xf32> to vector<64xf32>
    %28 = vector.shape_cast %27 : vector<64xf32> to vector<1x1x64xf32>
    %c0_24 = arith.constant 0 : index
    %c2_25 = arith.constant 2 : index
    %c0_26 = arith.constant 0 : index
    %29 = vector.load %arg9[%c0_24, %c2_25, %c0_26] : memref<18x18x64xf32, #tpu.memory_space<vmem>>, vector<16x16x64xf32>
    %30 = vector.broadcast %28 : vector<1x1x64xf32> to vector<16x16x64xf32>
    %31 = arith.mulf %29, %30 : vector<16x16x64xf32>
    %32 = arith.addf %25, %31 : vector<16x16x64xf32>
    %c3 = arith.constant 3 : index
    %c0_27 = arith.constant 0 : index
    %33 = vector.load %arg4[%c3, %c0_27] : memref<9x64xf32, #tpu.memory_space<vmem>>, vector<1x64xf32>
    %34 = vector.shape_cast %33 : vector<1x64xf32> to vector<64xf32>
    %35 = vector.shape_cast %34 : vector<64xf32> to vector<1x1x64xf32>
    %c1_28 = arith.constant 1 : index
    %c0_29 = arith.constant 0 : index
    %c0_30 = arith.constant 0 : index
    %36 = vector.load %arg9[%c1_28, %c0_29, %c0_30] : memref<18x18x64xf32, #tpu.memory_space<vmem>>, vector<16x16x64xf32>
    %37 = vector.broadcast %35 : vector<1x1x64xf32> to vector<16x16x64xf32>
    %38 = arith.mulf %36, %37 : vector<16x16x64xf32>
    %39 = arith.addf %32, %38 : vector<16x16x64xf32>
    %c4 = arith.constant 4 : index
    %c0_31 = arith.constant 0 : index
    %40 = vector.load %arg4[%c4, %c0_31] : memref<9x64xf32, #tpu.memory_space<vmem>>, vector<1x64xf32>
    %41 = vector.shape_cast %40 : vector<1x64xf32> to vector<64xf32>
    %42 = vector.shape_cast %41 : vector<64xf32> to vector<1x1x64xf32>
    %c1_32 = arith.constant 1 : index
    %c1_33 = arith.constant 1 : index
    %c0_34 = arith.constant 0 : index
    %43 = vector.load %arg9[%c1_32, %c1_33, %c0_34] : memref<18x18x64xf32, #tpu.memory_space<vmem>>, vector<16x16x64xf32>
    %44 = vector.broadcast %42 : vector<1x1x64xf32> to vector<16x16x64xf32>
    %45 = arith.mulf %43, %44 : vector<16x16x64xf32>
    %46 = arith.addf %39, %45 : vector<16x16x64xf32>
    %c5 = arith.constant 5 : index
    %c0_35 = arith.constant 0 : index
    %47 = vector.load %arg4[%c5, %c0_35] : memref<9x64xf32, #tpu.memory_space<vmem>>, vector<1x64xf32>
    %48 = vector.shape_cast %47 : vector<1x64xf32> to vector<64xf32>
    %49 = vector.shape_cast %48 : vector<64xf32> to vector<1x1x64xf32>
    %c1_36 = arith.constant 1 : index
    %c2_37 = arith.constant 2 : index
    %c0_38 = arith.constant 0 : index
    %50 = vector.load %arg9[%c1_36, %c2_37, %c0_38] : memref<18x18x64xf32, #tpu.memory_space<vmem>>, vector<16x16x64xf32>
    %51 = vector.broadcast %49 : vector<1x1x64xf32> to vector<16x16x64xf32>
    %52 = arith.mulf %50, %51 : vector<16x16x64xf32>
    %53 = arith.addf %46, %52 : vector<16x16x64xf32>
    %c6 = arith.constant 6 : index
    %c0_39 = arith.constant 0 : index
    %54 = vector.load %arg4[%c6, %c0_39] : memref<9x64xf32, #tpu.memory_space<vmem>>, vector<1x64xf32>
    %55 = vector.shape_cast %54 : vector<1x64xf32> to vector<64xf32>
    %56 = vector.shape_cast %55 : vector<64xf32> to vector<1x1x64xf32>
    %c2_40 = arith.constant 2 : index
    %c0_41 = arith.constant 0 : index
    %c0_42 = arith.constant 0 : index
    %57 = vector.load %arg9[%c2_40, %c0_41, %c0_42] : memref<18x18x64xf32, #tpu.memory_space<vmem>>, vector<16x16x64xf32>
    %58 = vector.broadcast %56 : vector<1x1x64xf32> to vector<16x16x64xf32>
    %59 = arith.mulf %57, %58 : vector<16x16x64xf32>
    %60 = arith.addf %53, %59 : vector<16x16x64xf32>
    %c7 = arith.constant 7 : index
    %c0_43 = arith.constant 0 : index
    %61 = vector.load %arg4[%c7, %c0_43] : memref<9x64xf32, #tpu.memory_space<vmem>>, vector<1x64xf32>
    %62 = vector.shape_cast %61 : vector<1x64xf32> to vector<64xf32>
    %63 = vector.shape_cast %62 : vector<64xf32> to vector<1x1x64xf32>
    %c2_44 = arith.constant 2 : index
    %c1_45 = arith.constant 1 : index
    %c0_46 = arith.constant 0 : index
    %64 = vector.load %arg9[%c2_44, %c1_45, %c0_46] : memref<18x18x64xf32, #tpu.memory_space<vmem>>, vector<16x16x64xf32>
    %65 = vector.broadcast %63 : vector<1x1x64xf32> to vector<16x16x64xf32>
    %66 = arith.mulf %64, %65 : vector<16x16x64xf32>
    %67 = arith.addf %60, %66 : vector<16x16x64xf32>
    %c8 = arith.constant 8 : index
    %c0_47 = arith.constant 0 : index
    %68 = vector.load %arg4[%c8, %c0_47] : memref<9x64xf32, #tpu.memory_space<vmem>>, vector<1x64xf32>
    %69 = vector.shape_cast %68 : vector<1x64xf32> to vector<64xf32>
    %70 = vector.shape_cast %69 : vector<64xf32> to vector<1x1x64xf32>
    %c2_48 = arith.constant 2 : index
    %c2_49 = arith.constant 2 : index
    %c0_50 = arith.constant 0 : index
    %71 = vector.load %arg9[%c2_48, %c2_49, %c0_50] : memref<18x18x64xf32, #tpu.memory_space<vmem>>, vector<16x16x64xf32>
    %72 = vector.broadcast %70 : vector<1x1x64xf32> to vector<16x16x64xf32>
    %73 = arith.mulf %71, %72 : vector<16x16x64xf32>
    %74 = arith.addf %67, %73 : vector<16x16x64xf32>
    %75 = vector.shape_cast %74 : vector<16x16x64xf32> to vector<256x64xf32>
    %c0_51 = arith.constant 0 : index
    %c0_52 = arith.constant 0 : index
    %76 = vector.load %arg5[%c0_51, %c0_52] : memref<1x64xf32, #tpu.memory_space<vmem>>, vector<1x64xf32>
    %77 = vector.broadcast %76 : vector<1x64xf32> to vector<256x64xf32>
    %78 = arith.addf %75, %77 : vector<256x64xf32>
    %cst_53 = arith.constant 5.000000e-01 : f32
    %79 = vector.broadcast %cst_53 : f32 to vector<256x64xf32>
    %80 = arith.mulf %79, %78 : vector<256x64xf32>
    %cst_54 = arith.constant 0.707106769 : f32
    %81 = vector.broadcast %cst_54 : f32 to vector<256x64xf32>
    %82 = arith.mulf %78, %81 : vector<256x64xf32>
    %83 = math.absf %82 : vector<256x64xf32>
    %cst_55 = arith.constant 0.327591091 : f32
    %84 = vector.broadcast %cst_55 : f32 to vector<256x64xf32>
    %85 = arith.mulf %84, %83 : vector<256x64xf32>
    %cst_56 = arith.constant 1.000000e+00 : f32
    %86 = vector.broadcast %cst_56 : f32 to vector<256x64xf32>
    %87 = arith.addf %86, %85 : vector<256x64xf32>
    %cst_57 = arith.constant 1.000000e+00 : f32
    %88 = vector.broadcast %cst_57 : f32 to vector<256x64xf32>
    %89 = arith.divf %88, %87 : vector<256x64xf32>
    %cst_58 = arith.constant 1.06140542 : f32
    %90 = vector.broadcast %cst_58 : f32 to vector<256x64xf32>
    %91 = arith.mulf %89, %90 : vector<256x64xf32>
    %cst_59 = arith.constant -1.45315206 : f32
    %92 = vector.broadcast %cst_59 : f32 to vector<256x64xf32>
    %93 = arith.addf %92, %91 : vector<256x64xf32>
    %94 = arith.mulf %89, %93 : vector<256x64xf32>
    %cst_60 = arith.constant 1.42141378 : f32
    %95 = vector.broadcast %cst_60 : f32 to vector<256x64xf32>
    %96 = arith.addf %95, %94 : vector<256x64xf32>
    %97 = arith.mulf %89, %96 : vector<256x64xf32>
    %cst_61 = arith.constant -0.284496725 : f32
    %98 = vector.broadcast %cst_61 : f32 to vector<256x64xf32>
    %99 = arith.addf %98, %97 : vector<256x64xf32>
    %100 = arith.mulf %89, %99 : vector<256x64xf32>
    %cst_62 = arith.constant 0.254829586 : f32
    %101 = vector.broadcast %cst_62 : f32 to vector<256x64xf32>
    %102 = arith.addf %101, %100 : vector<256x64xf32>
    %103 = arith.mulf %89, %102 : vector<256x64xf32>
    %104 = arith.mulf %83, %83 : vector<256x64xf32>
    %cst_63 = arith.constant 0.000000e+00 : f32
    %105 = vector.broadcast %cst_63 : f32 to vector<256x64xf32>
    %106 = arith.subf %105, %104 : vector<256x64xf32>
    %107 = math.exp %106 : vector<256x64xf32>
    %108 = arith.mulf %103, %107 : vector<256x64xf32>
    %cst_64 = arith.constant 1.000000e+00 : f32
    %109 = vector.broadcast %cst_64 : f32 to vector<256x64xf32>
    %110 = arith.subf %109, %108 : vector<256x64xf32>
    %cst_65 = arith.constant 0.000000e+00 : f32
    %111 = vector.broadcast %cst_65 : f32 to vector<256x64xf32>
    %112 = arith.cmpf oge, %82, %111 : vector<256x64xf32>
    %cst_66 = arith.constant 0.000000e+00 : f32
    %113 = vector.broadcast %cst_66 : f32 to vector<256x64xf32>
    %114 = arith.subf %113, %110 : vector<256x64xf32>
    %115 = arith.select %112, %110, %114 : vector<256x64xi1>, vector<256x64xf32>
    %cst_67 = arith.constant 1.000000e+00 : f32
    %116 = vector.broadcast %cst_67 : f32 to vector<256x64xf32>
    %117 = arith.addf %116, %115 : vector<256x64xf32>
    %118 = arith.mulf %80, %117 : vector<256x64xf32>
    %c0_68 = arith.constant 0 : index
    %c0_69 = arith.constant 0 : index
    %119 = vector.load %arg6[%c0_68, %c0_69] : memref<64x32xf32, #tpu.memory_space<vmem>>, vector<64x32xf32>
    %cst_70 = arith.constant dense<0.000000e+00> : vector<256x32xf32>
    %120 = tpu.matmul %118, %119, %cst_70 {dimension_numbers = #tpu.dot_dimension_numbers<[1], [0], [0], [1], [0, 0, 1, 1], [], []>} : vector<256x64xf32>, vector<64x32xf32>, vector<256x32xf32> -> vector<256x32xf32>
    %c0_71 = arith.constant 0 : index
    %c0_72 = arith.constant 0 : index
    %121 = vector.load %arg7[%c0_71, %c0_72] : memref<1x32xf32, #tpu.memory_space<vmem>>, vector<1x32xf32>
    %122 = vector.broadcast %121 : vector<1x32xf32> to vector<256x32xf32>
    %123 = arith.addf %120, %122 : vector<256x32xf32>
    %c0_73 = arith.constant 0 : index
    %c0_74 = arith.constant 0 : index
    %c0_75 = arith.constant 0 : index
    %124 = vector.load %arg8[%c0_73, %c0_74, %c0_75] : memref<1x256x32xf32, #tpu.memory_space<vmem>>, vector<1x256x32xf32>
    %125 = vector.shape_cast %124 : vector<1x256x32xf32> to vector<256x32xf32>
    %126 = vector.shape_cast %123 : vector<256x32xf32> to vector<1x256x32xf32>
    tpu.vector_store %arg8[%c0_73, %c0_74, %c0_75], %126 {strides = array<i32>} : memref<1x256x32xf32, #tpu.memory_space<vmem>>, vector<1x256x32xf32>,
    return
  }
  func.func @transform_0(%arg0: i32) -> (i32, i32, i32) {
    %c0_i32 = arith.constant 0 : i32
    %c0_i32_0 = arith.constant 0 : i32
    %c0_i32_1 = arith.constant 0 : i32
    return %arg0, %c0_i32, %c0_i32_0 : i32, i32, i32
  }
  func.func @transform_1(%arg0: i32) -> (i32, i32) {
    %c0_i32 = arith.constant 0 : i32
    %c0_i32_0 = arith.constant 0 : i32
    %c0_i32_1 = arith.constant 0 : i32
    return %c0_i32, %c0_i32_0 : i32, i32
  }
  func.func @transform_2(%arg0: i32) -> (i32, i32) {
    %c0_i32 = arith.constant 0 : i32
    %c0_i32_0 = arith.constant 0 : i32
    %c0_i32_1 = arith.constant 0 : i32
    return %c0_i32, %c0_i32_0 : i32, i32
  }
  func.func @transform_3(%arg0: i32) -> (i32, i32) {
    %c0_i32 = arith.constant 0 : i32
    %c0_i32_0 = arith.constant 0 : i32
    %c0_i32_1 = arith.constant 0 : i32
    return %c0_i32, %c0_i32_0 : i32, i32
  }
  func.func @transform_4(%arg0: i32) -> (i32, i32) {
    %c0_i32 = arith.constant 0 : i32
    %c0_i32_0 = arith.constant 0 : i32
    %c0_i32_1 = arith.constant 0 : i32
    return %c0_i32, %c0_i32_0 : i32, i32
  }
  func.func @transform_5(%arg0: i32) -> (i32, i32) {
    %c0_i32 = arith.constant 0 : i32
    %c0_i32_0 = arith.constant 0 : i32
    %c0_i32_1 = arith.constant 0 : i32
    return %c0_i32, %c0_i32_0 : i32, i32
  }
  func.func @transform_6(%arg0: i32) -> (i32, i32) {
    %c0_i32 = arith.constant 0 : i32
    %c0_i32_0 = arith.constant 0 : i32
    %c0_i32_1 = arith.constant 0 : i32
    return %c0_i32, %c0_i32_0 : i32, i32
  }
  func.func @transform_7(%arg0: i32) -> (i32, i32, i32) {
    %c0_i32 = arith.constant 0 : i32
    %c0_i32_0 = arith.constant 0 : i32
    %c0_i32_1 = arith.constant 0 : i32
    return %arg0, %c0_i32, %c0_i32_0 : i32, i32, i32
  }
}

</mosaic_0001>

<llo_original>
// kernel: tpu_custom_call.1
$region0: #{tpu_custom_call.1}
  #allocation0 [shape = 'u32[]', space=smem, size = 0x4, offset = 0x4, fixed_abs, tag = 'smem constant byte address 0x4 - core index']
  #allocation1 [shape = 'u32[144,128]{1,0:T(1,128)}', space=vmem, size = 0x12000, scoped, tag = 'internal scratch']
  #allocation2 [shape = 'f32[18,18,64]{2,1,0:T(8,128)}', space=vmem, size = 0x36000, scoped, tag = 'scratch operand']
  %s0 = inlined_call_operand.vmem [shape: f32[2,256,32], index: 0, kind: input, shape index: {}]
  %s1 = inlined_call_operand.vmem [shape: f32[32,64], index: 1, kind: input, shape index: {}]
  %s2 = inlined_call_operand.vmem [shape: f32[1,64], index: 2, kind: input, shape index: {}]
  %s3 = inlined_call_operand.vmem [shape: f32[9,64], index: 3, kind: input, shape index: {}]
  %s4 = inlined_call_operand.vmem [shape: f32[1,64], index: 4, kind: input, shape index: {}]
  %s5 = inlined_call_operand.vmem [shape: f32[64,32], index: 5, kind: input, shape index: {}]
  %s6 = inlined_call_operand.vmem [shape: f32[1,32], index: 6, kind: input, shape index: {}]
  %s7 = inlined_call_operand.vmem [shape: f32[2,256,32], index: 7, kind: output, shape index: {}]
  %s8 = sld [smem:[#allocation0]]
  $region61: #{tpu_custom_call.1} parent=0
    _
  %s10 = ssub.s32 1, %s8
  %s11 = scalar_select 0, %s10, %s8
  loop: start=0, step=1, limit=4
  $region2: #{tpu_custom_call.1} parent=0 // loop_pre_header
    _
  $region3: #{tpu_custom_call.1} parent=0 // loop_header
    %s13 = sphi 0, %s17
    %p14 = scmp.ge.s32.totalorder %s13, 4
    %s23 = sphi 0, %s25
    %s26 = sphi 0, %s23
    %s27 = sphi 0, %s26
    %s43 = sphi 0, %s27
    %s47 = sphi 0, %s47
    %s49 = sphi 0, %s47
    %s50 = sphi 0, %s49
    %s64 = sphi 0, %s50
    %s68 = sphi 0, %s68
    %s70 = sphi 0, %s68
    %s71 = sphi 0, %s70
    %s85 = sphi 0, %s71
    %s89 = sphi 0, %s89
    %s91 = sphi 0, %s89
    %s92 = sphi 0, %s91
    %s106 = sphi 0, %s92
    %s110 = sphi 0, %s110
    %s112 = sphi 0, %s110
    %s113 = sphi 0, %s112
    %s127 = sphi 0, %s113
    %s131 = sphi 0, %s131
    %s133 = sphi 0, %s131
    %s134 = sphi 0, %s133
    %s148 = sphi 0, %s134
    %s152 = sphi 0, %s152
    %s154 = sphi 0, %s152
    %s155 = sphi 0, %s154
    %s169 = sphi 0, %s155
    %s175 = sphi 0, %s177
    %s178 = sphi 0, %s175
    %s179 = sphi 0, %s178
    %s195 = sphi 0, %s179
  $region4: #{tpu_custom_call.1} parent=0 // loop_header_branch
    %16 = sbr.rel (%p14) target = $region8
  $region5: #{tpu_custom_call.1} parent=0 // loop_body
    %s18 = ssub.s32 %s13, 1
    %s19 = ssub.s32 %s13, 2
    %s20 = sadd.s32 %s13, 1
    %s21 = ssub.s32 %s13, %s20
    %p22 = scmp.eq.s32.totalorder %s21, 0
    %s24 = sadd.s32 %s23, 1
    %s25 = scalar_select %p22, %s23, %s24
    %p28 = pneg %p22
    %p29 = scmp.eq.s32.totalorder %s13, 1
    %p30 = por %p28, %p29
    %p31 = scmp.ne.s32.totalorder %s23, %s26
    %p32 = scmp.eq.s32.totalorder %s13, 0
    %p33 = por %p31, %p32
    %p34 = scmp.ne.s32.totalorder %s23, %s26
    %p35 = scmp.eq.s32.totalorder %s18, 1
    %p36 = por %p34, %p35
    %p37 = scmp.ne.s32.totalorder %s26, %s27
    %p38 = scmp.eq.s32.totalorder %s18, 0
    %p39 = por %p37, %p38
    %p40 = scmp.ne.s32.totalorder %s26, %s27
    %p41 = scmp.eq.s32.totalorder %s19, 1
    %p42 = por %p40, %p41
    %p44 = scmp.ne.s32.totalorder %s27, %s43
    %p45 = scmp.eq.s32.totalorder %s19, 0
    %p46 = por %p44, %p45
    %s48 = sadd.s32 %s47, 1
    %p51 = scmp.eq.s32.totalorder %s13, 1
    %p52 = scmp.ne.s32.totalorder %s47, %s49
    %p53 = scmp.eq.s32.totalorder %s13, 0
    %p54 = por %p52, %p53
    %p55 = scmp.ne.s32.totalorder %s47, %s49
    %p56 = scmp.eq.s32.totalorder %s18, 1
    %p57 = por %p55, %p56
    %p58 = scmp.ne.s32.totalorder %s49, %s50
    %p59 = scmp.eq.s32.totalorder %s18, 0
    %p60 = por %p58, %p59
    %p61 = scmp.ne.s32.totalorder %s49, %s50
    %p62 = scmp.eq.s32.totalorder %s19, 1
    %p63 = por %p61, %p62
    %p65 = scmp.ne.s32.totalorder %s50, %s64
    %p66 = scmp.eq.s32.totalorder %s19, 0
    %p67 = por %p65, %p66
    %s69 = sadd.s32 %s68, 1
    %p72 = scmp.eq.s32.totalorder %s13, 1
    %p73 = scmp.ne.s32.totalorder %s68, %s70
    %p74 = scmp.eq.s32.totalorder %s13, 0
    %p75 = por %p73, %p74
    %p76 = scmp.ne.s32.totalorder %s68, %s70
    %p77 = scmp.eq.s32.totalorder %s18, 1
    %p78 = por %p76, %p77
    %p79 = scmp.ne.s32.totalorder %s70, %s71
    %p80 = scmp.eq.s32.totalorder %s18, 0
    %p81 = por %p79, %p80
    %p82 = scmp.ne.s32.totalorder %s70, %s71
    %p83 = scmp.eq.s32.totalorder %s19, 1
    %p84 = por %p82, %p83
    %p86 = scmp.ne.s32.totalorder %s71, %s85
    %p87 = scmp.eq.s32.totalorder %s19, 0
    %p88 = por %p86, %p87
    %s90 = sadd.s32 %s89, 1
    %p93 = scmp.eq.s32.totalorder %s13, 1
    %p94 = scmp.ne.s32.totalorder %s89, %s91
    %p95 = scmp.eq.s32.totalorder %s13, 0
    %p96 = por %p94, %p95
    %p97 = scmp.ne.s32.totalorder %s89, %s91
    %p98 = scmp.eq.s32.totalorder %s18, 1
    %p99 = por %p97, %p98
    %p100 = scmp.ne.s32.totalorder %s91, %s92
    %p101 = scmp.eq.s32.totalorder %s18, 0
    %p102 = por %p100, %p101
    %p103 = scmp.ne.s32.totalorder %s91, %s92
    %p104 = scmp.eq.s32.totalorder %s19, 1
    %p105 = por %p103, %p104
    %p107 = scmp.ne.s32.totalorder %s92, %s106
    %p108 = scmp.eq.s32.totalorder %s19, 0
    %p109 = por %p107, %p108
    %s111 = sadd.s32 %s110, 1
    %p114 = scmp.eq.s32.totalorder %s13, 1
    %p115 = scmp.ne.s32.totalorder %s110, %s112
    %p116 = scmp.eq.s32.totalorder %s13, 0
    %p117 = por %p115, %p116
    %p118 = scmp.ne.s32.totalorder %s110, %s112
    %p119 = scmp.eq.s32.totalorder %s18, 1
    %p120 = por %p118, %p119
    %p121 = scmp.ne.s32.totalorder %s112, %s113
    %p122 = scmp.eq.s32.totalorder %s18, 0
    %p123 = por %p121, %p122
    %p124 = scmp.ne.s32.totalorder %s112, %s113
    %p125 = scmp.eq.s32.totalorder %s19, 1
    %p126 = por %p124, %p125
    %p128 = scmp.ne.s32.totalorder %s113, %s127
    %p129 = scmp.eq.s32.totalorder %s19, 0
    %p130 = por %p128, %p129
    %s132 = sadd.s32 %s131, 1
    %p135 = scmp.eq.s32.totalorder %s13, 1
    %p136 = scmp.ne.s32.totalorder %s131, %s133
    %p137 = scmp.eq.s32.totalorder %s13, 0
    %p138 = por %p136, %p137
    %p139 = scmp.ne.s32.totalorder %s131, %s133
    %p140 = scmp.eq.s32.totalorder %s18, 1
    %p141 = por %p139, %p140
    %p142 = scmp.ne.s32.totalorder %s133, %s134
    %p143 = scmp.eq.s32.totalorder %s18, 0
    %p144 = por %p142, %p143
    %p145 = scmp.ne.s32.totalorder %s133, %s134
    %p146 = scmp.eq.s32.totalorder %s19, 1
    %p147 = por %p145, %p146
    %p149 = scmp.ne.s32.totalorder %s134, %s148
    %p150 = scmp.eq.s32.totalorder %s19, 0
    %p151 = por %p149, %p150
    %s153 = sadd.s32 %s152, 1
    %p156 = scmp.eq.s32.totalorder %s13, 1
    %p157 = scmp.ne.s32.totalorder %s152, %s154
    %p158 = scmp.eq.s32.totalorder %s13, 0
    %p159 = por %p157, %p158
    %p160 = scmp.ne.s32.totalorder %s152, %s154
    %p161 = scmp.eq.s32.totalorder %s18, 1
    %p162 = por %p160, %p161
    %p163 = scmp.ne.s32.totalorder %s154, %s155
    %p164 = scmp.eq.s32.totalorder %s18, 0
    %p165 = por %p163, %p164
    %p166 = scmp.ne.s32.totalorder %s154, %s155
    %p167 = scmp.eq.s32.totalorder %s19, 1
    %p168 = por %p166, %p167
    %p170 = scmp.ne.s32.totalorder %s155, %s169
    %p171 = scmp.eq.s32.totalorder %s19, 0
    %p172 = por %p170, %p171
    %s173 = ssub.s32 %s13, %s20
    %p174 = scmp.eq.s32.totalorder %s173, 0
    %s176 = sadd.s32 %s175, 1
    %s177 = scalar_select %p174, %s175, %s176
    %p180 = pneg %p174
    %p181 = scmp.eq.s32.totalorder %s13, 1
    %p182 = por %p180, %p181
    %p183 = scmp.ne.s32.totalorder %s175, %s178
    %p184 = scmp.eq.s32.totalorder %s13, 0
    %p185 = por %p183, %p184
    %p186 = scmp.ne.s32.totalorder %s175, %s178
    %p187 = scmp.eq.s32.totalorder %s18, 1
    %p188 = por %p186, %p187
    %p189 = scmp.ne.s32.totalorder %s178, %s179
    %p190 = scmp.eq.s32.totalorder %s18, 0
    %p191 = por %p189, %p190
    %p192 = scmp.ne.s32.totalorder %s178, %s179
    %p193 = scmp.eq.s32.totalorder %s19, 1
    %p194 = por %p192, %p193
    %p196 = scmp.ne.s32.totalorder %s179, %s195
    %p197 = scmp.eq.s32.totalorder %s19, 0
    %p198 = por %p196, %p197
    %p199 = scmp.le.s32.totalorder 1, %s13
    %p200 = scmp.lt.s32.totalorder %s13, 3
    %p201 = pnand %p199, %p200
    %p202 = pneg %p201
    // Predicated region
    $region9: #{tpu_custom_call.1} parent=5 // pred_check
      _
    $region10: #{tpu_custom_call.1} parent=5 // pred_check_branch
      %204 = sbr.rel (%p201) target = $region12
    $region11: #{tpu_custom_call.1} parent=5 // pred_region
      %s205 = ssub.s32 %s13, 1
      // Predicated region
      $region13: #{tpu_custom_call.1} parent=11 // pred_check
        %p206 = pneg %p60
      $region14: #{tpu_custom_call.1} parent=11 // pred_check_branch
        %208 = sbr.rel (%p206) target = $region16
      $region15: #{tpu_custom_call.1} parent=11 // pred_region
        _
      $region16: #{tpu_custom_call.1} parent=11 // pred_fallthru
        _
      // Predicated region
      $region17: #{tpu_custom_call.1} parent=11 // pred_check
        %p209 = pneg %p81
      $region18: #{tpu_custom_call.1} parent=11 // pred_check_branch
        %211 = sbr.rel (%p209) target = $region20
      $region19: #{tpu_custom_call.1} parent=11 // pred_region
        _
      $region20: #{tpu_custom_call.1} parent=11 // pred_fallthru
        _
      // Predicated region
      $region21: #{tpu_custom_call.1} parent=11 // pred_check
        %p212 = pneg %p102
      $region22: #{tpu_custom_call.1} parent=11 // pred_check_branch
        %214 = sbr.rel (%p212) target = $region24
      $region23: #{tpu_custom_call.1} parent=11 // pred_region
        _
      $region24: #{tpu_custom_call.1} parent=11 // pred_fallthru
        _
      // Predicated region
      $region25: #{tpu_custom_call.1} parent=11 // pred_check
        %p215 = pneg %p123
      $region26: #{tpu_custom_call.1} parent=11 // pred_check_branch
        %217 = sbr.rel (%p215) target = $region28
      $region27: #{tpu_custom_call.1} parent=11 // pred_region
        _
      $region28: #{tpu_custom_call.1} parent=11 // pred_fallthru
        _
      // Predicated region
      $region29: #{tpu_custom_call.1} parent=11 // pred_check
        %p218 = pneg %p144
      $region30: #{tpu_custom_call.1} parent=11 // pred_check_branch
        %220 = sbr.rel (%p218) target = $region32
      $region31: #{tpu_custom_call.1} parent=11 // pred_region
        _
      $region32: #{tpu_custom_call.1} parent=11 // pred_fallthru
        _
      // Predicated region
      $region33: #{tpu_custom_call.1} parent=11 // pred_check
        %p221 = pneg %p165
      $region34: #{tpu_custom_call.1} parent=11 // pred_check_branch
        %223 = sbr.rel (%p221) target = $region36
      $region35: #{tpu_custom_call.1} parent=11 // pred_region
        _
      $region36: #{tpu_custom_call.1} parent=11 // pred_fallthru
        _
    $region12: #{tpu_custom_call.1} parent=5 // pred_fallthru
      _
    %p224 = scmp.lt.s32.totalorder %s13, 2
    // Predicated region
    $region37: #{tpu_custom_call.1} parent=5 // pred_check
      %p225 = pneg %p224
    $region38: #{tpu_custom_call.1} parent=5 // pred_check_branch
      %227 = sbr.rel (%p225) target = $region40
    $region39: #{tpu_custom_call.1} parent=5 // pred_region
      // Predicated region
      $region41: #{tpu_custom_call.1} parent=39 // pred_check
        %p228 = pneg %p33
      $region42: #{tpu_custom_call.1} parent=39 // pred_check_branch
        %230 = sbr.rel (%p228) target = $region44
      $region43: #{tpu_custom_call.1} parent=39 // pred_region
        %p231 = scmp.lt.s32.totalorder %s13, 1
        %s232 = scalar_select %p231, %s13, 1
        %s233 = smul.addr %s232, 32
        %s234 = smul.addr %s233, 8
        %s235 = scalar_lea.vmem %s0, %s234
      $region44: #{tpu_custom_call.1} parent=39 // pred_fallthru
        _
    $region40: #{tpu_custom_call.1} parent=5 // pred_fallthru
      _
    %p236 = scmp.le.s32.totalorder 1, %s13
    %p237 = scmp.lt.s32.totalorder %s13, 3
    %p238 = pnand %p236, %p237
    %p239 = pneg %p238
    // Predicated region
    $region45: #{tpu_custom_call.1} parent=5 // pred_check
      _
    $region46: #{tpu_custom_call.1} parent=5 // pred_check_branch
      %241 = sbr.rel (%p238) target = $region48
    $region47: #{tpu_custom_call.1} parent=5 // pred_region
      %s242 = ssub.s32 %s13, 1
      %p243 = scmp.lt.s32.totalorder %s18, 1
      %s244 = scalar_select %p243, %s18, 1
      %s245 = smul.addr %s244, 32
      %s246 = smul.addr %s245, 8
      %s247 = scalar_lea.vmem %s0, %s246
      %p248 = pneg %p39
      %p249 = pneg %p36
      %p250 = pneg %p60
      %p251 = pneg %p57
      %p252 = pneg %p81
      %p253 = pneg %p78
      %p254 = pneg %p102
      %p255 = pneg %p99
      %p256 = pneg %p123
      %p257 = pneg %p120
      %p258 = pneg %p144
      %p259 = pneg %p141
      %p260 = pneg %p165
      %p261 = pneg %p162
      %p262 = pneg %p191
      %p263 = pneg %p188
      %p264 = scmp.lt.s32.totalorder %s18, 1
      %s265 = scalar_select %p264, %s18, 1
      %s266 = smul.addr %s265, 32
      %s267 = smul.addr %s266, 8
      %s268 = scalar_lea.vmem %s7, %s267
      %p269 = scmp.lt.s32.totalorder %s18, 1
      %s270 = scalar_select %p269, %s18, 1
      %s271 = smul.addr %s270, 32
      %s272 = smul.addr %s271, 8
      %s273 = scalar_lea.vmem %s0, %s272
      %p274 = scmp.lt.s32.totalorder %s18, 1
      %s275 = scalar_select %p274, %s18, 1
      %s276 = smul.addr %s275, 32
      %s277 = smul.addr %s276, 8
      %s278 = scalar_lea.vmem %s7, %s277
      %v279 = vld [vmem:[%s273] sm:$0xff]
      %v280 = vld [vmem:[%s273 + $0x8] sm:$0xff]
      %v281 = vld [vmem:[%s273 + $0x10] sm:$0xff]
      %v282 = vld [vmem:[%s273 + $0x18] sm:$0xff]
      %v283 = vld [vmem:[%s273 + $0x20] sm:$0xff]
      %v284 = vld [vmem:[%s273 + $0x28] sm:$0xff]
      %v285 = vld [vmem:[%s273 + $0x30] sm:$0xff]
      %v286 = vld [vmem:[%s273 + $0x38] sm:$0xff]
      %v287 = vld [vmem:[%s273 + $0x40] sm:$0xff]
      %v288 = vld [vmem:[%s273 + $0x48] sm:$0xff]
      %v289 = vld [vmem:[%s273 + $0x50] sm:$0xff]
      %v290 = vld [vmem:[%s273 + $0x58] sm:$0xff]
      %v291 = vld [vmem:[%s273 + $0x60] sm:$0xff]
      %v292 = vld [vmem:[%s273 + $0x68] sm:$0xff]
      %v293 = vld [vmem:[%s273 + $0x70] sm:$0xff]
      %v294 = vld [vmem:[%s273 + $0x78] sm:$0xff]
      %v295 = vld [vmem:[%s273 + $0x80] sm:$0xff]
      %v296 = vld [vmem:[%s273 + $0x88] sm:$0xff]
      %v297 = vld [vmem:[%s273 + $0x90] sm:$0xff]
      %v298 = vld [vmem:[%s273 + $0x98] sm:$0xff]
      %v299 = vld [vmem:[%s273 + $0xa0] sm:$0xff]
      %v300 = vld [vmem:[%s273 + $0xa8] sm:$0xff]
      %v301 = vld [vmem:[%s273 + $0xb0] sm:$0xff]
      %v302 = vld [vmem:[%s273 + $0xb8] sm:$0xff]
      %v303 = vld [vmem:[%s273 + $0xc0] sm:$0xff]
      %v304 = vld [vmem:[%s273 + $0xc8] sm:$0xff]
      %v305 = vld [vmem:[%s273 + $0xd0] sm:$0xff]
      %v306 = vld [vmem:[%s273 + $0xd8] sm:$0xff]
      %v307 = vld [vmem:[%s273 + $0xe0] sm:$0xff]
      %v308 = vld [vmem:[%s273 + $0xe8] sm:$0xff]
      %v309 = vld [vmem:[%s273 + $0xf0] sm:$0xff]
      %v310 = vld [vmem:[%s273 + $0xf8] sm:$0xff]
      %v311 = vld [vmem:[%s1] sm:$0xff]
      %v312 = vld [vmem:[%s1 + $0x8] sm:$0xff]
      %v313 = vld [vmem:[%s1 + $0x10] sm:$0xff]
      %v314 = vld [vmem:[%s1 + $0x18] sm:$0xff]
      %v315 = vld [vmem:[%s2] sm:$0x1]
      %v317 = vlaneseq
      %v318 = vshrl.u32 %v317, 7
      %v319 = vsub.s32 0, %v318
      %v320 = vrot.slane %v315, %v319
      %vm322 = vcmask 261120
      %v324 = vsel %vm322, %v279, 0
      %v327 = vsel %vm322, %v280, 0
      %v330 = vsel %vm322, %v281, 0
      %v333 = vsel %vm322, %v282, 0
      %v336 = vsel %vm322, %v283, 0
      %v339 = vsel %vm322, %v284, 0
      %v342 = vsel %vm322, %v285, 0
      %v345 = vsel %vm322, %v286, 0
      %v348 = vsel %vm322, %v287, 0
      %v351 = vsel %vm322, %v288, 0
      %v354 = vsel %vm322, %v289, 0
      %v357 = vsel %vm322, %v290, 0
      %v360 = vsel %vm322, %v291, 0
      %v363 = vsel %vm322, %v292, 0
      %v366 = vsel %vm322, %v293, 0
      %v369 = vsel %vm322, %v294, 0
      %v372 = vsel %vm322, %v295, 0
      %v375 = vsel %vm322, %v296, 0
      %v378 = vsel %vm322, %v297, 0
      %v381 = vsel %vm322, %v298, 0
      %v384 = vsel %vm322, %v299, 0
      %v387 = vsel %vm322, %v300, 0
      %v390 = vsel %vm322, %v301, 0
      %v393 = vsel %vm322, %v302, 0
      %v396 = vsel %vm322, %v303, 0
      %v399 = vsel %vm322, %v304, 0
      %v402 = vsel %vm322, %v305, 0
      %v405 = vsel %vm322, %v306, 0
      %v408 = vsel %vm322, %v307, 0
      %v411 = vsel %vm322, %v308, 0
      %v414 = vsel %vm322, %v309, 0
      %v417 = vsel %vm322, %v310, 0
      %419 = vmatprep.subr.mxu0 0.0
      %420 = vmatpush1.msra.mxu0 %v311
      %421 = vmatprep.subr.mxu0 0.0
      %422 = vmatpush1.msra.mxu0 %v312
      %423 = vmatprep.subr.mxu0 0.0
      %424 = vmatpush1.msra.mxu0 %v313
      %425 = vmatprep.subr.mxu0 0.0
      %426 = vmatpush1.msra.mxu0 %v314
      %427 = vmatprep.subr.mxu0 0.0
      %428 = vmatpush1.msra.mxu0 0.0
      %429 = vmatprep.subr.mxu0 0.0
      %430 = vmatpush1.msra.mxu0 0.0
      %431 = vmatprep.subr.mxu0 0.0
      %432 = vmatpush1.msra.mxu0 0.0
      %433 = vmatprep.subr.mxu0 0.0
      %434 = vmatpush1.msra.mxu0 0.0
      %435 = vmatprep.subr.mxu0 0.0
      %436 = vmatpush1.msra.mxu0 0.0
      %437 = vmatprep.subr.mxu0 0.0
      %438 = vmatpush1.msra.mxu0 0.0
      %439 = vmatprep.subr.mxu0 0.0
      %440 = vmatpush1.msra.mxu0 0.0
      %441 = vmatprep.subr.mxu0 0.0
      %442 = vmatpush1.msra.mxu0 0.0
      %443 = vmatprep.subr.mxu0 0.0
      %444 = vmatpush1.msra.mxu0 0.0
      %445 = vmatprep.subr.mxu0 0.0
      %446 = vmatpush1.msra.mxu0 0.0
      %447 = vmatprep.subr.mxu0 0.0
      %448 = vmatpush1.msra.mxu0 0.0
      %449 = vmatprep.subr.mxu0 0.0
      %450 = vmatpush1.msra.mxu0 0.0
      %451 = vmatprep.subr.mxu0 0.0
      %452 = vmatpush1.msra.mxu0 0.0
      %453 = vmatprep.subr.mxu0 0.0
      %454 = vmatpush1.msra.mxu0 0.0
      %455 = vmatprep.subr.mxu0 0.0
      %456 = vmatpush1.msra.mxu0 0.0
      %457 = vmatprep.subr.mxu0 0.0
      %458 = vmatpush1.msra.mxu0 0.0
      %459 = vmatprep.subr.mxu0 0.0
      %460 = vmatpush1.msra.mxu0 0.0
      %461 = vmatprep.subr.mxu0 0.0
      %462 = vmatpush1.msra.mxu0 0.0
      %463 = vmatprep.subr.mxu0 0.0
      %464 = vmatpush1.msra.mxu0 0.0
      %465 = vmatprep.subr.mxu0 0.0
      %466 = vmatpush1.msra.mxu0 0.0
      %467 = vmatprep.subr.mxu0 0.0
      %468 = vmatpush1.msra.mxu0 0.0
      %469 = vmatprep.subr.mxu0 0.0
      %470 = vmatpush1.msra.mxu0 0.0
      %471 = vmatprep.subr.mxu0 0.0
      %472 = vmatpush1.msra.mxu0 0.0
      %473 = vmatprep.subr.mxu0 0.0
      %474 = vmatpush1.msra.mxu0 0.0
      %475 = vmatprep.subr.mxu0 0.0
      %476 = vmatpush1.msra.mxu0 0.0
      %477 = vmatprep.subr.mxu0 0.0
      %478 = vmatpush1.msra.mxu0 0.0
      %479 = vmatprep.subr.mxu0 0.0
      %480 = vmatpush1.msra.mxu0 0.0
      %481 = vmatprep.subr.mxu0 0.0
      %482 = vmatpush1.msra.mxu0 0.0
      %483 = vmatprep.mubr.f32.mxu0 0.0
      %484 = vmatmul.mubr.f32.gmra.mrb[0].mxu0 %v324
      %v485 = vpop.f32.mrb[0].mxu0
      %v486 = vadd.f32 %v320, %v485
      %v487 = vpop.f32.mrb[0].mxu0
      %488 = vmatprep.mubr.f32.mxu0 0.0
      %489 = vmatmul.mubr.f32.gmra.mrb[0].mxu0 %v327
      %v490 = vpop.f32.mrb[0].mxu0
      %v491 = vadd.f32 %v320, %v490
      %v492 = vpop.f32.mrb[0].mxu0
      %493 = vmatprep.mubr.f32.mxu0 0.0
      %494 = vmatmul.mubr.f32.gmra.mrb[0].mxu0 %v330
      %v495 = vpop.f32.mrb[0].mxu0
      %v496 = vadd.f32 %v320, %v495
      %v497 = vpop.f32.mrb[0].mxu0
      %498 = vmatprep.mubr.f32.mxu0 0.0
      %499 = vmatmul.mubr.f32.gmra.mrb[0].mxu0 %v333
      %v500 = vpop.f32.mrb[0].mxu0
      %v501 = vadd.f32 %v320, %v500
      %v502 = vpop.f32.mrb[0].mxu0
      %503 = vmatprep.mubr.f32.mxu0 0.0
      %504 = vmatmul.mubr.f32.gmra.mrb[0].mxu0 %v336
      %v505 = vpop.f32.mrb[0].mxu0
      %v506 = vadd.f32 %v320, %v505
      %v507 = vpop.f32.mrb[0].mxu0
      %508 = vmatprep.mubr.f32.mxu0 0.0
      %509 = vmatmul.mubr.f32.gmra.mrb[0].mxu0 %v339
      %v510 = vpop.f32.mrb[0].mxu0
      %v511 = vadd.f32 %v320, %v510
      %v512 = vpop.f32.mrb[0].mxu0
      %513 = vmatprep.mubr.f32.mxu0 0.0
      %514 = vmatmul.mubr.f32.gmra.mrb[0].mxu0 %v342
      %v515 = vpop.f32.mrb[0].mxu0
      %v516 = vadd.f32 %v320, %v515
      %v517 = vpop.f32.mrb[0].mxu0
      %518 = vmatprep.mubr.f32.mxu0 0.0
      %519 = vmatmul.mubr.f32.gmra.mrb[0].mxu0 %v345
      %v520 = vpop.f32.mrb[0].mxu0
      %v521 = vadd.f32 %v320, %v520
      %v522 = vpop.f32.mrb[0].mxu0
      %523 = vmatprep.mubr.f32.mxu0 0.0
      %524 = vmatmul.mubr.f32.gmra.mrb[0].mxu0 %v348
      %v525 = vpop.f32.mrb[0].mxu0
      %v526 = vadd.f32 %v320, %v525
      %v527 = vpop.f32.mrb[0].mxu0
      %528 = vmatprep.mubr.f32.mxu0 0.0
      %529 = vmatmul.mubr.f32.gmra.mrb[0].mxu0 %v351
      %v530 = vpop.f32.mrb[0].mxu0
      %v531 = vadd.f32 %v320, %v530
      %v532 = vpop.f32.mrb[0].mxu0
      %533 = vmatprep.mubr.f32.mxu0 0.0
      %534 = vmatmul.mubr.f32.gmra.mrb[0].mxu0 %v354
      %v535 = vpop.f32.mrb[0].mxu0
      %v536 = vadd.f32 %v320, %v535
      %v537 = vpop.f32.mrb[0].mxu0
      %538 = vmatprep.mubr.f32.mxu0 0.0
      %539 = vmatmul.mubr.f32.gmra.mrb[0].mxu0 %v357
      %v540 = vpop.f32.mrb[0].mxu0
      %v541 = vadd.f32 %v320, %v540
      %v542 = vpop.f32.mrb[0].mxu0
      %543 = vmatprep.mubr.f32.mxu0 0.0
      %544 = vmatmul.mubr.f32.gmra.mrb[0].mxu0 %v360
      %v545 = vpop.f32.mrb[0].mxu0
      %v546 = vadd.f32 %v320, %v545
      %v547 = vpop.f32.mrb[0].mxu0
      %548 = vmatprep.mubr.f32.mxu0 0.0
      %549 = vmatmul.mubr.f32.gmra.mrb[0].mxu0 %v363
      %v550 = vpop.f32.mrb[0].mxu0
      %v551 = vadd.f32 %v320, %v550
      %v552 = vpop.f32.mrb[0].mxu0
      %553 = vmatprep.mubr.f32.mxu0 0.0
      %554 = vmatmul.mubr.f32.gmra.mrb[0].mxu0 %v366
      %v555 = vpop.f32.mrb[0].mxu0
      %v556 = vadd.f32 %v320, %v555
      %v557 = vpop.f32.mrb[0].mxu0
      %558 = vmatprep.mubr.f32.mxu0 0.0
      %559 = vmatmul.mubr.f32.gmra.mrb[0].mxu0 %v369
      %v560 = vpop.f32.mrb[0].mxu0
      %v561 = vadd.f32 %v320, %v560
      %v562 = vpop.f32.mrb[0].mxu0
      %563 = vmatprep.mubr.f32.mxu0 0.0
      %564 = vmatmul.mubr.f32.gmra.mrb[0].mxu0 %v372
      %v565 = vpop.f32.mrb[0].mxu0
      %v566 = vadd.f32 %v320, %v565
      %v567 = vpop.f32.mrb[0].mxu0
      %568 = vmatprep.mubr.f32.mxu0 0.0
      %569 = vmatmul.mubr.f32.gmra.mrb[0].mxu0 %v375
      %v570 = vpop.f32.mrb[0].mxu0
      %v571 = vadd.f32 %v320, %v570
      %v572 = vpop.f32.mrb[0].mxu0
      %573 = vmatprep.mubr.f32.mxu0 0.0
      %574 = vmatmul.mubr.f32.gmra.mrb[0].mxu0 %v378
      %v575 = vpop.f32.mrb[0].mxu0
      %v576 = vadd.f32 %v320, %v575
      %v577 = vpop.f32.mrb[0].mxu0
      %578 = vmatprep.mubr.f32.mxu0 0.0
      %579 = vmatmul.mubr.f32.gmra.mrb[0].mxu0 %v381
      %v580 = vpop.f32.mrb[0].mxu0
      %v581 = vadd.f32 %v320, %v580
      %v582 = vpop.f32.mrb[0].mxu0
      %583 = vmatprep.mubr.f32.mxu0 0.0
      %584 = vmatmul.mubr.f32.gmra.mrb[0].mxu0 %v384
      %v585 = vpop.f32.mrb[0].mxu0
      %v586 = vadd.f32 %v320, %v585
      %v587 = vpop.f32.mrb[0].mxu0
      %588 = vmatprep.mubr.f32.mxu0 0.0
      %589 = vmatmul.mubr.f32.gmra.mrb[0].mxu0 %v387
      %v590 = vpop.f32.mrb[0].mxu0
      %v591 = vadd.f32 %v320, %v590
      %v592 = vpop.f32.mrb[0].mxu0
      %593 = vmatprep.mubr.f32.mxu0 0.0
      %594 = vmatmul.mubr.f32.gmra.mrb[0].mxu0 %v390
      %v595 = vpop.f32.mrb[0].mxu0
      %v596 = vadd.f32 %v320, %v595
      %v597 = vpop.f32.mrb[0].mxu0
      %598 = vmatprep.mubr.f32.mxu0 0.0
      %599 = vmatmul.mubr.f32.gmra.mrb[0].mxu0 %v393
      %v600 = vpop.f32.mrb[0].mxu0
      %v601 = vadd.f32 %v320, %v600
      %v602 = vpop.f32.mrb[0].mxu0
      %603 = vmatprep.mubr.f32.mxu0 0.0
      %604 = vmatmul.mubr.f32.gmra.mrb[0].mxu0 %v396
      %v605 = vpop.f32.mrb[0].mxu0
      %v606 = vadd.f32 %v320, %v605
      %v607 = vpop.f32.mrb[0].mxu0
      %608 = vmatprep.mubr.f32.mxu0 0.0
      %609 = vmatmul.mubr.f32.gmra.mrb[0].mxu0 %v399
      %v610 = vpop.f32.mrb[0].mxu0
      %v611 = vadd.f32 %v320, %v610
      %v612 = vpop.f32.mrb[0].mxu0
      %613 = vmatprep.mubr.f32.mxu0 0.0
      %614 = vmatmul.mubr.f32.gmra.mrb[0].mxu0 %v402
      %v615 = vpop.f32.mrb[0].mxu0
      %v616 = vadd.f32 %v320, %v615
      %v617 = vpop.f32.mrb[0].mxu0
      %618 = vmatprep.mubr.f32.mxu0 0.0
      %619 = vmatmul.mubr.f32.gmra.mrb[0].mxu0 %v405
      %v620 = vpop.f32.mrb[0].mxu0
      %v621 = vadd.f32 %v320, %v620
      %v622 = vpop.f32.mrb[0].mxu0
      %623 = vmatprep.mubr.f32.mxu0 0.0
      %624 = vmatmul.mubr.f32.gmra.mrb[0].mxu0 %v408
      %v625 = vpop.f32.mrb[0].mxu0
      %v626 = vadd.f32 %v320, %v625
      %v627 = vpop.f32.mrb[0].mxu0
      %628 = vmatprep.mubr.f32.mxu0 0.0
      %629 = vmatmul.mubr.f32.gmra.mrb[0].mxu0 %v411
      %v630 = vpop.f32.mrb[0].mxu0
      %v631 = vadd.f32 %v320, %v630
      %v632 = vpop.f32.mrb[0].mxu0
      %633 = vmatprep.mubr.f32.mxu0 0.0
      %634 = vmatmul.mubr.f32.gmra.mrb[0].mxu0 %v414
      %v635 = vpop.f32.mrb[0].mxu0
      %v636 = vadd.f32 %v320, %v635
      %v637 = vpop.f32.mrb[0].mxu0
      %638 = vmatprep.mubr.f32.mxu0 0.0
      %639 = vmatmul.mubr.f32.gmra.mrb[0].mxu0 %v417
      %v640 = vpop.f32.mrb[0].mxu0
      %v641 = vadd.f32 %v320, %v640
      %v642 = vpop.f32.mrb[0].mxu0
      %643 = vdwg.mxu0
      %vm644 = vcmask 523264
      %645 = vst.msk [vmem:[#allocation2] sm:$0xff] %vm644, 0.0
      %646 = vst.msk [vmem:[#allocation2 + $0x8] sm:$0xff] %vm644, 0.0
      %vm647 = vcmask 517120
      %648 = vst.msk [vmem:[#allocation2 + $0x10] sm:$0x3] %vm647, 0.0
      %649 = vst.msk [vmem:[#allocation2 + $0x18] sm:$0xff] %vm644, 0.0
      %650 = vst.msk [vmem:[#allocation2 + $0x20] sm:$0xff] %vm644, 0.0
      %651 = vst.msk [vmem:[#allocation2 + $0x28] sm:$0x3] %vm647, 0.0
      %652 = vst.msk [vmem:[#allocation2 + $0x30] sm:$0xff] %vm644, 0.0
      %653 = vst.msk [vmem:[#allocation2 + $0x38] sm:$0xff] %vm644, 0.0
      %654 = vst.msk [vmem:[#allocation2 + $0x40] sm:$0x3] %vm647, 0.0
      %655 = vst.msk [vmem:[#allocation2 + $0x48] sm:$0xff] %vm644, 0.0
      %656 = vst.msk [vmem:[#allocation2 + $0x50] sm:$0xff] %vm644, 0.0
      %657 = vst.msk [vmem:[#allocation2 + $0x58] sm:$0x3] %vm647, 0.0
      %658 = vst.msk [vmem:[#allocation2 + $0x60] sm:$0xff] %vm644, 0.0
      %659 = vst.msk [vmem:[#allocation2 + $0x68] sm:$0xff] %vm644, 0.0
      %660 = vst.msk [vmem:[#allocation2 + $0x70] sm:$0x3] %vm647, 0.0
      %661 = vst.msk [vmem:[#allocation2 + $0x78] sm:$0xff] %vm644, 0.0
      %662 = vst.msk [vmem:[#allocation2 + $0x80] sm:$0xff] %vm644, 0.0
      %663 = vst.msk [vmem:[#allocation2 + $0x88] sm:$0x3] %vm647, 0.0
      %664 = vst.msk [vmem:[#allocation2 + $0x90] sm:$0xff] %vm644, 0.0
      %665 = vst.msk [vmem:[#allocation2 + $0x98] sm:$0xff] %vm644, 0.0
      %666 = vst.msk [vmem:[#allocation2 + $0xa0] sm:$0x3] %vm647, 0.0
      %667 = vst.msk [vmem:[#allocation2 + $0xa8] sm:$0xff] %vm644, 0.0
      %668 = vst.msk [vmem:[#allocation2 + $0xb0] sm:$0xff] %vm644, 0.0
      %669 = vst.msk [vmem:[#allocation2 + $0xb8] sm:$0x3] %vm647, 0.0
      %670 = vst.msk [vmem:[#allocation2 + $0xc0] sm:$0xff] %vm644, 0.0
      %671 = vst.msk [vmem:[#allocation2 + $0xc8] sm:$0xff] %vm644, 0.0
      %672 = vst.msk [vmem:[#allocation2 + $0xd0] sm:$0x3] %vm647, 0.0
      %673 = vst.msk [vmem:[#allocation2 + $0xd8] sm:$0xff] %vm644, 0.0
      %674 = vst.msk [vmem:[#allocation2 + $0xe0] sm:$0xff] %vm644, 0.0
      %675 = vst.msk [vmem:[#allocation2 + $0xe8] sm:$0x3] %vm647, 0.0
      %676 = vst.msk [vmem:[#allocation2 + $0xf0] sm:$0xff] %vm644, 0.0
      %677 = vst.msk [vmem:[#allocation2 + $0xf8] sm:$0xff] %vm644, 0.0
      %678 = vst.msk [vmem:[#allocation2 + $0x100] sm:$0x3] %vm647, 0.0
      %679 = vst.msk [vmem:[#allocation2 + $0x108] sm:$0xff] %vm644, 0.0
      %680 = vst.msk [vmem:[#allocation2 + $0x110] sm:$0xff] %vm644, 0.0
      %681 = vst.msk [vmem:[#allocation2 + $0x118] sm:$0x3] %vm647, 0.0
      %682 = vst.msk [vmem:[#allocation2 + $0x120] sm:$0xff] %vm644, 0.0
      %683 = vst.msk [vmem:[#allocation2 + $0x128] sm:$0xff] %vm644, 0.0
      %684 = vst.msk [vmem:[#allocation2 + $0x130] sm:$0x3] %vm647, 0.0
      %685 = vst.msk [vmem:[#allocation2 + $0x138] sm:$0xff] %vm644, 0.0
      %686 = vst.msk [vmem:[#allocation2 + $0x140] sm:$0xff] %vm644, 0.0
      %687 = vst.msk [vmem:[#allocation2 + $0x148] sm:$0x3] %vm647, 0.0
      %688 = vst.msk [vmem:[#allocation2 + $0x150] sm:$0xff] %vm644, 0.0
      %689 = vst.msk [vmem:[#allocation2 + $0x158] sm:$0xff] %vm644, 0.0
      %690 = vst.msk [vmem:[#allocation2 + $0x160] sm:$0x3] %vm647, 0.0
      %691 = vst.msk [vmem:[#allocation2 + $0x168] sm:$0xff] %vm644, 0.0
      %692 = vst.msk [vmem:[#allocation2 + $0x170] sm:$0xff] %vm644, 0.0
      %693 = vst.msk [vmem:[#allocation2 + $0x178] sm:$0x3] %vm647, 0.0
      %694 = vst.msk [vmem:[#allocation2 + $0x180] sm:$0xff] %vm644, 0.0
      %695 = vst.msk [vmem:[#allocation2 + $0x188] sm:$0xff] %vm644, 0.0
      %696 = vst.msk [vmem:[#allocation2 + $0x190] sm:$0x3] %vm647, 0.0
      %697 = vst.msk [vmem:[#allocation2 + $0x198] sm:$0xff] %vm644, 0.0
      %698 = vst.msk [vmem:[#allocation2 + $0x1a0] sm:$0xff] %vm644, 0.0
      %699 = vst.msk [vmem:[#allocation2 + $0x1a8] sm:$0x3] %vm647, 0.0
      %s700 = scalar_lea.vmem [#allocation2], 24
      %701 = vst.msk [vmem:[%s700 + $0x1] sm:$0xff] %vm644, %v486
      %702 = vst.msk [vmem:[%s700 + $0x9] sm:$0xff] %vm644, %v491
      %703 = vst.msk [vmem:[%s700 + $0x19] sm:$0xff] %vm644, %v496
      %704 = vst.msk [vmem:[%s700 + $0x21] sm:$0xff] %vm644, %v501
      %705 = vst.msk [vmem:[%s700 + $0x31] sm:$0xff] %vm644, %v506
      %706 = vst.msk [vmem:[%s700 + $0x39] sm:$0xff] %vm644, %v511
      %707 = vst.msk [vmem:[%s700 + $0x49] sm:$0xff] %vm644, %v516
      %708 = vst.msk [vmem:[%s700 + $0x51] sm:$0xff] %vm644, %v521
      %709 = vst.msk [vmem:[%s700 + $0x61] sm:$0xff] %vm644, %v526
      %710 = vst.msk [vmem:[%s700 + $0x69] sm:$0xff] %vm644, %v531
      %711 = vst.msk [vmem:[%s700 + $0x79] sm:$0xff] %vm644, %v536
      %712 = vst.msk [vmem:[%s700 + $0x81] sm:$0xff] %vm644, %v541
      %713 = vst.msk [vmem:[%s700 + $0x91] sm:$0xff] %vm644, %v546
      %714 = vst.msk [vmem:[%s700 + $0x99] sm:$0xff] %vm644, %v551
      %715 = vst.msk [vmem:[%s700 + $0xa9] sm:$0xff] %vm644, %v556
      %716 = vst.msk [vmem:[%s700 + $0xb1] sm:$0xff] %vm644, %v561
      %717 = vst.msk [vmem:[%s700 + $0xc1] sm:$0xff] %vm644, %v566
      %718 = vst.msk [vmem:[%s700 + $0xc9] sm:$0xff] %vm644, %v571
      %719 = vst.msk [vmem:[%s700 + $0xd9] sm:$0xff] %vm644, %v576
      %720 = vst.msk [vmem:[%s700 + $0xe1] sm:$0xff] %vm644, %v581
      %721 = vst.msk [vmem:[%s700 + $0xf1] sm:$0xff] %vm644, %v586
      %722 = vst.msk [vmem:[%s700 + $0xf9] sm:$0xff] %vm644, %v591
      %723 = vst.msk [vmem:[%s700 + $0x109] sm:$0xff] %vm644, %v596
      %724 = vst.msk [vmem:[%s700 + $0x111] sm:$0xff] %vm644, %v601
      %725 = vst.msk [vmem:[%s700 + $0x121] sm:$0xff] %vm644, %v606
      %726 = vst.msk [vmem:[%s700 + $0x129] sm:$0xff] %vm644, %v611
      %727 = vst.msk [vmem:[%s700 + $0x139] sm:$0xff] %vm644, %v616
      %728 = vst.msk [vmem:[%s700 + $0x141] sm:$0xff] %vm644, %v621
      %729 = vst.msk [vmem:[%s700 + $0x151] sm:$0xff] %vm644, %v626
      %730 = vst.msk [vmem:[%s700 + $0x159] sm:$0xff] %vm644, %v631
      %731 = vst.msk [vmem:[%s700 + $0x169] sm:$0xff] %vm644, %v636
      %732 = vst.msk [vmem:[%s700 + $0x171] sm:$0xff] %vm644, %v641
      %v733 = vld [vmem:[%s3] sm:$0x1]
      %v734 = vld [vmem:[#allocation2] sm:$0xff]
      %v735 = vld [vmem:[#allocation2 + $0x8] sm:$0xff]
      %v736 = vld [vmem:[#allocation2 + $0x18] sm:$0xff]
      %v737 = vld [vmem:[#allocation2 + $0x20] sm:$0xff]
      %v738 = vld [vmem:[#allocation2 + $0x30] sm:$0xff]
      %v739 = vld [vmem:[#allocation2 + $0x38] sm:$0xff]
      %v740 = vld [vmem:[#allocation2 + $0x48] sm:$0xff]
      %v741 = vld [vmem:[#allocation2 + $0x50] sm:$0xff]
      %v742 = vld [vmem:[#allocation2 + $0x60] sm:$0xff]
      %v743 = vld [vmem:[#allocation2 + $0x68] sm:$0xff]
      %v744 = vld [vmem:[#allocation2 + $0x78] sm:$0xff]
      %v745 = vld [vmem:[#allocation2 + $0x80] sm:$0xff]
      %v746 = vld [vmem:[#allocation2 + $0x90] sm:$0xff]
      %v747 = vld [vmem:[#allocation2 + $0x98] sm:$0xff]
      %v748 = vld [vmem:[#allocation2 + $0xa8] sm:$0xff]
      %v749 = vld [vmem:[#allocation2 + $0xb0] sm:$0xff]
      %v750 = vld [vmem:[#allocation2 + $0xc0] sm:$0xff]
      %v751 = vld [vmem:[#allocation2 + $0xc8] sm:$0xff]
      %v752 = vld [vmem:[#allocation2 + $0xd8] sm:$0xff]
      %v753 = vld [vmem:[#allocation2 + $0xe0] sm:$0xff]
      %v754 = vld [vmem:[#allocation2 + $0xf0] sm:$0xff]
      %v755 = vld [vmem:[#allocation2 + $0xf8] sm:$0xff]
      %v756 = vld [vmem:[#allocation2 + $0x108] sm:$0xff]
      %v757 = vld [vmem:[#allocation2 + $0x110] sm:$0xff]
      %v758 = vld [vmem:[#allocation2 + $0x120] sm:$0xff]
      %v759 = vld [vmem:[#allocation2 + $0x128] sm:$0xff]
      %v760 = vld [vmem:[#allocation2 + $0x138] sm:$0xff]
      %v761 = vld [vmem:[#allocation2 + $0x140] sm:$0xff]
      %v762 = vld [vmem:[#allocation2 + $0x150] sm:$0xff]
      %v763 = vld [vmem:[#allocation2 + $0x158] sm:$0xff]
      %v764 = vld [vmem:[#allocation2 + $0x168] sm:$0xff]
      %v765 = vld [vmem:[#allocation2 + $0x170] sm:$0xff]
      %v766 = vlaneseq
      %v767 = vshrl.u32 %v766, 7
      %v768 = vsub.s32 0, %v767
      %v769 = vrot.slane %v733, %v768
      %v770 = vmul.f32 %v734, %v769
      %v771 = vmul.f32 %v735, %v769
      %v772 = vmul.f32 %v736, %v769
      %v773 = vmul.f32 %v737, %v769
      %v774 = vmul.f32 %v738, %v769
      %v775 = vmul.f32 %v739, %v769
      %v776 = vmul.f32 %v740, %v769
      %v777 = vmul.f32 %v741, %v769
      %v778 = vmul.f32 %v742, %v769
      %v779 = vmul.f32 %v743, %v769
      %v780 = vmul.f32 %v744, %v769
      %v781 = vmul.f32 %v745, %v769
      %v782 = vmul.f32 %v746, %v769
      %v783 = vmul.f32 %v747, %v769
      %v784 = vmul.f32 %v748, %v769
      %v785 = vmul.f32 %v749, %v769
      %v786 = vmul.f32 %v750, %v769
      %v787 = vmul.f32 %v751, %v769
      %v788 = vmul.f32 %v752, %v769
      %v789 = vmul.f32 %v753, %v769
      %v790 = vmul.f32 %v754, %v769
      %v791 = vmul.f32 %v755, %v769
      %v792 = vmul.f32 %v756, %v769
      %v793 = vmul.f32 %v757, %v769
      %v794 = vmul.f32 %v758, %v769
      %v795 = vmul.f32 %v759, %v769
      %v796 = vmul.f32 %v760, %v769
      %v797 = vmul.f32 %v761, %v769
      %v798 = vmul.f32 %v762, %v769
      %v799 = vmul.f32 %v763, %v769
      %v800 = vmul.f32 %v764, %v769
      %v801 = vmul.f32 %v765, %v769
      %v802 = vadd.f32 %v770, 0.0
      %v803 = vadd.f32 %v771, 0.0
      %v804 = vadd.f32 %v772, 0.0
      %v805 = vadd.f32 %v773, 0.0
      %v806 = vadd.f32 %v774, 0.0
      %v807 = vadd.f32 %v775, 0.0
      %v808 = vadd.f32 %v776, 0.0
      %v809 = vadd.f32 %v777, 0.0
      %v810 = vadd.f32 %v778, 0.0
      %v811 = vadd.f32 %v779, 0.0
      %v812 = vadd.f32 %v780, 0.0
      %v813 = vadd.f32 %v781, 0.0
      %v814 = vadd.f32 %v782, 0.0
      %v815 = vadd.f32 %v783, 0.0
      %v816 = vadd.f32 %v784, 0.0
      %v817 = vadd.f32 %v785, 0.0
      %v818 = vadd.f32 %v786, 0.0
      %v819 = vadd.f32 %v787, 0.0
      %v820 = vadd.f32 %v788, 0.0
      %v821 = vadd.f32 %v789, 0.0
      %v822 = vadd.f32 %v790, 0.0
      %v823 = vadd.f32 %v791, 0.0
      %v824 = vadd.f32 %v792, 0.0
      %v825 = vadd.f32 %v793, 0.0
      %v826 = vadd.f32 %v794, 0.0
      %v827 = vadd.f32 %v795, 0.0
      %v828 = vadd.f32 %v796, 0.0
      %v829 = vadd.f32 %v797, 0.0
      %v830 = vadd.f32 %v798, 0.0
      %v831 = vadd.f32 %v799, 0.0
      %v832 = vadd.f32 %v800, 0.0
      %v833 = vadd.f32 %v801, 0.0
      %v834 = vld [vmem:[%s3 + $0x1] sm:$0x1]
      %v835 = vld [vmem:[#allocation2 + $0x1] sm:$0xff]
      %v836 = vld [vmem:[#allocation2 + $0x9] sm:$0xff]
      %v837 = vld [vmem:[#allocation2 + $0x19] sm:$0xff]
      %v838 = vld [vmem:[#allocation2 + $0x21] sm:$0xff]
      %v839 = vld [vmem:[#allocation2 + $0x31] sm:$0xff]
      %v840 = vld [vmem:[#allocation2 + $0x39] sm:$0xff]
      %v841 = vld [vmem:[#allocation2 + $0x49] sm:$0xff]
      %v842 = vld [vmem:[#allocation2 + $0x51] sm:$0xff]
      %v843 = vld [vmem:[#allocation2 + $0x61] sm:$0xff]
      %v844 = vld [vmem:[#allocation2 + $0x69] sm:$0xff]
      %v845 = vld [vmem:[#allocation2 + $0x79] sm:$0xff]
      %v846 = vld [vmem:[#allocation2 + $0x81] sm:$0xff]
      %v847 = vld [vmem:[#allocation2 + $0x91] sm:$0xff]
      %v848 = vld [vmem:[#allocation2 + $0x99] sm:$0xff]
      %v849 = vld [vmem:[#allocation2 + $0xa9] sm:$0xff]
      %v850 = vld [vmem:[#allocation2 + $0xb1] sm:$0xff]
      %v851 = vld [vmem:[#allocation2 + $0xc1] sm:$0xff]
      %v852 = vld [vmem:[#allocation2 + $0xc9] sm:$0xff]
      %v853 = vld [vmem:[#allocation2 + $0xd9] sm:$0xff]
      %v854 = vld [vmem:[#allocation2 + $0xe1] sm:$0xff]
      %v855 = vld [vmem:[#allocation2 + $0xf1] sm:$0xff]
      %v856 = vld [vmem:[#allocation2 + $0xf9] sm:$0xff]
      %v857 = vld [vmem:[#allocation2 + $0x109] sm:$0xff]
      %v858 = vld [vmem:[#allocation2 + $0x111] sm:$0xff]
      %v859 = vld [vmem:[#allocation2 + $0x121] sm:$0xff]
      %v860 = vld [vmem:[#allocation2 + $0x129] sm:$0xff]
      %v861 = vld [vmem:[#allocation2 + $0x139] sm:$0xff]
      %v862 = vld [vmem:[#allocation2 + $0x141] sm:$0xff]
      %v863 = vld [vmem:[#allocation2 + $0x151] sm:$0xff]
      %v864 = vld [vmem:[#allocation2 + $0x159] sm:$0xff]
      %v865 = vld [vmem:[#allocation2 + $0x169] sm:$0xff]
      %v866 = vld [vmem:[#allocation2 + $0x171] sm:$0xff]
      %v867 = vlaneseq
      %v868 = vshrl.u32 %v867, 7
      %v869 = vsub.s32 0, %v868
      %v870 = vrot.slane %v834, %v869
      %v871 = vmul.f32 %v835, %v870
      %v872 = vmul.f32 %v836, %v870
      %v873 = vmul.f32 %v837, %v870
      %v874 = vmul.f32 %v838, %v870
      %v875 = vmul.f32 %v839, %v870
      %v876 = vmul.f32 %v840, %v870
      %v877 = vmul.f32 %v841, %v870
      %v878 = vmul.f32 %v842, %v870
      %v879 = vmul.f32 %v843, %v870
      %v880 = vmul.f32 %v844, %v870
      %v881 = vmul.f32 %v845, %v870
      %v882 = vmul.f32 %v846, %v870
      %v883 = vmul.f32 %v847, %v870
      %v884 = vmul.f32 %v848, %v870
      %v885 = vmul.f32 %v849, %v870
      %v886 = vmul.f32 %v850, %v870
      %v887 = vmul.f32 %v851, %v870
      %v888 = vmul.f32 %v852, %v870
      %v889 = vmul.f32 %v853, %v870
      %v890 = vmul.f32 %v854, %v870
      %v891 = vmul.f32 %v855, %v870
      %v892 = vmul.f32 %v856, %v870
      %v893 = vmul.f32 %v857, %v870
      %v894 = vmul.f32 %v858, %v870
      %v895 = vmul.f32 %v859, %v870
      %v896 = vmul.f32 %v860, %v870
      %v897 = vmul.f32 %v861, %v870
      %v898 = vmul.f32 %v862, %v870
      %v899 = vmul.f32 %v863, %v870
      %v900 = vmul.f32 %v864, %v870
      %v901 = vmul.f32 %v865, %v870
      %v902 = vmul.f32 %v866, %v870
      %v903 = vadd.f32 %v802, %v871
      %v904 = vadd.f32 %v803, %v872
      %v905 = vadd.f32 %v804, %v873
      %v906 = vadd.f32 %v805, %v874
      %v907 = vadd.f32 %v806, %v875
      %v908 = vadd.f32 %v807, %v876
      %v909 = vadd.f32 %v808, %v877
      %v910 = vadd.f32 %v809, %v878
      %v911 = vadd.f32 %v810, %v879
      %v912 = vadd.f32 %v811, %v880
      %v913 = vadd.f32 %v812, %v881
      %v914 = vadd.f32 %v813, %v882
      %v915 = vadd.f32 %v814, %v883
      %v916 = vadd.f32 %v815, %v884
      %v917 = vadd.f32 %v816, %v885
      %v918 = vadd.f32 %v817, %v886
      %v919 = vadd.f32 %v818, %v887
      %v920 = vadd.f32 %v819, %v888
      %v921 = vadd.f32 %v820, %v889
      %v922 = vadd.f32 %v821, %v890
      %v923 = vadd.f32 %v822, %v891
      %v924 = vadd.f32 %v823, %v892
      %v925 = vadd.f32 %v824, %v893
      %v926 = vadd.f32 %v825, %v894
      %v927 = vadd.f32 %v826, %v895
      %v928 = vadd.f32 %v827, %v896
      %v929 = vadd.f32 %v828, %v897
      %v930 = vadd.f32 %v829, %v898
      %v931 = vadd.f32 %v830, %v899
      %v932 = vadd.f32 %v831, %v900
      %v933 = vadd.f32 %v832, %v901
      %v934 = vadd.f32 %v833, %v902
      %v935 = vld [vmem:[%s3 + $0x2] sm:$0x1]
      %v936 = vld [vmem:[#allocation2 + $0x2] sm:$0xff]
      %v937 = vld [vmem:[#allocation2 + $0xa] sm:$0xff]
      %v938 = vld [vmem:[#allocation2 + $0x1a] sm:$0xff]
      %v939 = vld [vmem:[#allocation2 + $0x22] sm:$0xff]
      %v940 = vld [vmem:[#allocation2 + $0x32] sm:$0xff]
      %v941 = vld [vmem:[#allocation2 + $0x3a] sm:$0xff]
      %v942 = vld [vmem:[#allocation2 + $0x4a] sm:$0xff]
      %v943 = vld [vmem:[#allocation2 + $0x52] sm:$0xff]
      %v944 = vld [vmem:[#allocation2 + $0x62] sm:$0xff]
      %v945 = vld [vmem:[#allocation2 + $0x6a] sm:$0xff]
      %v946 = vld [vmem:[#allocation2 + $0x7a] sm:$0xff]
      %v947 = vld [vmem:[#allocation2 + $0x82] sm:$0xff]
      %v948 = vld [vmem:[#allocation2 + $0x92] sm:$0xff]
      %v949 = vld [vmem:[#allocation2 + $0x9a] sm:$0xff]
      %v950 = vld [vmem:[#allocation2 + $0xaa] sm:$0xff]
      %v951 = vld [vmem:[#allocation2 + $0xb2] sm:$0xff]
      %v952 = vld [vmem:[#allocation2 + $0xc2] sm:$0xff]
      %v953 = vld [vmem:[#allocation2 + $0xca] sm:$0xff]
      %v954 = vld [vmem:[#allocation2 + $0xda] sm:$0xff]
      %v955 = vld [vmem:[#allocation2 + $0xe2] sm:$0xff]
      %v956 = vld [vmem:[#allocation2 + $0xf2] sm:$0xff]
      %v957 = vld [vmem:[#allocation2 + $0xfa] sm:$0xff]
      %v958 = vld [vmem:[#allocation2 + $0x10a] sm:$0xff]
      %v959 = vld [vmem:[#allocation2 + $0x112] sm:$0xff]
      %v960 = vld [vmem:[#allocation2 + $0x122] sm:$0xff]
      %v961 = vld [vmem:[#allocation2 + $0x12a] sm:$0xff]
      %v962 = vld [vmem:[#allocation2 + $0x13a] sm:$0xff]
      %v963 = vld [vmem:[#allocation2 + $0x142] sm:$0xff]
      %v964 = vld [vmem:[#allocation2 + $0x152] sm:$0xff]
      %v965 = vld [vmem:[#allocation2 + $0x15a] sm:$0xff]
      %v966 = vld [vmem:[#allocation2 + $0x16a] sm:$0xff]
      %v967 = vld [vmem:[#allocation2 + $0x172] sm:$0xff]
      %v968 = vlaneseq
      %v969 = vshrl.u32 %v968, 7
      %v970 = vsub.s32 0, %v969
      %v971 = vrot.slane %v935, %v970
      %v972 = vmul.f32 %v936, %v971
      %v973 = vmul.f32 %v937, %v971
      %v974 = vmul.f32 %v938, %v971
      %v975 = vmul.f32 %v939, %v971
      %v976 = vmul.f32 %v940, %v971
      %v977 = vmul.f32 %v941, %v971
      %v978 = vmul.f32 %v942, %v971
      %v979 = vmul.f32 %v943, %v971
      %v980 = vmul.f32 %v944, %v971
      %v981 = vmul.f32 %v945, %v971
      %v982 = vmul.f32 %v946, %v971
      %v983 = vmul.f32 %v947, %v971
      %v984 = vmul.f32 %v948, %v971
      %v985 = vmul.f32 %v949, %v971
      %v986 = vmul.f32 %v950, %v971
      %v987 = vmul.f32 %v951, %v971
      %v988 = vmul.f32 %v952, %v971
      %v989 = vmul.f32 %v953, %v971
      %v990 = vmul.f32 %v954, %v971
      %v991 = vmul.f32 %v955, %v971
      %v992 = vmul.f32 %v956, %v971
      %v993 = vmul.f32 %v957, %v971
      %v994 = vmul.f32 %v958, %v971
      %v995 = vmul.f32 %v959, %v971
      %v996 = vmul.f32 %v960, %v971
      %v997 = vmul.f32 %v961, %v971
      %v998 = vmul.f32 %v962, %v971
      %v999 = vmul.f32 %v963, %v971
      %v1000 = vmul.f32 %v964, %v971
      %v1001 = vmul.f32 %v965, %v971
      %v1002 = vmul.f32 %v966, %v971
      %v1003 = vmul.f32 %v967, %v971
      %v1004 = vadd.f32 %v903, %v972
      %v1005 = vadd.f32 %v904, %v973
      %v1006 = vadd.f32 %v905, %v974
      %v1007 = vadd.f32 %v906, %v975
      %v1008 = vadd.f32 %v907, %v976
      %v1009 = vadd.f32 %v908, %v977
      %v1010 = vadd.f32 %v909, %v978
      %v1011 = vadd.f32 %v910, %v979
      %v1012 = vadd.f32 %v911, %v980
      %v1013 = vadd.f32 %v912, %v981
      %v1014 = vadd.f32 %v913, %v982
      %v1015 = vadd.f32 %v914, %v983
      %v1016 = vadd.f32 %v915, %v984
      %v1017 = vadd.f32 %v916, %v985
      %v1018 = vadd.f32 %v917, %v986
      %v1019 = vadd.f32 %v918, %v987
      %v1020 = vadd.f32 %v919, %v988
      %v1021 = vadd.f32 %v920, %v989
      %v1022 = vadd.f32 %v921, %v990
      %v1023 = vadd.f32 %v922, %v991
      %v1024 = vadd.f32 %v923, %v992
      %v1025 = vadd.f32 %v924, %v993
      %v1026 = vadd.f32 %v925, %v994
      %v1027 = vadd.f32 %v926, %v995
      %v1028 = vadd.f32 %v927, %v996
      %v1029 = vadd.f32 %v928, %v997
      %v1030 = vadd.f32 %v929, %v998
      %v1031 = vadd.f32 %v930, %v999
      %v1032 = vadd.f32 %v931, %v1000
      %v1033 = vadd.f32 %v932, %v1001
      %v1034 = vadd.f32 %v933, %v1002
      %v1035 = vadd.f32 %v934, %v1003
      %v1036 = vld [vmem:[%s3 + $0x3] sm:$0x1]
      %v1037 = vld [vmem:[%s700] sm:$0xff]
      %v1038 = vld [vmem:[%s700 + $0x8] sm:$0xff]
      %v1039 = vld [vmem:[%s700 + $0x18] sm:$0xff]
      %v1040 = vld [vmem:[%s700 + $0x20] sm:$0xff]
      %v1041 = vld [vmem:[%s700 + $0x30] sm:$0xff]
      %v1042 = vld [vmem:[%s700 + $0x38] sm:$0xff]
      %v1043 = vld [vmem:[%s700 + $0x48] sm:$0xff]
      %v1044 = vld [vmem:[%s700 + $0x50] sm:$0xff]
      %v1045 = vld [vmem:[%s700 + $0x60] sm:$0xff]
      %v1046 = vld [vmem:[%s700 + $0x68] sm:$0xff]
      %v1047 = vld [vmem:[%s700 + $0x78] sm:$0xff]
      %v1048 = vld [vmem:[%s700 + $0x80] sm:$0xff]
      %v1049 = vld [vmem:[%s700 + $0x90] sm:$0xff]
      %v1050 = vld [vmem:[%s700 + $0x98] sm:$0xff]
      %v1051 = vld [vmem:[%s700 + $0xa8] sm:$0xff]
      %v1052 = vld [vmem:[%s700 + $0xb0] sm:$0xff]
      %v1053 = vld [vmem:[%s700 + $0xc0] sm:$0xff]
      %v1054 = vld [vmem:[%s700 + $0xc8] sm:$0xff]
      %v1055 = vld [vmem:[%s700 + $0xd8] sm:$0xff]
      %v1056 = vld [vmem:[%s700 + $0xe0] sm:$0xff]
      %v1057 = vld [vmem:[%s700 + $0xf0] sm:$0xff]
      %v1058 = vld [vmem:[%s700 + $0xf8] sm:$0xff]
      %v1059 = vld [vmem:[%s700 + $0x108] sm:$0xff]
      %v1060 = vld [vmem:[%s700 + $0x110] sm:$0xff]
      %v1061 = vld [vmem:[%s700 + $0x120] sm:$0xff]
      %v1062 = vld [vmem:[%s700 + $0x128] sm:$0xff]
      %v1063 = vld [vmem:[%s700 + $0x138] sm:$0xff]
      %v1064 = vld [vmem:[%s700 + $0x140] sm:$0xff]
      %v1065 = vld [vmem:[%s700 + $0x150] sm:$0xff]
      %v1066 = vld [vmem:[%s700 + $0x158] sm:$0xff]
      %v1067 = vld [vmem:[%s700 + $0x168] sm:$0xff]
      %v1068 = vld [vmem:[%s700 + $0x170] sm:$0xff]
      %v1069 = vlaneseq
      %v1070 = vshrl.u32 %v1069, 7
      %v1071 = vsub.s32 0, %v1070
      %v1072 = vrot.slane %v1036, %v1071
      %v1073 = vmul.f32 %v1037, %v1072
      %v1074 = vmul.f32 %v1038, %v1072
      %v1075 = vmul.f32 %v1039, %v1072
      %v1076 = vmul.f32 %v1040, %v1072
      %v1077 = vmul.f32 %v1041, %v1072
      %v1078 = vmul.f32 %v1042, %v1072
      %v1079 = vmul.f32 %v1043, %v1072
      %v1080 = vmul.f32 %v1044, %v1072
      %v1081 = vmul.f32 %v1045, %v1072
      %v1082 = vmul.f32 %v1046, %v1072
      %v1083 = vmul.f32 %v1047, %v1072
      %v1084 = vmul.f32 %v1048, %v1072
      %v1085 = vmul.f32 %v1049, %v1072
      %v1086 = vmul.f32 %v1050, %v1072
      %v1087 = vmul.f32 %v1051, %v1072
      %v1088 = vmul.f32 %v1052, %v1072
      %v1089 = vmul.f32 %v1053, %v1072
      %v1090 = vmul.f32 %v1054, %v1072
      %v1091 = vmul.f32 %v1055, %v1072
      %v1092 = vmul.f32 %v1056, %v1072
      %v1093 = vmul.f32 %v1057, %v1072
      %v1094 = vmul.f32 %v1058, %v1072
      %v1095 = vmul.f32 %v1059, %v1072
      %v1096 = vmul.f32 %v1060, %v1072
      %v1097 = vmul.f32 %v1061, %v1072
      %v1098 = vmul.f32 %v1062, %v1072
      %v1099 = vmul.f32 %v1063, %v1072
      %v1100 = vmul.f32 %v1064, %v1072
      %v1101 = vmul.f32 %v1065, %v1072
      %v1102 = vmul.f32 %v1066, %v1072
      %v1103 = vmul.f32 %v1067, %v1072
      %v1104 = vmul.f32 %v1068, %v1072
      %v1105 = vadd.f32 %v1004, %v1073
      %v1106 = vadd.f32 %v1005, %v1074
      %v1107 = vadd.f32 %v1006, %v1075
      %v1108 = vadd.f32 %v1007, %v1076
      %v1109 = vadd.f32 %v1008, %v1077
      %v1110 = vadd.f32 %v1009, %v1078
      %v1111 = vadd.f32 %v1010, %v1079
      %v1112 = vadd.f32 %v1011, %v1080
      %v1113 = vadd.f32 %v1012, %v1081
      %v1114 = vadd.f32 %v1013, %v1082
      %v1115 = vadd.f32 %v1014, %v1083
      %v1116 = vadd.f32 %v1015, %v1084
      %v1117 = vadd.f32 %v1016, %v1085
      %v1118 = vadd.f32 %v1017, %v1086
      %v1119 = vadd.f32 %v1018, %v1087
      %v1120 = vadd.f32 %v1019, %v1088
      %v1121 = vadd.f32 %v1020, %v1089
      %v1122 = vadd.f32 %v1021, %v1090
      %v1123 = vadd.f32 %v1022, %v1091
      %v1124 = vadd.f32 %v1023, %v1092
      %v1125 = vadd.f32 %v1024, %v1093
      %v1126 = vadd.f32 %v1025, %v1094
      %v1127 = vadd.f32 %v1026, %v1095
      %v1128 = vadd.f32 %v1027, %v1096
      %v1129 = vadd.f32 %v1028, %v1097
      %v1130 = vadd.f32 %v1029, %v1098
      %v1131 = vadd.f32 %v1030, %v1099
      %v1132 = vadd.f32 %v1031, %v1100
      %v1133 = vadd.f32 %v1032, %v1101
      %v1134 = vadd.f32 %v1033, %v1102
      %v1135 = vadd.f32 %v1034, %v1103
      %v1136 = vadd.f32 %v1035, %v1104
      %v1137 = vld [vmem:[%s3 + $0x4] sm:$0x1]
      %v1138 = vld [vmem:[%s700 + $0x1] sm:$0xff]
      %v1139 = vld [vmem:[%s700 + $0x9] sm:$0xff]
      %v1140 = vld [vmem:[%s700 + $0x19] sm:$0xff]
      %v1141 = vld [vmem:[%s700 + $0x21] sm:$0xff]
      %v1142 = vld [vmem:[%s700 + $0x31] sm:$0xff]
      %v1143 = vld [vmem:[%s700 + $0x39] sm:$0xff]
      %v1144 = vld [vmem:[%s700 + $0x49] sm:$0xff]
      %v1145 = vld [vmem:[%s700 + $0x51] sm:$0xff]
      %v1146 = vld [vmem:[%s700 + $0x61] sm:$0xff]
      %v1147 = vld [vmem:[%s700 + $0x69] sm:$0xff]
      %v1148 = vld [vmem:[%s700 + $0x79] sm:$0xff]
      %v1149 = vld [vmem:[%s700 + $0x81] sm:$0xff]
      %v1150 = vld [vmem:[%s700 + $0x91] sm:$0xff]
      %v1151 = vld [vmem:[%s700 + $0x99] sm:$0xff]
      %v1152 = vld [vmem:[%s700 + $0xa9] sm:$0xff]
      %v1153 = vld [vmem:[%s700 + $0xb1] sm:$0xff]
      %v1154 = vld [vmem:[%s700 + $0xc1] sm:$0xff]
      %v1155 = vld [vmem:[%s700 + $0xc9] sm:$0xff]
      %v1156 = vld [vmem:[%s700 + $0xd9] sm:$0xff]
      %v1157 = vld [vmem:[%s700 + $0xe1] sm:$0xff]
      %v1158 = vld [vmem:[%s700 + $0xf1] sm:$0xff]
      %v1159 = vld [vmem:[%s700 + $0xf9] sm:$0xff]
      %v1160 = vld [vmem:[%s700 + $0x109] sm:$0xff]
      %v1161 = vld [vmem:[%s700 + $0x111] sm:$0xff]
      %v1162 = vld [vmem:[%s700 + $0x121] sm:$0xff]
      %v1163 = vld [vmem:[%s700 + $0x129] sm:$0xff]
      %v1164 = vld [vmem:[%s700 + $0x139] sm:$0xff]
      %v1165 = vld [vmem:[%s700 + $0x141] sm:$0xff]
      %v1166 = vld [vmem:[%s700 + $0x151] sm:$0xff]
      %v1167 = vld [vmem:[%s700 + $0x159] sm:$0xff]
      %v1168 = vld [vmem:[%s700 + $0x169] sm:$0xff]
      %v1169 = vld [vmem:[%s700 + $0x171] sm:$0xff]
      %v1170 = vlaneseq
      %v1171 = vshrl.u32 %v1170, 7
      %v1172 = vsub.s32 0, %v1171
      %v1173 = vrot.slane %v1137, %v1172
      %v1174 = vmul.f32 %v1138, %v1173
      %v1175 = vmul.f32 %v1139, %v1173
      %v1176 = vmul.f32 %v1140, %v1173
      %v1177 = vmul.f32 %v1141, %v1173
      %v1178 = vmul.f32 %v1142, %v1173
      %v1179 = vmul.f32 %v1143, %v1173
      %v1180 = vmul.f32 %v1144, %v1173
      %v1181 = vmul.f32 %v1145, %v1173
      %v1182 = vmul.f32 %v1146, %v1173
      %v1183 = vmul.f32 %v1147, %v1173
      %v1184 = vmul.f32 %v1148, %v1173
      %v1185 = vmul.f32 %v1149, %v1173
      %v1186 = vmul.f32 %v1150, %v1173
      %v1187 = vmul.f32 %v1151, %v1173
      %v1188 = vmul.f32 %v1152, %v1173
      %v1189 = vmul.f32 %v1153, %v1173
      %v1190 = vmul.f32 %v1154, %v1173
      %v1191 = vmul.f32 %v1155, %v1173
      %v1192 = vmul.f32 %v1156, %v1173
      %v1193 = vmul.f32 %v1157, %v1173
      %v1194 = vmul.f32 %v1158, %v1173
      %v1195 = vmul.f32 %v1159, %v1173
      %v1196 = vmul.f32 %v1160, %v1173
      %v1197 = vmul.f32 %v1161, %v1173
      %v1198 = vmul.f32 %v1162, %v1173
      %v1199 = vmul.f32 %v1163, %v1173
      %v1200 = vmul.f32 %v1164, %v1173
      %v1201 = vmul.f32 %v1165, %v1173
      %v1202 = vmul.f32 %v1166, %v1173
      %v1203 = vmul.f32 %v1167, %v1173
      %v1204 = vmul.f32 %v1168, %v1173
      %v1205 = vmul.f32 %v1169, %v1173
      %v1206 = vadd.f32 %v1105, %v1174
      %v1207 = vadd.f32 %v1106, %v1175
      %v1208 = vadd.f32 %v1107, %v1176
      %v1209 = vadd.f32 %v1108, %v1177
      %v1210 = vadd.f32 %v1109, %v1178
      %v1211 = vadd.f32 %v1110, %v1179
      %v1212 = vadd.f32 %v1111, %v1180
      %v1213 = vadd.f32 %v1112, %v1181
      %v1214 = vadd.f32 %v1113, %v1182
      %v1215 = vadd.f32 %v1114, %v1183
      %v1216 = vadd.f32 %v1115, %v1184
      %v1217 = vadd.f32 %v1116, %v1185
      %v1218 = vadd.f32 %v1117, %v1186
      %v1219 = vadd.f32 %v1118, %v1187
      %v1220 = vadd.f32 %v1119, %v1188
      %v1221 = vadd.f32 %v1120, %v1189
      %v1222 = vadd.f32 %v1121, %v1190
      %v1223 = vadd.f32 %v1122, %v1191
      %v1224 = vadd.f32 %v1123, %v1192
      %v1225 = vadd.f32 %v1124, %v1193
      %v1226 = vadd.f32 %v1125, %v1194
      %v1227 = vadd.f32 %v1126, %v1195
      %v1228 = vadd.f32 %v1127, %v1196
      %v1229 = vadd.f32 %v1128, %v1197
      %v1230 = vadd.f32 %v1129, %v1198
      %v1231 = vadd.f32 %v1130, %v1199
      %v1232 = vadd.f32 %v1131, %v1200
      %v1233 = vadd.f32 %v1132, %v1201
      %v1234 = vadd.f32 %v1133, %v1202
      %v1235 = vadd.f32 %v1134, %v1203
      %v1236 = vadd.f32 %v1135, %v1204
      %v1237 = vadd.f32 %v1136, %v1205
      %v1238 = vld [vmem:[%s3 + $0x5] sm:$0x1]
      %v1239 = vld [vmem:[%s700 + $0x2] sm:$0xff]
      %v1240 = vld [vmem:[%s700 + $0xa] sm:$0xff]
      %v1241 = vld [vmem:[%s700 + $0x1a] sm:$0xff]
      %v1242 = vld [vmem:[%s700 + $0x22] sm:$0xff]
      %v1243 = vld [vmem:[%s700 + $0x32] sm:$0xff]
      %v1244 = vld [vmem:[%s700 + $0x3a] sm:$0xff]
      %v1245 = vld [vmem:[%s700 + $0x4a] sm:$0xff]
      %v1246 = vld [vmem:[%s700 + $0x52] sm:$0xff]
      %v1247 = vld [vmem:[%s700 + $0x62] sm:$0xff]
      %v1248 = vld [vmem:[%s700 + $0x6a] sm:$0xff]
      %v1249 = vld [vmem:[%s700 + $0x7a] sm:$0xff]
      %v1250 = vld [vmem:[%s700 + $0x82] sm:$0xff]
      %v1251 = vld [vmem:[%s700 + $0x92] sm:$0xff]
      %v1252 = vld [vmem:[%s700 + $0x9a] sm:$0xff]
      %v1253 = vld [vmem:[%s700 + $0xaa] sm:$0xff]
      %v1254 = vld [vmem:[%s700 + $0xb2] sm:$0xff]
      %v1255 = vld [vmem:[%s700 + $0xc2] sm:$0xff]
      %v1256 = vld [vmem:[%s700 + $0xca] sm:$0xff]
      %v1257 = vld [vmem:[%s700 + $0xda] sm:$0xff]
      %v1258 = vld [vmem:[%s700 + $0xe2] sm:$0xff]
      %v1259 = vld [vmem:[%s700 + $0xf2] sm:$0xff]
      %v1260 = vld [vmem:[%s700 + $0xfa] sm:$0xff]
      %v1261 = vld [vmem:[%s700 + $0x10a] sm:$0xff]
      %v1262 = vld [vmem:[%s700 + $0x112] sm:$0xff]
      %v1263 = vld [vmem:[%s700 + $0x122] sm:$0xff]
      %v1264 = vld [vmem:[%s700 + $0x12a] sm:$0xff]
      %v1265 = vld [vmem:[%s700 + $0x13a] sm:$0xff]
      %v1266 = vld [vmem:[%s700 + $0x142] sm:$0xff]
      %v1267 = vld [vmem:[%s700 + $0x152] sm:$0xff]
      %v1268 = vld [vmem:[%s700 + $0x15a] sm:$0xff]
      %v1269 = vld [vmem:[%s700 + $0x16a] sm:$0xff]
      %v1270 = vld [vmem:[%s700 + $0x172] sm:$0xff]
      %v1271 = vlaneseq
      %v1272 = vshrl.u32 %v1271, 7
      %v1273 = vsub.s32 0, %v1272
      %v1274 = vrot.slane %v1238, %v1273
      %v1275 = vmul.f32 %v1239, %v1274
      %v1276 = vmul.f32 %v1240, %v1274
      %v1277 = vmul.f32 %v1241, %v1274
      %v1278 = vmul.f32 %v1242, %v1274
      %v1279 = vmul.f32 %v1243, %v1274
      %v1280 = vmul.f32 %v1244, %v1274
      %v1281 = vmul.f32 %v1245, %v1274
      %v1282 = vmul.f32 %v1246, %v1274
      %v1283 = vmul.f32 %v1247, %v1274
      %v1284 = vmul.f32 %v1248, %v1274
      %v1285 = vmul.f32 %v1249, %v1274
      %v1286 = vmul.f32 %v1250, %v1274
      %v1287 = vmul.f32 %v1251, %v1274
      %v1288 = vmul.f32 %v1252, %v1274
      %v1289 = vmul.f32 %v1253, %v1274
      %v1290 = vmul.f32 %v1254, %v1274
      %v1291 = vmul.f32 %v1255, %v1274
      %v1292 = vmul.f32 %v1256, %v1274
      %v1293 = vmul.f32 %v1257, %v1274
      %v1294 = vmul.f32 %v1258, %v1274
      %v1295 = vmul.f32 %v1259, %v1274
      %v1296 = vmul.f32 %v1260, %v1274
      %v1297 = vmul.f32 %v1261, %v1274
      %v1298 = vmul.f32 %v1262, %v1274
      %v1299 = vmul.f32 %v1263, %v1274
      %v1300 = vmul.f32 %v1264, %v1274
      %v1301 = vmul.f32 %v1265, %v1274
      %v1302 = vmul.f32 %v1266, %v1274
      %v1303 = vmul.f32 %v1267, %v1274
      %v1304 = vmul.f32 %v1268, %v1274
      %v1305 = vmul.f32 %v1269, %v1274
      %v1306 = vmul.f32 %v1270, %v1274
      %v1307 = vadd.f32 %v1206, %v1275
      %v1308 = vadd.f32 %v1207, %v1276
      %v1309 = vadd.f32 %v1208, %v1277
      %v1310 = vadd.f32 %v1209, %v1278
      %v1311 = vadd.f32 %v1210, %v1279
      %v1312 = vadd.f32 %v1211, %v1280
      %v1313 = vadd.f32 %v1212, %v1281
      %v1314 = vadd.f32 %v1213, %v1282
      %v1315 = vadd.f32 %v1214, %v1283
      %v1316 = vadd.f32 %v1215, %v1284
      %v1317 = vadd.f32 %v1216, %v1285
      %v1318 = vadd.f32 %v1217, %v1286
      %v1319 = vadd.f32 %v1218, %v1287
      %v1320 = vadd.f32 %v1219, %v1288
      %v1321 = vadd.f32 %v1220, %v1289
      %v1322 = vadd.f32 %v1221, %v1290
      %v1323 = vadd.f32 %v1222, %v1291
      %v1324 = vadd.f32 %v1223, %v1292
      %v1325 = vadd.f32 %v1224, %v1293
      %v1326 = vadd.f32 %v1225, %v1294
      %v1327 = vadd.f32 %v1226, %v1295
      %v1328 = vadd.f32 %v1227, %v1296
      %v1329 = vadd.f32 %v1228, %v1297
      %v1330 = vadd.f32 %v1229, %v1298
      %v1331 = vadd.f32 %v1230, %v1299
      %v1332 = vadd.f32 %v1231, %v1300
      %v1333 = vadd.f32 %v1232, %v1301
      %v1334 = vadd.f32 %v1233, %v1302
      %v1335 = vadd.f32 %v1234, %v1303
      %v1336 = vadd.f32 %v1235, %v1304
      %v1337 = vadd.f32 %v1236, %v1305
      %v1338 = vadd.f32 %v1237, %v1306
      %v1339 = vld [vmem:[%s3 + $0x6] sm:$0x1]
      %s1340 = scalar_lea.vmem [#allocation2], 48
      %v1341 = vld [vmem:[%s1340] sm:$0xff]
      %v1342 = vld [vmem:[%s1340 + $0x8] sm:$0xff]
      %v1343 = vld [vmem:[%s1340 + $0x18] sm:$0xff]
      %v1344 = vld [vmem:[%s1340 + $0x20] sm:$0xff]
      %v1345 = vld [vmem:[%s1340 + $0x30] sm:$0xff]
      %v1346 = vld [vmem:[%s1340 + $0x38] sm:$0xff]
      %v1347 = vld [vmem:[%s1340 + $0x48] sm:$0xff]
      %v1348 = vld [vmem:[%s1340 + $0x50] sm:$0xff]
      %v1349 = vld [vmem:[%s1340 + $0x60] sm:$0xff]
      %v1350 = vld [vmem:[%s1340 + $0x68] sm:$0xff]
      %v1351 = vld [vmem:[%s1340 + $0x78] sm:$0xff]
      %v1352 = vld [vmem:[%s1340 + $0x80] sm:$0xff]
      %v1353 = vld [vmem:[%s1340 + $0x90] sm:$0xff]
      %v1354 = vld [vmem:[%s1340 + $0x98] sm:$0xff]
      %v1355 = vld [vmem:[%s1340 + $0xa8] sm:$0xff]
      %v1356 = vld [vmem:[%s1340 + $0xb0] sm:$0xff]
      %v1357 = vld [vmem:[%s1340 + $0xc0] sm:$0xff]
      %v1358 = vld [vmem:[%s1340 + $0xc8] sm:$0xff]
      %v1359 = vld [vmem:[%s1340 + $0xd8] sm:$0xff]
      %v1360 = vld [vmem:[%s1340 + $0xe0] sm:$0xff]
      %v1361 = vld [vmem:[%s1340 + $0xf0] sm:$0xff]
      %v1362 = vld [vmem:[%s1340 + $0xf8] sm:$0xff]
      %v1363 = vld [vmem:[%s1340 + $0x108] sm:$0xff]
      %v1364 = vld [vmem:[%s1340 + $0x110] sm:$0xff]
      %v1365 = vld [vmem:[%s1340 + $0x120] sm:$0xff]
      %v1366 = vld [vmem:[%s1340 + $0x128] sm:$0xff]
      %v1367 = vld [vmem:[%s1340 + $0x138] sm:$0xff]
      %v1368 = vld [vmem:[%s1340 + $0x140] sm:$0xff]
      %v1369 = vld [vmem:[%s1340 + $0x150] sm:$0xff]
      %v1370 = vld [vmem:[%s1340 + $0x158] sm:$0xff]
      %v1371 = vld [vmem:[%s1340 + $0x168] sm:$0xff]
      %v1372 = vld [vmem:[%s1340 + $0x170] sm:$0xff]
      %v1373 = vlaneseq
      %v1374 = vshrl.u32 %v1373, 7
      %v1375 = vsub.s32 0, %v1374
      %v1376 = vrot.slane %v1339, %v1375
      %v1377 = vmul.f32 %v1341, %v1376
      %v1378 = vmul.f32 %v1342, %v1376
      %v1379 = vmul.f32 %v1343, %v1376
      %v1380 = vmul.f32 %v1344, %v1376
      %v1381 = vmul.f32 %v1345, %v1376
      %v1382 = vmul.f32 %v1346, %v1376
      %v1383 = vmul.f32 %v1347, %v1376
      %v1384 = vmul.f32 %v1348, %v1376
      %v1385 = vmul.f32 %v1349, %v1376
      %v1386 = vmul.f32 %v1350, %v1376
      %v1387 = vmul.f32 %v1351, %v1376
      %v1388 = vmul.f32 %v1352, %v1376
      %v1389 = vmul.f32 %v1353, %v1376
      %v1390 = vmul.f32 %v1354, %v1376
      %v1391 = vmul.f32 %v1355, %v1376
      %v1392 = vmul.f32 %v1356, %v1376
      %v1393 = vmul.f32 %v1357, %v1376
      %v1394 = vmul.f32 %v1358, %v1376
      %v1395 = vmul.f32 %v1359, %v1376
      %v1396 = vmul.f32 %v1360, %v1376
      %v1397 = vmul.f32 %v1361, %v1376
      %v1398 = vmul.f32 %v1362, %v1376
      %v1399 = vmul.f32 %v1363, %v1376
      %v1400 = vmul.f32 %v1364, %v1376
      %v1401 = vmul.f32 %v1365, %v1376
      %v1402 = vmul.f32 %v1366, %v1376
      %v1403 = vmul.f32 %v1367, %v1376
      %v1404 = vmul.f32 %v1368, %v1376
      %v1405 = vmul.f32 %v1369, %v1376
      %v1406 = vmul.f32 %v1370, %v1376
      %v1407 = vmul.f32 %v1371, %v1376
      %v1408 = vmul.f32 %v1372, %v1376
      %v1409 = vadd.f32 %v1307, %v1377
      %v1410 = vadd.f32 %v1308, %v1378
      %v1411 = vadd.f32 %v1309, %v1379
      %v1412 = vadd.f32 %v1310, %v1380
      %v1413 = vadd.f32 %v1311, %v1381
      %v1414 = vadd.f32 %v1312, %v1382
      %v1415 = vadd.f32 %v1313, %v1383
      %v1416 = vadd.f32 %v1314, %v1384
      %v1417 = vadd.f32 %v1315, %v1385
      %v1418 = vadd.f32 %v1316, %v1386
      %v1419 = vadd.f32 %v1317, %v1387
      %v1420 = vadd.f32 %v1318, %v1388
      %v1421 = vadd.f32 %v1319, %v1389
      %v1422 = vadd.f32 %v1320, %v1390
      %v1423 = vadd.f32 %v1321, %v1391
      %v1424 = vadd.f32 %v1322, %v1392
      %v1425 = vadd.f32 %v1323, %v1393
      %v1426 = vadd.f32 %v1324, %v1394
      %v1427 = vadd.f32 %v1325, %v1395
      %v1428 = vadd.f32 %v1326, %v1396
      %v1429 = vadd.f32 %v1327, %v1397
      %v1430 = vadd.f32 %v1328, %v1398
      %v1431 = vadd.f32 %v1329, %v1399
      %v1432 = vadd.f32 %v1330, %v1400
      %v1433 = vadd.f32 %v1331, %v1401
      %v1434 = vadd.f32 %v1332, %v1402
      %v1435 = vadd.f32 %v1333, %v1403
      %v1436 = vadd.f32 %v1334, %v1404
      %v1437 = vadd.f32 %v1335, %v1405
      %v1438 = vadd.f32 %v1336, %v1406
      %v1439 = vadd.f32 %v1337, %v1407
      %v1440 = vadd.f32 %v1338, %v1408
      %v1441 = vld [vmem:[%s3 + $0x7] sm:$0x1]
      %v1442 = vld [vmem:[%s1340 + $0x1] sm:$0xff]
      %v1443 = vld [vmem:[%s1340 + $0x9] sm:$0xff]
      %v1444 = vld [vmem:[%s1340 + $0x19] sm:$0xff]
      %v1445 = vld [vmem:[%s1340 + $0x21] sm:$0xff]
      %v1446 = vld [vmem:[%s1340 + $0x31] sm:$0xff]
      %v1447 = vld [vmem:[%s1340 + $0x39] sm:$0xff]
      %v1448 = vld [vmem:[%s1340 + $0x49] sm:$0xff]
      %v1449 = vld [vmem:[%s1340 + $0x51] sm:$0xff]
      %v1450 = vld [vmem:[%s1340 + $0x61] sm:$0xff]
      %v1451 = vld [vmem:[%s1340 + $0x69] sm:$0xff]
      %v1452 = vld [vmem:[%s1340 + $0x79] sm:$0xff]
      %v1453 = vld [vmem:[%s1340 + $0x81] sm:$0xff]
      %v1454 = vld [vmem:[%s1340 + $0x91] sm:$0xff]
      %v1455 = vld [vmem:[%s1340 + $0x99] sm:$0xff]
      %v1456 = vld [vmem:[%s1340 + $0xa9] sm:$0xff]
      %v1457 = vld [vmem:[%s1340 + $0xb1] sm:$0xff]
      %v1458 = vld [vmem:[%s1340 + $0xc1] sm:$0xff]
      %v1459 = vld [vmem:[%s1340 + $0xc9] sm:$0xff]
      %v1460 = vld [vmem:[%s1340 + $0xd9] sm:$0xff]
      %v1461 = vld [vmem:[%s1340 + $0xe1] sm:$0xff]
      %v1462 = vld [vmem:[%s1340 + $0xf1] sm:$0xff]
      %v1463 = vld [vmem:[%s1340 + $0xf9] sm:$0xff]
      %v1464 = vld [vmem:[%s1340 + $0x109] sm:$0xff]
      %v1465 = vld [vmem:[%s1340 + $0x111] sm:$0xff]
      %v1466 = vld [vmem:[%s1340 + $0x121] sm:$0xff]
      %v1467 = vld [vmem:[%s1340 + $0x129] sm:$0xff]
      %v1468 = vld [vmem:[%s1340 + $0x139] sm:$0xff]
      %v1469 = vld [vmem:[%s1340 + $0x141] sm:$0xff]
      %v1470 = vld [vmem:[%s1340 + $0x151] sm:$0xff]
      %v1471 = vld [vmem:[%s1340 + $0x159] sm:$0xff]
      %v1472 = vld [vmem:[%s1340 + $0x169] sm:$0xff]
      %v1473 = vld [vmem:[%s1340 + $0x171] sm:$0xff]
      %v1474 = vlaneseq
      %v1475 = vshrl.u32 %v1474, 7
      %v1476 = vsub.s32 0, %v1475
      %v1477 = vrot.slane %v1441, %v1476
      %v1478 = vmul.f32 %v1442, %v1477
      %v1479 = vmul.f32 %v1443, %v1477
      %v1480 = vmul.f32 %v1444, %v1477
      %v1481 = vmul.f32 %v1445, %v1477
      %v1482 = vmul.f32 %v1446, %v1477
      %v1483 = vmul.f32 %v1447, %v1477
      %v1484 = vmul.f32 %v1448, %v1477
      %v1485 = vmul.f32 %v1449, %v1477
      %v1486 = vmul.f32 %v1450, %v1477
      %v1487 = vmul.f32 %v1451, %v1477
      %v1488 = vmul.f32 %v1452, %v1477
      %v1489 = vmul.f32 %v1453, %v1477
      %v1490 = vmul.f32 %v1454, %v1477
      %v1491 = vmul.f32 %v1455, %v1477
      %v1492 = vmul.f32 %v1456, %v1477
      %v1493 = vmul.f32 %v1457, %v1477
      %v1494 = vmul.f32 %v1458, %v1477
      %v1495 = vmul.f32 %v1459, %v1477
      %v1496 = vmul.f32 %v1460, %v1477
      %v1497 = vmul.f32 %v1461, %v1477
      %v1498 = vmul.f32 %v1462, %v1477
      %v1499 = vmul.f32 %v1463, %v1477
      %v1500 = vmul.f32 %v1464, %v1477
      %v1501 = vmul.f32 %v1465, %v1477
      %v1502 = vmul.f32 %v1466, %v1477
      %v1503 = vmul.f32 %v1467, %v1477
      %v1504 = vmul.f32 %v1468, %v1477
      %v1505 = vmul.f32 %v1469, %v1477
      %v1506 = vmul.f32 %v1470, %v1477
      %v1507 = vmul.f32 %v1471, %v1477
      %v1508 = vmul.f32 %v1472, %v1477
      %v1509 = vmul.f32 %v1473, %v1477
      %v1510 = vadd.f32 %v1409, %v1478
      %v1511 = vadd.f32 %v1410, %v1479
      %v1512 = vadd.f32 %v1411, %v1480
      %v1513 = vadd.f32 %v1412, %v1481
      %v1514 = vadd.f32 %v1413, %v1482
      %v1515 = vadd.f32 %v1414, %v1483
      %v1516 = vadd.f32 %v1415, %v1484
      %v1517 = vadd.f32 %v1416, %v1485
      %v1518 = vadd.f32 %v1417, %v1486
      %v1519 = vadd.f32 %v1418, %v1487
      %v1520 = vadd.f32 %v1419, %v1488
      %v1521 = vadd.f32 %v1420, %v1489
      %v1522 = vadd.f32 %v1421, %v1490
      %v1523 = vadd.f32 %v1422, %v1491
      %v1524 = vadd.f32 %v1423, %v1492
      %v1525 = vadd.f32 %v1424, %v1493
      %v1526 = vadd.f32 %v1425, %v1494
      %v1527 = vadd.f32 %v1426, %v1495
      %v1528 = vadd.f32 %v1427, %v1496
      %v1529 = vadd.f32 %v1428, %v1497
      %v1530 = vadd.f32 %v1429, %v1498
      %v1531 = vadd.f32 %v1430, %v1499
      %v1532 = vadd.f32 %v1431, %v1500
      %v1533 = vadd.f32 %v1432, %v1501
      %v1534 = vadd.f32 %v1433, %v1502
      %v1535 = vadd.f32 %v1434, %v1503
      %v1536 = vadd.f32 %v1435, %v1504
      %v1537 = vadd.f32 %v1436, %v1505
      %v1538 = vadd.f32 %v1437, %v1506
      %v1539 = vadd.f32 %v1438, %v1507
      %v1540 = vadd.f32 %v1439, %v1508
      %v1541 = vadd.f32 %v1440, %v1509
      %v1542 = vld [vmem:[%s3 + $0x8] sm:$0x1]
      %v1543 = vld [vmem:[%s1340 + $0x2] sm:$0xff]
      %v1544 = vld [vmem:[%s1340 + $0xa] sm:$0xff]
      %v1545 = vld [vmem:[%s1340 + $0x1a] sm:$0xff]
      %v1546 = vld [vmem:[%s1340 + $0x22] sm:$0xff]
      %v1547 = vld [vmem:[%s1340 + $0x32] sm:$0xff]
      %v1548 = vld [vmem:[%s1340 + $0x3a] sm:$0xff]
      %v1549 = vld [vmem:[%s1340 + $0x4a] sm:$0xff]
      %v1550 = vld [vmem:[%s1340 + $0x52] sm:$0xff]
      %v1551 = vld [vmem:[%s1340 + $0x62] sm:$0xff]
      %v1552 = vld [vmem:[%s1340 + $0x6a] sm:$0xff]
      %v1553 = vld [vmem:[%s1340 + $0x7a] sm:$0xff]
      %v1554 = vld [vmem:[%s1340 + $0x82] sm:$0xff]
      %v1555 = vld [vmem:[%s1340 + $0x92] sm:$0xff]
      %v1556 = vld [vmem:[%s1340 + $0x9a] sm:$0xff]
      %v1557 = vld [vmem:[%s1340 + $0xaa] sm:$0xff]
      %v1558 = vld [vmem:[%s1340 + $0xb2] sm:$0xff]
      %v1559 = vld [vmem:[%s1340 + $0xc2] sm:$0xff]
      %v1560 = vld [vmem:[%s1340 + $0xca] sm:$0xff]
      %v1561 = vld [vmem:[%s1340 + $0xda] sm:$0xff]
      %v1562 = vld [vmem:[%s1340 + $0xe2] sm:$0xff]
      %v1563 = vld [vmem:[%s1340 + $0xf2] sm:$0xff]
      %v1564 = vld [vmem:[%s1340 + $0xfa] sm:$0xff]
      %v1565 = vld [vmem:[%s1340 + $0x10a] sm:$0xff]
      %v1566 = vld [vmem:[%s1340 + $0x112] sm:$0xff]
      %v1567 = vld [vmem:[%s1340 + $0x122] sm:$0xff]
      %v1568 = vld [vmem:[%s1340 + $0x12a] sm:$0xff]
      %v1569 = vld [vmem:[%s1340 + $0x13a] sm:$0xff]
      %v1570 = vld [vmem:[%s1340 + $0x142] sm:$0xff]
      %v1571 = vld [vmem:[%s1340 + $0x152] sm:$0xff]
      %v1572 = vld [vmem:[%s1340 + $0x15a] sm:$0xff]
      %v1573 = vld [vmem:[%s1340 + $0x16a] sm:$0xff]
      %v1574 = vld [vmem:[%s1340 + $0x172] sm:$0xff]
      %v1575 = vlaneseq
      %v1576 = vshrl.u32 %v1575, 7
      %v1577 = vsub.s32 0, %v1576
      %v1578 = vrot.slane %v1542, %v1577
      %v1579 = vmul.f32 %v1543, %v1578
      %v1580 = vmul.f32 %v1544, %v1578
      %v1581 = vmul.f32 %v1545, %v1578
      %v1582 = vmul.f32 %v1546, %v1578
      %v1583 = vmul.f32 %v1547, %v1578
      %v1584 = vmul.f32 %v1548, %v1578
      %v1585 = vmul.f32 %v1549, %v1578
      %v1586 = vmul.f32 %v1550, %v1578
      %v1587 = vmul.f32 %v1551, %v1578
      %v1588 = vmul.f32 %v1552, %v1578
      %v1589 = vmul.f32 %v1553, %v1578
      %v1590 = vmul.f32 %v1554, %v1578
      %v1591 = vmul.f32 %v1555, %v1578
      %v1592 = vmul.f32 %v1556, %v1578
      %v1593 = vmul.f32 %v1557, %v1578
      %v1594 = vmul.f32 %v1558, %v1578
      %v1595 = vmul.f32 %v1559, %v1578
      %v1596 = vmul.f32 %v1560, %v1578
      %v1597 = vmul.f32 %v1561, %v1578
      %v1598 = vmul.f32 %v1562, %v1578
      %v1599 = vmul.f32 %v1563, %v1578
      %v1600 = vmul.f32 %v1564, %v1578
      %v1601 = vmul.f32 %v1565, %v1578
      %v1602 = vmul.f32 %v1566, %v1578
      %v1603 = vmul.f32 %v1567, %v1578
      %v1604 = vmul.f32 %v1568, %v1578
      %v1605 = vmul.f32 %v1569, %v1578
      %v1606 = vmul.f32 %v1570, %v1578
      %v1607 = vmul.f32 %v1571, %v1578
      %v1608 = vmul.f32 %v1572, %v1578
      %v1609 = vmul.f32 %v1573, %v1578
      %v1610 = vmul.f32 %v1574, %v1578
      %v1611 = vadd.f32 %v1510, %v1579
      %v1612 = vadd.f32 %v1511, %v1580
      %v1613 = vadd.f32 %v1512, %v1581
      %v1614 = vadd.f32 %v1513, %v1582
      %v1615 = vadd.f32 %v1514, %v1583
      %v1616 = vadd.f32 %v1515, %v1584
      %v1617 = vadd.f32 %v1516, %v1585
      %v1618 = vadd.f32 %v1517, %v1586
      %v1619 = vadd.f32 %v1518, %v1587
      %v1620 = vadd.f32 %v1519, %v1588
      %v1621 = vadd.f32 %v1520, %v1589
      %v1622 = vadd.f32 %v1521, %v1590
      %v1623 = vadd.f32 %v1522, %v1591
      %v1624 = vadd.f32 %v1523, %v1592
      %v1625 = vadd.f32 %v1524, %v1593
      %v1626 = vadd.f32 %v1525, %v1594
      %v1627 = vadd.f32 %v1526, %v1595
      %v1628 = vadd.f32 %v1527, %v1596
      %v1629 = vadd.f32 %v1528, %v1597
      %v1630 = vadd.f32 %v1529, %v1598
      %v1631 = vadd.f32 %v1530, %v1599
      %v1632 = vadd.f32 %v1531, %v1600
      %v1633 = vadd.f32 %v1532, %v1601
      %v1634 = vadd.f32 %v1533, %v1602
      %v1635 = vadd.f32 %v1534, %v1603
      %v1636 = vadd.f32 %v1535, %v1604
      %v1637 = vadd.f32 %v1536, %v1605
      %v1638 = vadd.f32 %v1537, %v1606
      %v1639 = vadd.f32 %v1538, %v1607
      %v1640 = vadd.f32 %v1539, %v1608
      %v1641 = vadd.f32 %v1540, %v1609
      %v1642 = vadd.f32 %v1541, %v1610
      %v1643 = vld [vmem:[%s4] sm:$0x1]
      %v1645 = vlaneseq
      %v1646 = vshrl.u32 %v1645, 7
      %v1647 = vsub.s32 0, %v1646
      %v1648 = vrot.slane %v1643, %v1647
      %v1650 = vadd.f32 %v1611, %v1648
      %v1651 = vadd.f32 %v1612, %v1648
      %v1652 = vadd.f32 %v1613, %v1648
      %v1653 = vadd.f32 %v1614, %v1648
      %v1654 = vadd.f32 %v1615, %v1648
      %v1655 = vadd.f32 %v1616, %v1648
      %v1656 = vadd.f32 %v1617, %v1648
      %v1657 = vadd.f32 %v1618, %v1648
      %v1658 = vadd.f32 %v1619, %v1648
      %v1659 = vadd.f32 %v1620, %v1648
      %v1660 = vadd.f32 %v1621, %v1648
      %v1661 = vadd.f32 %v1622, %v1648
      %v1662 = vadd.f32 %v1623, %v1648
      %v1663 = vadd.f32 %v1624, %v1648
      %v1664 = vadd.f32 %v1625, %v1648
      %v1665 = vadd.f32 %v1626, %v1648
      %v1666 = vadd.f32 %v1627, %v1648
      %v1667 = vadd.f32 %v1628, %v1648
      %v1668 = vadd.f32 %v1629, %v1648
      %v1669 = vadd.f32 %v1630, %v1648
      %v1670 = vadd.f32 %v1631, %v1648
      %v1671 = vadd.f32 %v1632, %v1648
      %v1672 = vadd.f32 %v1633, %v1648
      %v1673 = vadd.f32 %v1634, %v1648
      %v1674 = vadd.f32 %v1635, %v1648
      %v1675 = vadd.f32 %v1636, %v1648
      %v1676 = vadd.f32 %v1637, %v1648
      %v1677 = vadd.f32 %v1638, %v1648
      %v1678 = vadd.f32 %v1639, %v1648
      %v1679 = vadd.f32 %v1640, %v1648
      %v1680 = vadd.f32 %v1641, %v1648
      %v1681 = vadd.f32 %v1642, %v1648
      %v1682 = vmul.f32 %v1650, 0.5
      %v1683 = vmul.f32 %v1651, 0.5
      %v1684 = vmul.f32 %v1652, 0.5
      %v1685 = vmul.f32 %v1653, 0.5
      %v1686 = vmul.f32 %v1654, 0.5
      %v1687 = vmul.f32 %v1655, 0.5
      %v1688 = vmul.f32 %v1656, 0.5
      %v1689 = vmul.f32 %v1657, 0.5
      %v1690 = vmul.f32 %v1658, 0.5
      %v1691 = vmul.f32 %v1659, 0.5
      %v1692 = vmul.f32 %v1660, 0.5
      %v1693 = vmul.f32 %v1661, 0.5
      %v1694 = vmul.f32 %v1662, 0.5
      %v1695 = vmul.f32 %v1663, 0.5
      %v1696 = vmul.f32 %v1664, 0.5
      %v1697 = vmul.f32 %v1665, 0.5
      %v1698 = vmul.f32 %v1666, 0.5
      %v1699 = vmul.f32 %v1667, 0.5
      %v1700 = vmul.f32 %v1668, 0.5
      %v1701 = vmul.f32 %v1669, 0.5
      %v1702 = vmul.f32 %v1670, 0.5
      %v1703 = vmul.f32 %v1671, 0.5
      %v1704 = vmul.f32 %v1672, 0.5
      %v1705 = vmul.f32 %v1673, 0.5
      %v1706 = vmul.f32 %v1674, 0.5
      %v1707 = vmul.f32 %v1675, 0.5
      %v1708 = vmul.f32 %v1676, 0.5
      %v1709 = vmul.f32 %v1677, 0.5
      %v1710 = vmul.f32 %v1678, 0.5
      %v1711 = vmul.f32 %v1679, 0.5
      %v1712 = vmul.f32 %v1680, 0.5
      %v1713 = vmul.f32 %v1681, 0.5
      %v1714 = vmul.f32 %v1650, 0.70710677
      %v1715 = vmul.f32 %v1651, 0.70710677
      %v1716 = vmul.f32 %v1652, 0.70710677
      %v1717 = vmul.f32 %v1653, 0.70710677
      %v1718 = vmul.f32 %v1654, 0.70710677
      %v1719 = vmul.f32 %v1655, 0.70710677
      %v1720 = vmul.f32 %v1656, 0.70710677
      %v1721 = vmul.f32 %v1657, 0.70710677
      %v1722 = vmul.f32 %v1658, 0.70710677
      %v1723 = vmul.f32 %v1659, 0.70710677
      %v1724 = vmul.f32 %v1660, 0.70710677
      %v1725 = vmul.f32 %v1661, 0.70710677
      %v1726 = vmul.f32 %v1662, 0.70710677
      %v1727 = vmul.f32 %v1663, 0.70710677
      %v1728 = vmul.f32 %v1664, 0.70710677
      %v1729 = vmul.f32 %v1665, 0.70710677
      %v1730 = vmul.f32 %v1666, 0.70710677
      %v1731 = vmul.f32 %v1667, 0.70710677
      %v1732 = vmul.f32 %v1668, 0.70710677
      %v1733 = vmul.f32 %v1669, 0.70710677
      %v1734 = vmul.f32 %v1670, 0.70710677
      %v1735 = vmul.f32 %v1671, 0.70710677
      %v1736 = vmul.f32 %v1672, 0.70710677
      %v1737 = vmul.f32 %v1673, 0.70710677
      %v1738 = vmul.f32 %v1674, 0.70710677
      %v1739 = vmul.f32 %v1675, 0.70710677
      %v1740 = vmul.f32 %v1676, 0.70710677
      %v1741 = vmul.f32 %v1677, 0.70710677
      %v1742 = vmul.f32 %v1678, 0.70710677
      %v1743 = vmul.f32 %v1679, 0.70710677
      %v1744 = vmul.f32 %v1680, 0.70710677
      %v1745 = vmul.f32 %v1681, 0.70710677
      %v1746 = vand.u32 2147483647, %v1714
      %v1747 = vand.u32 2147483647, %v1715
      %v1748 = vand.u32 2147483647, %v1716
      %v1749 = vand.u32 2147483647, %v1717
      %v1750 = vand.u32 2147483647, %v1718
      %v1751 = vand.u32 2147483647, %v1719
      %v1752 = vand.u32 2147483647, %v1720
      %v1753 = vand.u32 2147483647, %v1721
      %v1754 = vand.u32 2147483647, %v1722
      %v1755 = vand.u32 2147483647, %v1723
      %v1756 = vand.u32 2147483647, %v1724
      %v1757 = vand.u32 2147483647, %v1725
      %v1758 = vand.u32 2147483647, %v1726
      %v1759 = vand.u32 2147483647, %v1727
      %v1760 = vand.u32 2147483647, %v1728
      %v1761 = vand.u32 2147483647, %v1729
      %v1762 = vand.u32 2147483647, %v1730
      %v1763 = vand.u32 2147483647, %v1731
      %v1764 = vand.u32 2147483647, %v1732
      %v1765 = vand.u32 2147483647, %v1733
      %v1766 = vand.u32 2147483647, %v1734
      %v1767 = vand.u32 2147483647, %v1735
      %v1768 = vand.u32 2147483647, %v1736
      %v1769 = vand.u32 2147483647, %v1737
      %v1770 = vand.u32 2147483647, %v1738
      %v1771 = vand.u32 2147483647, %v1739
      %v1772 = vand.u32 2147483647, %v1740
      %v1773 = vand.u32 2147483647, %v1741
      %v1774 = vand.u32 2147483647, %v1742
      %v1775 = vand.u32 2147483647, %v1743
      %v1776 = vand.u32 2147483647, %v1744
      %v1777 = vand.u32 2147483647, %v1745
      %v1778 = vmul.f32 %v1746, 0.3275911
      %v1779 = vmul.f32 %v1747, 0.3275911
      %v1780 = vmul.f32 %v1748, 0.3275911
      %v1781 = vmul.f32 %v1749, 0.3275911
      %v1782 = vmul.f32 %v1750, 0.3275911
      %v1783 = vmul.f32 %v1751, 0.3275911
      %v1784 = vmul.f32 %v1752, 0.3275911
      %v1785 = vmul.f32 %v1753, 0.3275911
      %v1786 = vmul.f32 %v1754, 0.3275911
      %v1787 = vmul.f32 %v1755, 0.3275911
      %v1788 = vmul.f32 %v1756, 0.3275911
      %v1789 = vmul.f32 %v1757, 0.3275911
      %v1790 = vmul.f32 %v1758, 0.3275911
      %v1791 = vmul.f32 %v1759, 0.3275911
      %v1792 = vmul.f32 %v1760, 0.3275911
      %v1793 = vmul.f32 %v1761, 0.3275911
      %v1794 = vmul.f32 %v1762, 0.3275911
      %v1795 = vmul.f32 %v1763, 0.3275911
      %v1796 = vmul.f32 %v1764, 0.3275911
      %v1797 = vmul.f32 %v1765, 0.3275911
      %v1798 = vmul.f32 %v1766, 0.3275911
      %v1799 = vmul.f32 %v1767, 0.3275911
      %v1800 = vmul.f32 %v1768, 0.3275911
      %v1801 = vmul.f32 %v1769, 0.3275911
      %v1802 = vmul.f32 %v1770, 0.3275911
      %v1803 = vmul.f32 %v1771, 0.3275911
      %v1804 = vmul.f32 %v1772, 0.3275911
      %v1805 = vmul.f32 %v1773, 0.3275911
      %v1806 = vmul.f32 %v1774, 0.3275911
      %v1807 = vmul.f32 %v1775, 0.3275911
      %v1808 = vmul.f32 %v1776, 0.3275911
      %v1809 = vmul.f32 %v1777, 0.3275911
      %v1810 = vadd.f32 %v1778, 1.0
      %v1811 = vadd.f32 %v1779, 1.0
      %v1812 = vadd.f32 %v1780, 1.0
      %v1813 = vadd.f32 %v1781, 1.0
      %v1814 = vadd.f32 %v1782, 1.0
      %v1815 = vadd.f32 %v1783, 1.0
      %v1816 = vadd.f32 %v1784, 1.0
      %v1817 = vadd.f32 %v1785, 1.0
      %v1818 = vadd.f32 %v1786, 1.0
      %v1819 = vadd.f32 %v1787, 1.0
      %v1820 = vadd.f32 %v1788, 1.0
      %v1821 = vadd.f32 %v1789, 1.0
      %v1822 = vadd.f32 %v1790, 1.0
      %v1823 = vadd.f32 %v1791, 1.0
      %v1824 = vadd.f32 %v1792, 1.0
      %v1825 = vadd.f32 %v1793, 1.0
      %v1826 = vadd.f32 %v1794, 1.0
      %v1827 = vadd.f32 %v1795, 1.0
      %v1828 = vadd.f32 %v1796, 1.0
      %v1829 = vadd.f32 %v1797, 1.0
      %v1830 = vadd.f32 %v1798, 1.0
      %v1831 = vadd.f32 %v1799, 1.0
      %v1832 = vadd.f32 %v1800, 1.0
      %v1833 = vadd.f32 %v1801, 1.0
      %v1834 = vadd.f32 %v1802, 1.0
      %v1835 = vadd.f32 %v1803, 1.0
      %v1836 = vadd.f32 %v1804, 1.0
      %v1837 = vadd.f32 %v1805, 1.0
      %v1838 = vadd.f32 %v1806, 1.0
      %v1839 = vadd.f32 %v1807, 1.0
      %v1840 = vadd.f32 %v1808, 1.0
      %v1841 = vadd.f32 %v1809, 1.0
      %v1842 = vrcp.pop %v1810
      %v1843 = vmul.f32 1.0, %v1842
      %v1844 = vrcp.pop %v1811
      %v1845 = vmul.f32 1.0, %v1844
      %v1846 = vrcp.pop %v1812
      %v1847 = vmul.f32 1.0, %v1846
      %v1848 = vrcp.pop %v1813
      %v1849 = vmul.f32 1.0, %v1848
      %v1850 = vrcp.pop %v1814
      %v1851 = vmul.f32 1.0, %v1850
      %v1852 = vrcp.pop %v1815
      %v1853 = vmul.f32 1.0, %v1852
      %v1854 = vrcp.pop %v1816
      %v1855 = vmul.f32 1.0, %v1854
      %v1856 = vrcp.pop %v1817
      %v1857 = vmul.f32 1.0, %v1856
      %v1858 = vrcp.pop %v1818
      %v1859 = vmul.f32 1.0, %v1858
      %v1860 = vrcp.pop %v1819
      %v1861 = vmul.f32 1.0, %v1860
      %v1862 = vrcp.pop %v1820
      %v1863 = vmul.f32 1.0, %v1862
      %v1864 = vrcp.pop %v1821
      %v1865 = vmul.f32 1.0, %v1864
      %v1866 = vrcp.pop %v1822
      %v1867 = vmul.f32 1.0, %v1866
      %v1868 = vrcp.pop %v1823
      %v1869 = vmul.f32 1.0, %v1868
      %v1870 = vrcp.pop %v1824
      %v1871 = vmul.f32 1.0, %v1870
      %v1872 = vrcp.pop %v1825
      %v1873 = vmul.f32 1.0, %v1872
      %v1874 = vrcp.pop %v1826
      %v1875 = vmul.f32 1.0, %v1874
      %v1876 = vrcp.pop %v1827
      %v1877 = vmul.f32 1.0, %v1876
      %v1878 = vrcp.pop %v1828
      %v1879 = vmul.f32 1.0, %v1878
      %v1880 = vrcp.pop %v1829
      %v1881 = vmul.f32 1.0, %v1880
      %v1882 = vrcp.pop %v1830
      %v1883 = vmul.f32 1.0, %v1882
      %v1884 = vrcp.pop %v1831
      %v1885 = vmul.f32 1.0, %v1884
      %v1886 = vrcp.pop %v1832
      %v1887 = vmul.f32 1.0, %v1886
      %v1888 = vrcp.pop %v1833
      %v1889 = vmul.f32 1.0, %v1888
      %v1890 = vrcp.pop %v1834
      %v1891 = vmul.f32 1.0, %v1890
      %v1892 = vrcp.pop %v1835
      %v1893 = vmul.f32 1.0, %v1892
      %v1894 = vrcp.pop %v1836
      %v1895 = vmul.f32 1.0, %v1894
      %v1896 = vrcp.pop %v1837
      %v1897 = vmul.f32 1.0, %v1896
      %v1898 = vrcp.pop %v1838
      %v1899 = vmul.f32 1.0, %v1898
      %v1900 = vrcp.pop %v1839
      %v1901 = vmul.f32 1.0, %v1900
      %v1902 = vrcp.pop %v1840
      %v1903 = vmul.f32 1.0, %v1902
      %v1904 = vrcp.pop %v1841
      %v1905 = vmul.f32 1.0, %v1904
      %v1906 = vmul.f32 %v1843, 1.0614054
      %v1907 = vmul.f32 %v1845, 1.0614054
      %v1908 = vmul.f32 %v1847, 1.0614054
      %v1909 = vmul.f32 %v1849, 1.0614054
      %v1910 = vmul.f32 %v1851, 1.0614054
      %v1911 = vmul.f32 %v1853, 1.0614054
      %v1912 = vmul.f32 %v1855, 1.0614054
      %v1913 = vmul.f32 %v1857, 1.0614054
      %v1914 = vmul.f32 %v1859, 1.0614054
      %v1915 = vmul.f32 %v1861, 1.0614054
      %v1916 = vmul.f32 %v1863, 1.0614054
      %v1917 = vmul.f32 %v1865, 1.0614054
      %v1918 = vmul.f32 %v1867, 1.0614054
      %v1919 = vmul.f32 %v1869, 1.0614054
      %v1920 = vmul.f32 %v1871, 1.0614054
      %v1921 = vmul.f32 %v1873, 1.0614054
      %v1922 = vmul.f32 %v1875, 1.0614054
      %v1923 = vmul.f32 %v1877, 1.0614054
      %v1924 = vmul.f32 %v1879, 1.0614054
      %v1925 = vmul.f32 %v1881, 1.0614054
      %v1926 = vmul.f32 %v1883, 1.0614054
      %v1927 = vmul.f32 %v1885, 1.0614054
      %v1928 = vmul.f32 %v1887, 1.0614054
      %v1929 = vmul.f32 %v1889, 1.0614054
      %v1930 = vmul.f32 %v1891, 1.0614054
      %v1931 = vmul.f32 %v1893, 1.0614054
      %v1932 = vmul.f32 %v1895, 1.0614054
      %v1933 = vmul.f32 %v1897, 1.0614054
      %v1934 = vmul.f32 %v1899, 1.0614054
      %v1935 = vmul.f32 %v1901, 1.0614054
      %v1936 = vmul.f32 %v1903, 1.0614054
      %v1937 = vmul.f32 %v1905, 1.0614054
      %v1938 = vadd.f32 %v1906, -1.4531521
      %v1939 = vadd.f32 %v1907, -1.4531521
      %v1940 = vadd.f32 %v1908, -1.4531521
      %v1941 = vadd.f32 %v1909, -1.4531521
      %v1942 = vadd.f32 %v1910, -1.4531521
      %v1943 = vadd.f32 %v1911, -1.4531521
      %v1944 = vadd.f32 %v1912, -1.4531521
      %v1945 = vadd.f32 %v1913, -1.4531521
      %v1946 = vadd.f32 %v1914, -1.4531521
      %v1947 = vadd.f32 %v1915, -1.4531521
      %v1948 = vadd.f32 %v1916, -1.4531521
      %v1949 = vadd.f32 %v1917, -1.4531521
      %v1950 = vadd.f32 %v1918, -1.4531521
      %v1951 = vadd.f32 %v1919, -1.4531521
      %v1952 = vadd.f32 %v1920, -1.4531521
      %v1953 = vadd.f32 %v1921, -1.4531521
      %v1954 = vadd.f32 %v1922, -1.4531521
      %v1955 = vadd.f32 %v1923, -1.4531521
      %v1956 = vadd.f32 %v1924, -1.4531521
      %v1957 = vadd.f32 %v1925, -1.4531521
      %v1958 = vadd.f32 %v1926, -1.4531521
      %v1959 = vadd.f32 %v1927, -1.4531521
      %v1960 = vadd.f32 %v1928, -1.4531521
      %v1961 = vadd.f32 %v1929, -1.4531521
      %v1962 = vadd.f32 %v1930, -1.4531521
      %v1963 = vadd.f32 %v1931, -1.4531521
      %v1964 = vadd.f32 %v1932, -1.4531521
      %v1965 = vadd.f32 %v1933, -1.4531521
      %v1966 = vadd.f32 %v1934, -1.4531521
      %v1967 = vadd.f32 %v1935, -1.4531521
      %v1968 = vadd.f32 %v1936, -1.4531521
      %v1969 = vadd.f32 %v1937, -1.4531521
      %v1970 = vmul.f32 %v1843, %v1938
      %v1971 = vmul.f32 %v1845, %v1939
      %v1972 = vmul.f32 %v1847, %v1940
      %v1973 = vmul.f32 %v1849, %v1941
      %v1974 = vmul.f32 %v1851, %v1942
      %v1975 = vmul.f32 %v1853, %v1943
      %v1976 = vmul.f32 %v1855, %v1944
      %v1977 = vmul.f32 %v1857, %v1945
      %v1978 = vmul.f32 %v1859, %v1946
      %v1979 = vmul.f32 %v1861, %v1947
      %v1980 = vmul.f32 %v1863, %v1948
      %v1981 = vmul.f32 %v1865, %v1949
      %v1982 = vmul.f32 %v1867, %v1950
      %v1983 = vmul.f32 %v1869, %v1951
      %v1984 = vmul.f32 %v1871, %v1952
      %v1985 = vmul.f32 %v1873, %v1953
      %v1986 = vmul.f32 %v1875, %v1954
      %v1987 = vmul.f32 %v1877, %v1955
      %v1988 = vmul.f32 %v1879, %v1956
      %v1989 = vmul.f32 %v1881, %v1957
      %v1990 = vmul.f32 %v1883, %v1958
      %v1991 = vmul.f32 %v1885, %v1959
      %v1992 = vmul.f32 %v1887, %v1960
      %v1993 = vmul.f32 %v1889, %v1961
      %v1994 = vmul.f32 %v1891, %v1962
      %v1995 = vmul.f32 %v1893, %v1963
      %v1996 = vmul.f32 %v1895, %v1964
      %v1997 = vmul.f32 %v1897, %v1965
      %v1998 = vmul.f32 %v1899, %v1966
      %v1999 = vmul.f32 %v1901, %v1967
      %v2000 = vmul.f32 %v1903, %v1968
      %v2001 = vmul.f32 %v1905, %v1969
      %v2002 = vadd.f32 %v1970, 1.4214138
      %v2003 = vadd.f32 %v1971, 1.4214138
      %v2004 = vadd.f32 %v1972, 1.4214138
      %v2005 = vadd.f32 %v1973, 1.4214138
      %v2006 = vadd.f32 %v1974, 1.4214138
      %v2007 = vadd.f32 %v1975, 1.4214138
      %v2008 = vadd.f32 %v1976, 1.4214138
      %v2009 = vadd.f32 %v1977, 1.4214138
      %v2010 = vadd.f32 %v1978, 1.4214138
      %v2011 = vadd.f32 %v1979, 1.4214138
      %v2012 = vadd.f32 %v1980, 1.4214138
      %v2013 = vadd.f32 %v1981, 1.4214138
      %v2014 = vadd.f32 %v1982, 1.4214138
      %v2015 = vadd.f32 %v1983, 1.4214138
      %v2016 = vadd.f32 %v1984, 1.4214138
      %v2017 = vadd.f32 %v1985, 1.4214138
      %v2018 = vadd.f32 %v1986, 1.4214138
      %v2019 = vadd.f32 %v1987, 1.4214138
      %v2020 = vadd.f32 %v1988, 1.4214138
      %v2021 = vadd.f32 %v1989, 1.4214138
      %v2022 = vadd.f32 %v1990, 1.4214138
      %v2023 = vadd.f32 %v1991, 1.4214138
      %v2024 = vadd.f32 %v1992, 1.4214138
      %v2025 = vadd.f32 %v1993, 1.4214138
      %v2026 = vadd.f32 %v1994, 1.4214138
      %v2027 = vadd.f32 %v1995, 1.4214138
      %v2028 = vadd.f32 %v1996, 1.4214138
      %v2029 = vadd.f32 %v1997, 1.4214138
      %v2030 = vadd.f32 %v1998, 1.4214138
      %v2031 = vadd.f32 %v1999, 1.4214138
      %v2032 = vadd.f32 %v2000, 1.4214138
      %v2033 = vadd.f32 %v2001, 1.4214138
      %v2034 = vmul.f32 %v1843, %v2002
      %v2035 = vmul.f32 %v1845, %v2003
      %v2036 = vmul.f32 %v1847, %v2004
      %v2037 = vmul.f32 %v1849, %v2005
      %v2038 = vmul.f32 %v1851, %v2006
      %v2039 = vmul.f32 %v1853, %v2007
      %v2040 = vmul.f32 %v1855, %v2008
      %v2041 = vmul.f32 %v1857, %v2009
      %v2042 = vmul.f32 %v1859, %v2010
      %v2043 = vmul.f32 %v1861, %v2011
      %v2044 = vmul.f32 %v1863, %v2012
      %v2045 = vmul.f32 %v1865, %v2013
      %v2046 = vmul.f32 %v1867, %v2014
      %v2047 = vmul.f32 %v1869, %v2015
      %v2048 = vmul.f32 %v1871, %v2016
      %v2049 = vmul.f32 %v1873, %v2017
      %v2050 = vmul.f32 %v1875, %v2018
      %v2051 = vmul.f32 %v1877, %v2019
      %v2052 = vmul.f32 %v1879, %v2020
      %v2053 = vmul.f32 %v1881, %v2021
      %v2054 = vmul.f32 %v1883, %v2022
      %v2055 = vmul.f32 %v1885, %v2023
      %v2056 = vmul.f32 %v1887, %v2024
      %v2057 = vmul.f32 %v1889, %v2025
      %v2058 = vmul.f32 %v1891, %v2026
      %v2059 = vmul.f32 %v1893, %v2027
      %v2060 = vmul.f32 %v1895, %v2028
      %v2061 = vmul.f32 %v1897, %v2029
      %v2062 = vmul.f32 %v1899, %v2030
      %v2063 = vmul.f32 %v1901, %v2031
      %v2064 = vmul.f32 %v1903, %v2032
      %v2065 = vmul.f32 %v1905, %v2033
      %v2066 = vadd.f32 %v2034, -0.28449672
      %v2067 = vadd.f32 %v2035, -0.28449672
      %v2068 = vadd.f32 %v2036, -0.28449672
      %v2069 = vadd.f32 %v2037, -0.28449672
      %v2070 = vadd.f32 %v2038, -0.28449672
      %v2071 = vadd.f32 %v2039, -0.28449672
      %v2072 = vadd.f32 %v2040, -0.28449672
      %v2073 = vadd.f32 %v2041, -0.28449672
      %v2074 = vadd.f32 %v2042, -0.28449672
      %v2075 = vadd.f32 %v2043, -0.28449672
      %v2076 = vadd.f32 %v2044, -0.28449672
      %v2077 = vadd.f32 %v2045, -0.28449672
      %v2078 = vadd.f32 %v2046, -0.28449672
      %v2079 = vadd.f32 %v2047, -0.28449672
      %v2080 = vadd.f32 %v2048, -0.28449672
      %v2081 = vadd.f32 %v2049, -0.28449672
      %v2082 = vadd.f32 %v2050, -0.28449672
      %v2083 = vadd.f32 %v2051, -0.28449672
      %v2084 = vadd.f32 %v2052, -0.28449672
      %v2085 = vadd.f32 %v2053, -0.28449672
      %v2086 = vadd.f32 %v2054, -0.28449672
      %v2087 = vadd.f32 %v2055, -0.28449672
      %v2088 = vadd.f32 %v2056, -0.28449672
      %v2089 = vadd.f32 %v2057, -0.28449672
      %v2090 = vadd.f32 %v2058, -0.28449672
      %v2091 = vadd.f32 %v2059, -0.28449672
      %v2092 = vadd.f32 %v2060, -0.28449672
      %v2093 = vadd.f32 %v2061, -0.28449672
      %v2094 = vadd.f32 %v2062, -0.28449672
      %v2095 = vadd.f32 %v2063, -0.28449672
      %v2096 = vadd.f32 %v2064, -0.28449672
      %v2097 = vadd.f32 %v2065, -0.28449672
      %v2098 = vmul.f32 %v1843, %v2066
      %v2099 = vmul.f32 %v1845, %v2067
      %v2100 = vmul.f32 %v1847, %v2068
      %v2101 = vmul.f32 %v1849, %v2069
      %v2102 = vmul.f32 %v1851, %v2070
      %v2103 = vmul.f32 %v1853, %v2071
      %v2104 = vmul.f32 %v1855, %v2072
      %v2105 = vmul.f32 %v1857, %v2073
      %v2106 = vmul.f32 %v1859, %v2074
      %v2107 = vmul.f32 %v1861, %v2075
      %v2108 = vmul.f32 %v1863, %v2076
      %v2109 = vmul.f32 %v1865, %v2077
      %v2110 = vmul.f32 %v1867, %v2078
      %v2111 = vmul.f32 %v1869, %v2079
      %v2112 = vmul.f32 %v1871, %v2080
      %v2113 = vmul.f32 %v1873, %v2081
      %v2114 = vmul.f32 %v1875, %v2082
      %v2115 = vmul.f32 %v1877, %v2083
      %v2116 = vmul.f32 %v1879, %v2084
      %v2117 = vmul.f32 %v1881, %v2085
      %v2118 = vmul.f32 %v1883, %v2086
      %v2119 = vmul.f32 %v1885, %v2087
      %v2120 = vmul.f32 %v1887, %v2088
      %v2121 = vmul.f32 %v1889, %v2089
      %v2122 = vmul.f32 %v1891, %v2090
      %v2123 = vmul.f32 %v1893, %v2091
      %v2124 = vmul.f32 %v1895, %v2092
      %v2125 = vmul.f32 %v1897, %v2093
      %v2126 = vmul.f32 %v1899, %v2094
      %v2127 = vmul.f32 %v1901, %v2095
      %v2128 = vmul.f32 %v1903, %v2096
      %v2129 = vmul.f32 %v1905, %v2097
      %v2130 = vadd.f32 %v2098, 0.2548296
      %v2131 = vadd.f32 %v2099, 0.2548296
      %v2132 = vadd.f32 %v2100, 0.2548296
      %v2133 = vadd.f32 %v2101, 0.2548296
      %v2134 = vadd.f32 %v2102, 0.2548296
      %v2135 = vadd.f32 %v2103, 0.2548296
      %v2136 = vadd.f32 %v2104, 0.2548296
      %v2137 = vadd.f32 %v2105, 0.2548296
      %v2138 = vadd.f32 %v2106, 0.2548296
      %v2139 = vadd.f32 %v2107, 0.2548296
      %v2140 = vadd.f32 %v2108, 0.2548296
      %v2141 = vadd.f32 %v2109, 0.2548296
      %v2142 = vadd.f32 %v2110, 0.2548296
      %v2143 = vadd.f32 %v2111, 0.2548296
      %v2144 = vadd.f32 %v2112, 0.2548296
      %v2145 = vadd.f32 %v2113, 0.2548296
      %v2146 = vadd.f32 %v2114, 0.2548296
      %v2147 = vadd.f32 %v2115, 0.2548296
      %v2148 = vadd.f32 %v2116, 0.2548296
      %v2149 = vadd.f32 %v2117, 0.2548296
      %v2150 = vadd.f32 %v2118, 0.2548296
      %v2151 = vadd.f32 %v2119, 0.2548296
      %v2152 = vadd.f32 %v2120, 0.2548296
      %v2153 = vadd.f32 %v2121, 0.2548296
      %v2154 = vadd.f32 %v2122, 0.2548296
      %v2155 = vadd.f32 %v2123, 0.2548296
      %v2156 = vadd.f32 %v2124, 0.2548296
      %v2157 = vadd.f32 %v2125, 0.2548296
      %v2158 = vadd.f32 %v2126, 0.2548296
      %v2159 = vadd.f32 %v2127, 0.2548296
      %v2160 = vadd.f32 %v2128, 0.2548296
      %v2161 = vadd.f32 %v2129, 0.2548296
      %v2162 = vmul.f32 %v1843, %v2130
      %v2163 = vmul.f32 %v1845, %v2131
      %v2164 = vmul.f32 %v1847, %v2132
      %v2165 = vmul.f32 %v1849, %v2133
      %v2166 = vmul.f32 %v1851, %v2134
      %v2167 = vmul.f32 %v1853, %v2135
      %v2168 = vmul.f32 %v1855, %v2136
      %v2169 = vmul.f32 %v1857, %v2137
      %v2170 = vmul.f32 %v1859, %v2138
      %v2171 = vmul.f32 %v1861, %v2139
      %v2172 = vmul.f32 %v1863, %v2140
      %v2173 = vmul.f32 %v1865, %v2141
      %v2174 = vmul.f32 %v1867, %v2142
      %v2175 = vmul.f32 %v1869, %v2143
      %v2176 = vmul.f32 %v1871, %v2144
      %v2177 = vmul.f32 %v1873, %v2145
      %v2178 = vmul.f32 %v1875, %v2146
      %v2179 = vmul.f32 %v1877, %v2147
      %v2180 = vmul.f32 %v1879, %v2148
      %v2181 = vmul.f32 %v1881, %v2149
      %v2182 = vmul.f32 %v1883, %v2150
      %v2183 = vmul.f32 %v1885, %v2151
      %v2184 = vmul.f32 %v1887, %v2152
      %v2185 = vmul.f32 %v1889, %v2153
      %v2186 = vmul.f32 %v1891, %v2154
      %v2187 = vmul.f32 %v1893, %v2155
      %v2188 = vmul.f32 %v1895, %v2156
      %v2189 = vmul.f32 %v1897, %v2157
      %v2190 = vmul.f32 %v1899, %v2158
      %v2191 = vmul.f32 %v1901, %v2159
      %v2192 = vmul.f32 %v1903, %v2160
      %v2193 = vmul.f32 %v1905, %v2161
      %v2194 = vmul.f32 %v1746, %v1746
      %v2195 = vmul.f32 %v1747, %v1747
      %v2196 = vmul.f32 %v1748, %v1748
      %v2197 = vmul.f32 %v1749, %v1749
      %v2198 = vmul.f32 %v1750, %v1750
      %v2199 = vmul.f32 %v1751, %v1751
      %v2200 = vmul.f32 %v1752, %v1752
      %v2201 = vmul.f32 %v1753, %v1753
      %v2202 = vmul.f32 %v1754, %v1754
      %v2203 = vmul.f32 %v1755, %v1755
      %v2204 = vmul.f32 %v1756, %v1756
      %v2205 = vmul.f32 %v1757, %v1757
      %v2206 = vmul.f32 %v1758, %v1758
      %v2207 = vmul.f32 %v1759, %v1759
      %v2208 = vmul.f32 %v1760, %v1760
      %v2209 = vmul.f32 %v1761, %v1761
      %v2210 = vmul.f32 %v1762, %v1762
      %v2211 = vmul.f32 %v1763, %v1763
      %v2212 = vmul.f32 %v1764, %v1764
      %v2213 = vmul.f32 %v1765, %v1765
      %v2214 = vmul.f32 %v1766, %v1766
      %v2215 = vmul.f32 %v1767, %v1767
      %v2216 = vmul.f32 %v1768, %v1768
      %v2217 = vmul.f32 %v1769, %v1769
      %v2218 = vmul.f32 %v1770, %v1770
      %v2219 = vmul.f32 %v1771, %v1771
      %v2220 = vmul.f32 %v1772, %v1772
      %v2221 = vmul.f32 %v1773, %v1773
      %v2222 = vmul.f32 %v1774, %v1774
      %v2223 = vmul.f32 %v1775, %v1775
      %v2224 = vmul.f32 %v1776, %v1776
      %v2225 = vmul.f32 %v1777, %v1777
      %v2226 = vsub.f32 0.0, %v2194
      %v2227 = vsub.f32 0.0, %v2195
      %v2228 = vsub.f32 0.0, %v2196
      %v2229 = vsub.f32 0.0, %v2197
      %v2230 = vsub.f32 0.0, %v2198
      %v2231 = vsub.f32 0.0, %v2199
      %v2232 = vsub.f32 0.0, %v2200
      %v2233 = vsub.f32 0.0, %v2201
      %v2234 = vsub.f32 0.0, %v2202
      %v2235 = vsub.f32 0.0, %v2203
      %v2236 = vsub.f32 0.0, %v2204
      %v2237 = vsub.f32 0.0, %v2205
      %v2238 = vsub.f32 0.0, %v2206
      %v2239 = vsub.f32 0.0, %v2207
      %v2240 = vsub.f32 0.0, %v2208
      %v2241 = vsub.f32 0.0, %v2209
      %v2242 = vsub.f32 0.0, %v2210
      %v2243 = vsub.f32 0.0, %v2211
      %v2244 = vsub.f32 0.0, %v2212
      %v2245 = vsub.f32 0.0, %v2213
      %v2246 = vsub.f32 0.0, %v2214
      %v2247 = vsub.f32 0.0, %v2215
      %v2248 = vsub.f32 0.0, %v2216
      %v2249 = vsub.f32 0.0, %v2217
      %v2250 = vsub.f32 0.0, %v2218
      %v2251 = vsub.f32 0.0, %v2219
      %v2252 = vsub.f32 0.0, %v2220
      %v2253 = vsub.f32 0.0, %v2221
      %v2254 = vsub.f32 0.0, %v2222
      %v2255 = vsub.f32 0.0, %v2223
      %v2256 = vsub.f32 0.0, %v2224
      %v2257 = vsub.f32 0.0, %v2225
      %v2258 = vmul.f32 %v2226, 1.442695
      %v2259 = vpow.pop %v2258
      %v2260 = vmul.f32 %v2227, 1.442695
      %v2261 = vpow.pop %v2260
      %v2262 = vmul.f32 %v2228, 1.442695
      %v2263 = vpow.pop %v2262
      %v2264 = vmul.f32 %v2229, 1.442695
      %v2265 = vpow.pop %v2264
      %v2266 = vmul.f32 %v2230, 1.442695
      %v2267 = vpow.pop %v2266
      %v2268 = vmul.f32 %v2231, 1.442695
      %v2269 = vpow.pop %v2268
      %v2270 = vmul.f32 %v2232, 1.442695
      %v2271 = vpow.pop %v2270
      %v2272 = vmul.f32 %v2233, 1.442695
      %v2273 = vpow.pop %v2272
      %v2274 = vmul.f32 %v2234, 1.442695
      %v2275 = vpow.pop %v2274
      %v2276 = vmul.f32 %v2235, 1.442695
      %v2277 = vpow.pop %v2276
      %v2278 = vmul.f32 %v2236, 1.442695
      %v2279 = vpow.pop %v2278
      %v2280 = vmul.f32 %v2237, 1.442695
      %v2281 = vpow.pop %v2280
      %v2282 = vmul.f32 %v2238, 1.442695
      %v2283 = vpow.pop %v2282
      %v2284 = vmul.f32 %v2239, 1.442695
      %v2285 = vpow.pop %v2284
      %v2286 = vmul.f32 %v2240, 1.442695
      %v2287 = vpow.pop %v2286
      %v2288 = vmul.f32 %v2241, 1.442695
      %v2289 = vpow.pop %v2288
      %v2290 = vmul.f32 %v2242, 1.442695
      %v2291 = vpow.pop %v2290
      %v2292 = vmul.f32 %v2243, 1.442695
      %v2293 = vpow.pop %v2292
      %v2294 = vmul.f32 %v2244, 1.442695
      %v2295 = vpow.pop %v2294
      %v2296 = vmul.f32 %v2245, 1.442695
      %v2297 = vpow.pop %v2296
      %v2298 = vmul.f32 %v2246, 1.442695
      %v2299 = vpow.pop %v2298
      %v2300 = vmul.f32 %v2247, 1.442695
      %v2301 = vpow.pop %v2300
      %v2302 = vmul.f32 %v2248, 1.442695
      %v2303 = vpow.pop %v2302
      %v2304 = vmul.f32 %v2249, 1.442695
      %v2305 = vpow.pop %v2304
      %v2306 = vmul.f32 %v2250, 1.442695
      %v2307 = vpow.pop %v2306
      %v2308 = vmul.f32 %v2251, 1.442695
      %v2309 = vpow.pop %v2308
      %v2310 = vmul.f32 %v2252, 1.442695
      %v2311 = vpow.pop %v2310
      %v2312 = vmul.f32 %v2253, 1.442695
      %v2313 = vpow.pop %v2312
      %v2314 = vmul.f32 %v2254, 1.442695
      %v2315 = vpow.pop %v2314
      %v2316 = vmul.f32 %v2255, 1.442695
      %v2317 = vpow.pop %v2316
      %v2318 = vmul.f32 %v2256, 1.442695
      %v2319 = vpow.pop %v2318
      %v2320 = vmul.f32 %v2257, 1.442695
      %v2321 = vpow.pop %v2320
      %v2322 = vmul.f32 %v2162, %v2259
      %v2323 = vmul.f32 %v2163, %v2261
      %v2324 = vmul.f32 %v2164, %v2263
      %v2325 = vmul.f32 %v2165, %v2265
      %v2326 = vmul.f32 %v2166, %v2267
      %v2327 = vmul.f32 %v2167, %v2269
      %v2328 = vmul.f32 %v2168, %v2271
      %v2329 = vmul.f32 %v2169, %v2273
      %v2330 = vmul.f32 %v2170, %v2275
      %v2331 = vmul.f32 %v2171, %v2277
      %v2332 = vmul.f32 %v2172, %v2279
      %v2333 = vmul.f32 %v2173, %v2281
      %v2334 = vmul.f32 %v2174, %v2283
      %v2335 = vmul.f32 %v2175, %v2285
      %v2336 = vmul.f32 %v2176, %v2287
      %v2337 = vmul.f32 %v2177, %v2289
      %v2338 = vmul.f32 %v2178, %v2291
      %v2339 = vmul.f32 %v2179, %v2293
      %v2340 = vmul.f32 %v2180, %v2295
      %v2341 = vmul.f32 %v2181, %v2297
      %v2342 = vmul.f32 %v2182, %v2299
      %v2343 = vmul.f32 %v2183, %v2301
      %v2344 = vmul.f32 %v2184, %v2303
      %v2345 = vmul.f32 %v2185, %v2305
      %v2346 = vmul.f32 %v2186, %v2307
      %v2347 = vmul.f32 %v2187, %v2309
      %v2348 = vmul.f32 %v2188, %v2311
      %v2349 = vmul.f32 %v2189, %v2313
      %v2350 = vmul.f32 %v2190, %v2315
      %v2351 = vmul.f32 %v2191, %v2317
      %v2352 = vmul.f32 %v2192, %v2319
      %v2353 = vmul.f32 %v2193, %v2321
      %v2354 = vsub.f32 1.0, %v2322
      %v2355 = vsub.f32 1.0, %v2323
      %v2356 = vsub.f32 1.0, %v2324
      %v2357 = vsub.f32 1.0, %v2325
      %v2358 = vsub.f32 1.0, %v2326
      %v2359 = vsub.f32 1.0, %v2327
      %v2360 = vsub.f32 1.0, %v2328
      %v2361 = vsub.f32 1.0, %v2329
      %v2362 = vsub.f32 1.0, %v2330
      %v2363 = vsub.f32 1.0, %v2331
      %v2364 = vsub.f32 1.0, %v2332
      %v2365 = vsub.f32 1.0, %v2333
      %v2366 = vsub.f32 1.0, %v2334
      %v2367 = vsub.f32 1.0, %v2335
      %v2368 = vsub.f32 1.0, %v2336
      %v2369 = vsub.f32 1.0, %v2337
      %v2370 = vsub.f32 1.0, %v2338
      %v2371 = vsub.f32 1.0, %v2339
      %v2372 = vsub.f32 1.0, %v2340
      %v2373 = vsub.f32 1.0, %v2341
      %v2374 = vsub.f32 1.0, %v2342
      %v2375 = vsub.f32 1.0, %v2343
      %v2376 = vsub.f32 1.0, %v2344
      %v2377 = vsub.f32 1.0, %v2345
      %v2378 = vsub.f32 1.0, %v2346
      %v2379 = vsub.f32 1.0, %v2347
      %v2380 = vsub.f32 1.0, %v2348
      %v2381 = vsub.f32 1.0, %v2349
      %v2382 = vsub.f32 1.0, %v2350
      %v2383 = vsub.f32 1.0, %v2351
      %v2384 = vsub.f32 1.0, %v2352
      %v2385 = vsub.f32 1.0, %v2353
      %vm2386 = vcmp.ge.f32.partialorder %v1714, 0.0
      %vm2387 = vcmp.ge.f32.partialorder %v1715, 0.0
      %vm2388 = vcmp.ge.f32.partialorder %v1716, 0.0
      %vm2389 = vcmp.ge.f32.partialorder %v1717, 0.0
      %vm2390 = vcmp.ge.f32.partialorder %v1718, 0.0
      %vm2391 = vcmp.ge.f32.partialorder %v1719, 0.0
      %vm2392 = vcmp.ge.f32.partialorder %v1720, 0.0
      %vm2393 = vcmp.ge.f32.partialorder %v1721, 0.0
      %vm2394 = vcmp.ge.f32.partialorder %v1722, 0.0
      %vm2395 = vcmp.ge.f32.partialorder %v1723, 0.0
      %vm2396 = vcmp.ge.f32.partialorder %v1724, 0.0
      %vm2397 = vcmp.ge.f32.partialorder %v1725, 0.0
      %vm2398 = vcmp.ge.f32.partialorder %v1726, 0.0
      %vm2399 = vcmp.ge.f32.partialorder %v1727, 0.0
      %vm2400 = vcmp.ge.f32.partialorder %v1728, 0.0
      %vm2401 = vcmp.ge.f32.partialorder %v1729, 0.0
      %vm2402 = vcmp.ge.f32.partialorder %v1730, 0.0
      %vm2403 = vcmp.ge.f32.partialorder %v1731, 0.0
      %vm2404 = vcmp.ge.f32.partialorder %v1732, 0.0
      %vm2405 = vcmp.ge.f32.partialorder %v1733, 0.0
      %vm2406 = vcmp.ge.f32.partialorder %v1734, 0.0
      %vm2407 = vcmp.ge.f32.partialorder %v1735, 0.0
      %vm2408 = vcmp.ge.f32.partialorder %v1736, 0.0
      %vm2409 = vcmp.ge.f32.partialorder %v1737, 0.0
      %vm2410 = vcmp.ge.f32.partialorder %v1738, 0.0
      %vm2411 = vcmp.ge.f32.partialorder %v1739, 0.0
      %vm2412 = vcmp.ge.f32.partialorder %v1740, 0.0
      %vm2413 = vcmp.ge.f32.partialorder %v1741, 0.0
      %vm2414 = vcmp.ge.f32.partialorder %v1742, 0.0
      %vm2415 = vcmp.ge.f32.partialorder %v1743, 0.0
      %vm2416 = vcmp.ge.f32.partialorder %v1744, 0.0
      %vm2417 = vcmp.ge.f32.partialorder %v1745, 0.0
      %v2418 = vsub.f32 0.0, %v2354
      %v2419 = vsub.f32 0.0, %v2355
      %v2420 = vsub.f32 0.0, %v2356
      %v2421 = vsub.f32 0.0, %v2357
      %v2422 = vsub.f32 0.0, %v2358
      %v2423 = vsub.f32 0.0, %v2359
      %v2424 = vsub.f32 0.0, %v2360
      %v2425 = vsub.f32 0.0, %v2361
      %v2426 = vsub.f32 0.0, %v2362
      %v2427 = vsub.f32 0.0, %v2363
      %v2428 = vsub.f32 0.0, %v2364
      %v2429 = vsub.f32 0.0, %v2365
      %v2430 = vsub.f32 0.0, %v2366
      %v2431 = vsub.f32 0.0, %v2367
      %v2432 = vsub.f32 0.0, %v2368
      %v2433 = vsub.f32 0.0, %v2369
      %v2434 = vsub.f32 0.0, %v2370
      %v2435 = vsub.f32 0.0, %v2371
      %v2436 = vsub.f32 0.0, %v2372
      %v2437 = vsub.f32 0.0, %v2373
      %v2438 = vsub.f32 0.0, %v2374
      %v2439 = vsub.f32 0.0, %v2375
      %v2440 = vsub.f32 0.0, %v2376
      %v2441 = vsub.f32 0.0, %v2377
      %v2442 = vsub.f32 0.0, %v2378
      %v2443 = vsub.f32 0.0, %v2379
      %v2444 = vsub.f32 0.0, %v2380
      %v2445 = vsub.f32 0.0, %v2381
      %v2446 = vsub.f32 0.0, %v2382
      %v2447 = vsub.f32 0.0, %v2383
      %v2448 = vsub.f32 0.0, %v2384
      %v2449 = vsub.f32 0.0, %v2385
      %v2450 = vsel %vm2386, %v2354, %v2418
      %v2451 = vsel %vm2387, %v2355, %v2419
      %v2452 = vsel %vm2388, %v2356, %v2420
      %v2453 = vsel %vm2389, %v2357, %v2421
      %v2454 = vsel %vm2390, %v2358, %v2422
      %v2455 = vsel %vm2391, %v2359, %v2423
      %v2456 = vsel %vm2392, %v2360, %v2424
      %v2457 = vsel %vm2393, %v2361, %v2425
      %v2458 = vsel %vm2394, %v2362, %v2426
      %v2459 = vsel %vm2395, %v2363, %v2427
      %v2460 = vsel %vm2396, %v2364, %v2428
      %v2461 = vsel %vm2397, %v2365, %v2429
      %v2462 = vsel %vm2398, %v2366, %v2430
      %v2463 = vsel %vm2399, %v2367, %v2431
      %v2464 = vsel %vm2400, %v2368, %v2432
      %v2465 = vsel %vm2401, %v2369, %v2433
      %v2466 = vsel %vm2402, %v2370, %v2434
      %v2467 = vsel %vm2403, %v2371, %v2435
      %v2468 = vsel %vm2404, %v2372, %v2436
      %v2469 = vsel %vm2405, %v2373, %v2437
      %v2470 = vsel %vm2406, %v2374, %v2438
      %v2471 = vsel %vm2407, %v2375, %v2439
      %v2472 = vsel %vm2408, %v2376, %v2440
      %v2473 = vsel %vm2409, %v2377, %v2441
      %v2474 = vsel %vm2410, %v2378, %v2442
      %v2475 = vsel %vm2411, %v2379, %v2443
      %v2476 = vsel %vm2412, %v2380, %v2444
      %v2477 = vsel %vm2413, %v2381, %v2445
      %v2478 = vsel %vm2414, %v2382, %v2446
      %v2479 = vsel %vm2415, %v2383, %v2447
      %v2480 = vsel %vm2416, %v2384, %v2448
      %v2481 = vsel %vm2417, %v2385, %v2449
      %v2482 = vadd.f32 %v2450, 1.0
      %v2483 = vadd.f32 %v2451, 1.0
      %v2484 = vadd.f32 %v2452, 1.0
      %v2485 = vadd.f32 %v2453, 1.0
      %v2486 = vadd.f32 %v2454, 1.0
      %v2487 = vadd.f32 %v2455, 1.0
      %v2488 = vadd.f32 %v2456, 1.0
      %v2489 = vadd.f32 %v2457, 1.0
      %v2490 = vadd.f32 %v2458, 1.0
      %v2491 = vadd.f32 %v2459, 1.0
      %v2492 = vadd.f32 %v2460, 1.0
      %v2493 = vadd.f32 %v2461, 1.0
      %v2494 = vadd.f32 %v2462, 1.0
      %v2495 = vadd.f32 %v2463, 1.0
      %v2496 = vadd.f32 %v2464, 1.0
      %v2497 = vadd.f32 %v2465, 1.0
      %v2498 = vadd.f32 %v2466, 1.0
      %v2499 = vadd.f32 %v2467, 1.0
      %v2500 = vadd.f32 %v2468, 1.0
      %v2501 = vadd.f32 %v2469, 1.0
      %v2502 = vadd.f32 %v2470, 1.0
      %v2503 = vadd.f32 %v2471, 1.0
      %v2504 = vadd.f32 %v2472, 1.0
      %v2505 = vadd.f32 %v2473, 1.0
      %v2506 = vadd.f32 %v2474, 1.0
      %v2507 = vadd.f32 %v2475, 1.0
      %v2508 = vadd.f32 %v2476, 1.0
      %v2509 = vadd.f32 %v2477, 1.0
      %v2510 = vadd.f32 %v2478, 1.0
      %v2511 = vadd.f32 %v2479, 1.0
      %v2512 = vadd.f32 %v2480, 1.0
      %v2513 = vadd.f32 %v2481, 1.0
      %v2514 = vmul.f32 %v1682, %v2482
      %v2515 = vmul.f32 %v1683, %v2483
      %v2516 = vmul.f32 %v1684, %v2484
      %v2517 = vmul.f32 %v1685, %v2485
      %v2518 = vmul.f32 %v1686, %v2486
      %v2519 = vmul.f32 %v1687, %v2487
      %v2520 = vmul.f32 %v1688, %v2488
      %v2521 = vmul.f32 %v1689, %v2489
      %v2522 = vmul.f32 %v1690, %v2490
      %v2523 = vmul.f32 %v1691, %v2491
      %v2524 = vmul.f32 %v1692, %v2492
      %v2525 = vmul.f32 %v1693, %v2493
      %v2526 = vmul.f32 %v1694, %v2494
      %v2527 = vmul.f32 %v1695, %v2495
      %v2528 = vmul.f32 %v1696, %v2496
      %v2529 = vmul.f32 %v1697, %v2497
      %v2530 = vmul.f32 %v1698, %v2498
      %v2531 = vmul.f32 %v1699, %v2499
      %v2532 = vmul.f32 %v1700, %v2500
      %v2533 = vmul.f32 %v1701, %v2501
      %v2534 = vmul.f32 %v1702, %v2502
      %v2535 = vmul.f32 %v1703, %v2503
      %v2536 = vmul.f32 %v1704, %v2504
      %v2537 = vmul.f32 %v1705, %v2505
      %v2538 = vmul.f32 %v1706, %v2506
      %v2539 = vmul.f32 %v1707, %v2507
      %v2540 = vmul.f32 %v1708, %v2508
      %v2541 = vmul.f32 %v1709, %v2509
      %v2542 = vmul.f32 %v1710, %v2510
      %v2543 = vmul.f32 %v1711, %v2511
      %v2544 = vmul.f32 %v1712, %v2512
      %v2545 = vmul.f32 %v1713, %v2513
      %v2546 = vld [vmem:[%s5] sm:$0xff]
      %v2547 = vld [vmem:[%s5 + $0x8] sm:$0xff]
      %v2548 = vld [vmem:[%s5 + $0x10] sm:$0xff]
      %v2549 = vld [vmem:[%s5 + $0x18] sm:$0xff]
      %v2550 = vld [vmem:[%s5 + $0x20] sm:$0xff]
      %v2551 = vld [vmem:[%s5 + $0x28] sm:$0xff]
      %v2552 = vld [vmem:[%s5 + $0x30] sm:$0xff]
      %v2553 = vld [vmem:[%s5 + $0x38] sm:$0xff]
      %v2554 = vld [vmem:[%s6] sm:$0x1]
      %v2556 = vlaneseq
      %v2557 = vshrl.u32 %v2556, 7
      %v2558 = vsub.s32 0, %v2557
      %v2559 = vrot.slane %v2554, %v2558
      %v2562 = vsel %vm644, %v2514, 0
      %v2565 = vsel %vm644, %v2515, 0
      %v2568 = vsel %vm644, %v2516, 0
      %v2571 = vsel %vm644, %v2517, 0
      %v2574 = vsel %vm644, %v2518, 0
      %v2577 = vsel %vm644, %v2519, 0
      %v2580 = vsel %vm644, %v2520, 0
      %v2583 = vsel %vm644, %v2521, 0
      %v2586 = vsel %vm644, %v2522, 0
      %v2589 = vsel %vm644, %v2523, 0
      %v2592 = vsel %vm644, %v2524, 0
      %v2595 = vsel %vm644, %v2525, 0
      %v2598 = vsel %vm644, %v2526, 0
      %v2601 = vsel %vm644, %v2527, 0
      %v2604 = vsel %vm644, %v2528, 0
      %v2607 = vsel %vm644, %v2529, 0
      %v2610 = vsel %vm644, %v2530, 0
      %v2613 = vsel %vm644, %v2531, 0
      %v2616 = vsel %vm644, %v2532, 0
      %v2619 = vsel %vm644, %v2533, 0
      %v2622 = vsel %vm644, %v2534, 0
      %v2625 = vsel %vm644, %v2535, 0
      %v2628 = vsel %vm644, %v2536, 0
      %v2631 = vsel %vm644, %v2537, 0
      %v2634 = vsel %vm644, %v2538, 0
      %v2637 = vsel %vm644, %v2539, 0
      %v2640 = vsel %vm644, %v2540, 0
      %v2643 = vsel %vm644, %v2541, 0
      %v2646 = vsel %vm644, %v2542, 0
      %v2649 = vsel %vm644, %v2543, 0
      %v2652 = vsel %vm644, %v2544, 0
      %v2655 = vsel %vm644, %v2545, 0
      %2657 = vmatprep.subr.mxu0 0.0
      %2658 = vmatpush1.msra.mxu0 %v2546
      %2659 = vmatprep.subr.mxu0 0.0
      %2660 = vmatpush1.msra.mxu0 %v2547
      %2661 = vmatprep.subr.mxu0 0.0
      %2662 = vmatpush1.msra.mxu0 %v2548
      %2663 = vmatprep.subr.mxu0 0.0
      %2664 = vmatpush1.msra.mxu0 %v2549
      %2665 = vmatprep.subr.mxu0 0.0
      %2666 = vmatpush1.msra.mxu0 %v2550
      %2667 = vmatprep.subr.mxu0 0.0
      %2668 = vmatpush1.msra.mxu0 %v2551
      %2669 = vmatprep.subr.mxu0 0.0
      %2670 = vmatpush1.msra.mxu0 %v2552
      %2671 = vmatprep.subr.mxu0 0.0
      %2672 = vmatpush1.msra.mxu0 %v2553
      %2673 = vmatprep.subr.mxu0 0.0
      %2674 = vmatpush1.msra.mxu0 0.0
      %2675 = vmatprep.subr.mxu0 0.0
      %2676 = vmatpush1.msra.mxu0 0.0
      %2677 = vmatprep.subr.mxu0 0.0
      %2678 = vmatpush1.msra.mxu0 0.0
      %2679 = vmatprep.subr.mxu0 0.0
      %2680 = vmatpush1.msra.mxu0 0.0
      %2681 = vmatprep.subr.mxu0 0.0
      %2682 = vmatpush1.msra.mxu0 0.0
      %2683 = vmatprep.subr.mxu0 0.0
      %2684 = vmatpush1.msra.mxu0 0.0
      %2685 = vmatprep.subr.mxu0 0.0
      %2686 = vmatpush1.msra.mxu0 0.0
      %2687 = vmatprep.subr.mxu0 0.0
      %2688 = vmatpush1.msra.mxu0 0.0
      %2689 = vmatprep.subr.mxu0 0.0
      %2690 = vmatpush1.msra.mxu0 0.0
      %2691 = vmatprep.subr.mxu0 0.0
      %2692 = vmatpush1.msra.mxu0 0.0
      %2693 = vmatprep.subr.mxu0 0.0
      %2694 = vmatpush1.msra.mxu0 0.0
      %2695 = vmatprep.subr.mxu0 0.0
      %2696 = vmatpush1.msra.mxu0 0.0
      %2697 = vmatprep.subr.mxu0 0.0
      %2698 = vmatpush1.msra.mxu0 0.0
      %2699 = vmatprep.subr.mxu0 0.0
      %2700 = vmatpush1.msra.mxu0 0.0
      %2701 = vmatprep.subr.mxu0 0.0
      %2702 = vmatpush1.msra.mxu0 0.0
      %2703 = vmatprep.subr.mxu0 0.0
      %2704 = vmatpush1.msra.mxu0 0.0
      %2705 = vmatprep.subr.mxu0 0.0
      %2706 = vmatpush1.msra.mxu0 0.0
      %2707 = vmatprep.subr.mxu0 0.0
      %2708 = vmatpush1.msra.mxu0 0.0
      %2709 = vmatprep.subr.mxu0 0.0
      %2710 = vmatpush1.msra.mxu0 0.0
      %2711 = vmatprep.subr.mxu0 0.0
      %2712 = vmatpush1.msra.mxu0 0.0
      %2713 = vmatprep.subr.mxu0 0.0
      %2714 = vmatpush1.msra.mxu0 0.0
      %2715 = vmatprep.subr.mxu0 0.0
      %2716 = vmatpush1.msra.mxu0 0.0
      %2717 = vmatprep.subr.mxu0 0.0
      %2718 = vmatpush1.msra.mxu0 0.0
      %2719 = vmatprep.subr.mxu0 0.0
      %2720 = vmatpush1.msra.mxu0 0.0
      %2721 = vmatprep.mubr.f32.mxu0 0.0
      %2722 = vmatmul.mubr.f32.gmra.mrb[0].mxu0 %v2562
      %v2723 = vpop.f32.mrb[0].mxu0
      %v2724 = vadd.f32 %v2559, %v2723
      %v2725 = vpop.f32.mrb[0].mxu0
      %2726 = vmatprep.mubr.f32.mxu0 0.0
      %2727 = vmatmul.mubr.f32.gmra.mrb[0].mxu0 %v2565
      %v2728 = vpop.f32.mrb[0].mxu0
      %v2729 = vadd.f32 %v2559, %v2728
      %v2730 = vpop.f32.mrb[0].mxu0
      %2731 = vmatprep.mubr.f32.mxu0 0.0
      %2732 = vmatmul.mubr.f32.gmra.mrb[0].mxu0 %v2568
      %v2733 = vpop.f32.mrb[0].mxu0
      %v2734 = vadd.f32 %v2559, %v2733
      %v2735 = vpop.f32.mrb[0].mxu0
      %2736 = vmatprep.mubr.f32.mxu0 0.0
      %2737 = vmatmul.mubr.f32.gmra.mrb[0].mxu0 %v2571
      %v2738 = vpop.f32.mrb[0].mxu0
      %v2739 = vadd.f32 %v2559, %v2738
      %v2740 = vpop.f32.mrb[0].mxu0
      %2741 = vmatprep.mubr.f32.mxu0 0.0
      %2742 = vmatmul.mubr.f32.gmra.mrb[0].mxu0 %v2574
      %v2743 = vpop.f32.mrb[0].mxu0
      %v2744 = vadd.f32 %v2559, %v2743
      %v2745 = vpop.f32.mrb[0].mxu0
      %2746 = vmatprep.mubr.f32.mxu0 0.0
      %2747 = vmatmul.mubr.f32.gmra.mrb[0].mxu0 %v2577
      %v2748 = vpop.f32.mrb[0].mxu0
      %v2749 = vadd.f32 %v2559, %v2748
      %v2750 = vpop.f32.mrb[0].mxu0
      %2751 = vmatprep.mubr.f32.mxu0 0.0
      %2752 = vmatmul.mubr.f32.gmra.mrb[0].mxu0 %v2580
      %v2753 = vpop.f32.mrb[0].mxu0
      %v2754 = vadd.f32 %v2559, %v2753
      %v2755 = vpop.f32.mrb[0].mxu0
      %2756 = vmatprep.mubr.f32.mxu0 0.0
      %2757 = vmatmul.mubr.f32.gmra.mrb[0].mxu0 %v2583
      %v2758 = vpop.f32.mrb[0].mxu0
      %v2759 = vadd.f32 %v2559, %v2758
      %v2760 = vpop.f32.mrb[0].mxu0
      %2761 = vmatprep.mubr.f32.mxu0 0.0
      %2762 = vmatmul.mubr.f32.gmra.mrb[0].mxu0 %v2586
      %v2763 = vpop.f32.mrb[0].mxu0
      %v2764 = vadd.f32 %v2559, %v2763
      %v2765 = vpop.f32.mrb[0].mxu0
      %2766 = vmatprep.mubr.f32.mxu0 0.0
      %2767 = vmatmul.mubr.f32.gmra.mrb[0].mxu0 %v2589
      %v2768 = vpop.f32.mrb[0].mxu0
      %v2769 = vadd.f32 %v2559, %v2768
      %v2770 = vpop.f32.mrb[0].mxu0
      %2771 = vmatprep.mubr.f32.mxu0 0.0
      %2772 = vmatmul.mubr.f32.gmra.mrb[0].mxu0 %v2592
      %v2773 = vpop.f32.mrb[0].mxu0
      %v2774 = vadd.f32 %v2559, %v2773
      %v2775 = vpop.f32.mrb[0].mxu0
      %2776 = vmatprep.mubr.f32.mxu0 0.0
      %2777 = vmatmul.mubr.f32.gmra.mrb[0].mxu0 %v2595
      %v2778 = vpop.f32.mrb[0].mxu0
      %v2779 = vadd.f32 %v2559, %v2778
      %v2780 = vpop.f32.mrb[0].mxu0
      %2781 = vmatprep.mubr.f32.mxu0 0.0
      %2782 = vmatmul.mubr.f32.gmra.mrb[0].mxu0 %v2598
      %v2783 = vpop.f32.mrb[0].mxu0
      %v2784 = vadd.f32 %v2559, %v2783
      %v2785 = vpop.f32.mrb[0].mxu0
      %2786 = vmatprep.mubr.f32.mxu0 0.0
      %2787 = vmatmul.mubr.f32.gmra.mrb[0].mxu0 %v2601
      %v2788 = vpop.f32.mrb[0].mxu0
      %v2789 = vadd.f32 %v2559, %v2788
      %v2790 = vpop.f32.mrb[0].mxu0
      %2791 = vmatprep.mubr.f32.mxu0 0.0
      %2792 = vmatmul.mubr.f32.gmra.mrb[0].mxu0 %v2604
      %v2793 = vpop.f32.mrb[0].mxu0
      %v2794 = vadd.f32 %v2559, %v2793
      %v2795 = vpop.f32.mrb[0].mxu0
      %2796 = vmatprep.mubr.f32.mxu0 0.0
      %2797 = vmatmul.mubr.f32.gmra.mrb[0].mxu0 %v2607
      %v2798 = vpop.f32.mrb[0].mxu0
      %v2799 = vadd.f32 %v2559, %v2798
      %v2800 = vpop.f32.mrb[0].mxu0
      %2801 = vmatprep.mubr.f32.mxu0 0.0
      %2802 = vmatmul.mubr.f32.gmra.mrb[0].mxu0 %v2610
      %v2803 = vpop.f32.mrb[0].mxu0
      %v2804 = vadd.f32 %v2559, %v2803
      %v2805 = vpop.f32.mrb[0].mxu0
      %2806 = vmatprep.mubr.f32.mxu0 0.0
      %2807 = vmatmul.mubr.f32.gmra.mrb[0].mxu0 %v2613
      %v2808 = vpop.f32.mrb[0].mxu0
      %v2809 = vadd.f32 %v2559, %v2808
      %v2810 = vpop.f32.mrb[0].mxu0
      %2811 = vmatprep.mubr.f32.mxu0 0.0
      %2812 = vmatmul.mubr.f32.gmra.mrb[0].mxu0 %v2616
      %v2813 = vpop.f32.mrb[0].mxu0
      %v2814 = vadd.f32 %v2559, %v2813
      %v2815 = vpop.f32.mrb[0].mxu0
      %2816 = vmatprep.mubr.f32.mxu0 0.0
      %2817 = vmatmul.mubr.f32.gmra.mrb[0].mxu0 %v2619
      %v2818 = vpop.f32.mrb[0].mxu0
      %v2819 = vadd.f32 %v2559, %v2818
      %v2820 = vpop.f32.mrb[0].mxu0
      %2821 = vmatprep.mubr.f32.mxu0 0.0
      %2822 = vmatmul.mubr.f32.gmra.mrb[0].mxu0 %v2622
      %v2823 = vpop.f32.mrb[0].mxu0
      %v2824 = vadd.f32 %v2559, %v2823
      %v2825 = vpop.f32.mrb[0].mxu0
      %2826 = vmatprep.mubr.f32.mxu0 0.0
      %2827 = vmatmul.mubr.f32.gmra.mrb[0].mxu0 %v2625
      %v2828 = vpop.f32.mrb[0].mxu0
      %v2829 = vadd.f32 %v2559, %v2828
      %v2830 = vpop.f32.mrb[0].mxu0
      %2831 = vmatprep.mubr.f32.mxu0 0.0
      %2832 = vmatmul.mubr.f32.gmra.mrb[0].mxu0 %v2628
      %v2833 = vpop.f32.mrb[0].mxu0
      %v2834 = vadd.f32 %v2559, %v2833
      %v2835 = vpop.f32.mrb[0].mxu0
      %2836 = vmatprep.mubr.f32.mxu0 0.0
      %2837 = vmatmul.mubr.f32.gmra.mrb[0].mxu0 %v2631
      %v2838 = vpop.f32.mrb[0].mxu0
      %v2839 = vadd.f32 %v2559, %v2838
      %v2840 = vpop.f32.mrb[0].mxu0
      %2841 = vmatprep.mubr.f32.mxu0 0.0
      %2842 = vmatmul.mubr.f32.gmra.mrb[0].mxu0 %v2634
      %v2843 = vpop.f32.mrb[0].mxu0
      %v2844 = vadd.f32 %v2559, %v2843
      %v2845 = vpop.f32.mrb[0].mxu0
      %2846 = vmatprep.mubr.f32.mxu0 0.0
      %2847 = vmatmul.mubr.f32.gmra.mrb[0].mxu0 %v2637
      %v2848 = vpop.f32.mrb[0].mxu0
      %v2849 = vadd.f32 %v2559, %v2848
      %v2850 = vpop.f32.mrb[0].mxu0
      %2851 = vmatprep.mubr.f32.mxu0 0.0
      %2852 = vmatmul.mubr.f32.gmra.mrb[0].mxu0 %v2640
      %v2853 = vpop.f32.mrb[0].mxu0
      %v2854 = vadd.f32 %v2559, %v2853
      %v2855 = vpop.f32.mrb[0].mxu0
      %2856 = vmatprep.mubr.f32.mxu0 0.0
      %2857 = vmatmul.mubr.f32.gmra.mrb[0].mxu0 %v2643
      %v2858 = vpop.f32.mrb[0].mxu0
      %v2859 = vadd.f32 %v2559, %v2858
      %v2860 = vpop.f32.mrb[0].mxu0
      %2861 = vmatprep.mubr.f32.mxu0 0.0
      %2862 = vmatmul.mubr.f32.gmra.mrb[0].mxu0 %v2646
      %v2863 = vpop.f32.mrb[0].mxu0
      %v2864 = vadd.f32 %v2559, %v2863
      %v2865 = vpop.f32.mrb[0].mxu0
      %2866 = vmatprep.mubr.f32.mxu0 0.0
      %2867 = vmatmul.mubr.f32.gmra.mrb[0].mxu0 %v2649
      %v2868 = vpop.f32.mrb[0].mxu0
      %v2869 = vadd.f32 %v2559, %v2868
      %v2870 = vpop.f32.mrb[0].mxu0
      %2871 = vmatprep.mubr.f32.mxu0 0.0
      %2872 = vmatmul.mubr.f32.gmra.mrb[0].mxu0 %v2652
      %v2873 = vpop.f32.mrb[0].mxu0
      %v2874 = vadd.f32 %v2559, %v2873
      %v2875 = vpop.f32.mrb[0].mxu0
      %2876 = vmatprep.mubr.f32.mxu0 0.0
      %2877 = vmatmul.mubr.f32.gmra.mrb[0].mxu0 %v2655
      %v2878 = vpop.f32.mrb[0].mxu0
      %v2879 = vadd.f32 %v2559, %v2878
      %v2880 = vpop.f32.mrb[0].mxu0
      %2881 = vdwg.mxu0
      %2882 = vst.msk [vmem:[%s278] sm:$0xff] %vm322, %v2724
      %2883 = vst.msk [vmem:[%s278 + $0x8] sm:$0xff] %vm322, %v2729
      %2884 = vst.msk [vmem:[%s278 + $0x10] sm:$0xff] %vm322, %v2734
      %2885 = vst.msk [vmem:[%s278 + $0x18] sm:$0xff] %vm322, %v2739
      %2886 = vst.msk [vmem:[%s278 + $0x20] sm:$0xff] %vm322, %v2744
      %2887 = vst.msk [vmem:[%s278 + $0x28] sm:$0xff] %vm322, %v2749
      %2888 = vst.msk [vmem:[%s278 + $0x30] sm:$0xff] %vm322, %v2754
      %2889 = vst.msk [vmem:[%s278 + $0x38] sm:$0xff] %vm322, %v2759
      %2890 = vst.msk [vmem:[%s278 + $0x40] sm:$0xff] %vm322, %v2764
      %2891 = vst.msk [vmem:[%s278 + $0x48] sm:$0xff] %vm322, %v2769
      %2892 = vst.msk [vmem:[%s278 + $0x50] sm:$0xff] %vm322, %v2774
      %2893 = vst.msk [vmem:[%s278 + $0x58] sm:$0xff] %vm322, %v2779
      %2894 = vst.msk [vmem:[%s278 + $0x60] sm:$0xff] %vm322, %v2784
      %2895 = vst.msk [vmem:[%s278 + $0x68] sm:$0xff] %vm322, %v2789
      %2896 = vst.msk [vmem:[%s278 + $0x70] sm:$0xff] %vm322, %v2794
      %2897 = vst.msk [vmem:[%s278 + $0x78] sm:$0xff] %vm322, %v2799
      %2898 = vst.msk [vmem:[%s278 + $0x80] sm:$0xff] %vm322, %v2804
      %2899 = vst.msk [vmem:[%s278 + $0x88] sm:$0xff] %vm322, %v2809
      %2900 = vst.msk [vmem:[%s278 + $0x90] sm:$0xff] %vm322, %v2814
      %2901 = vst.msk [vmem:[%s278 + $0x98] sm:$0xff] %vm322, %v2819
      %2902 = vst.msk [vmem:[%s278 + $0xa0] sm:$0xff] %vm322, %v2824
      %2903 = vst.msk [vmem:[%s278 + $0xa8] sm:$0xff] %vm322, %v2829
      %2904 = vst.msk [vmem:[%s278 + $0xb0] sm:$0xff] %vm322, %v2834
      %2905 = vst.msk [vmem:[%s278 + $0xb8] sm:$0xff] %vm322, %v2839
      %2906 = vst.msk [vmem:[%s278 + $0xc0] sm:$0xff] %vm322, %v2844
      %2907 = vst.msk [vmem:[%s278 + $0xc8] sm:$0xff] %vm322, %v2849
      %2908 = vst.msk [vmem:[%s278 + $0xd0] sm:$0xff] %vm322, %v2854
      %2909 = vst.msk [vmem:[%s278 + $0xd8] sm:$0xff] %vm322, %v2859
      %2910 = vst.msk [vmem:[%s278 + $0xe0] sm:$0xff] %vm322, %v2864
      %2911 = vst.msk [vmem:[%s278 + $0xe8] sm:$0xff] %vm322, %v2869
      %2912 = vst.msk [vmem:[%s278 + $0xf0] sm:$0xff] %vm322, %v2874
      %2913 = vst.msk [vmem:[%s278 + $0xf8] sm:$0xff] %vm322, %v2879
      %p2914 = scmp.lt.s32.totalorder %s18, 1
      %s2915 = scalar_select %p2914, %s18, 1
      %s2916 = smul.addr %s2915, 32
      %s2917 = smul.addr %s2916, 8
      %s2918 = scalar_lea.vmem %s7, %s2917
      // Predicated region
      $region49: #{tpu_custom_call.1} parent=47 // pred_check
        %p2919 = pneg %p188
      $region50: #{tpu_custom_call.1} parent=47 // pred_check_branch
        %2921 = sbr.rel (%p2919) target = $region52
      $region51: #{tpu_custom_call.1} parent=47 // pred_region
        _
      $region52: #{tpu_custom_call.1} parent=47 // pred_fallthru
        _
    $region48: #{tpu_custom_call.1} parent=5 // pred_fallthru
      _
    %p2922 = scmp.le.s32.totalorder 2, %s13
    // Predicated region
    $region53: #{tpu_custom_call.1} parent=5 // pred_check
      %p2923 = pneg %p2922
    $region54: #{tpu_custom_call.1} parent=5 // pred_check_branch
      %2925 = sbr.rel (%p2923) target = $region56
    $region55: #{tpu_custom_call.1} parent=5 // pred_region
      %s2926 = ssub.s32 %s13, 2
      // Predicated region
      $region57: #{tpu_custom_call.1} parent=55 // pred_check
        %p2927 = pneg %p194
      $region58: #{tpu_custom_call.1} parent=55 // pred_check_branch
        %2929 = sbr.rel (%p2927) target = $region60
      $region59: #{tpu_custom_call.1} parent=55 // pred_region
        %p2930 = scmp.lt.s32.totalorder %s19, 1
        %s2931 = scalar_select %p2930, %s19, 1
        %s2932 = smul.addr %s2931, 32
        %s2933 = smul.addr %s2932, 8
        %s2934 = scalar_lea.vmem %s7, %s2933
      $region60: #{tpu_custom_call.1} parent=55 // pred_fallthru
        _
    $region56: #{tpu_custom_call.1} parent=5 // pred_fallthru
      _
  $region6: #{tpu_custom_call.1} parent=0 // loop_footer
    %s17 = sadd.s32 1, %s13
  $region7: #{tpu_custom_call.1} parent=0 // loop_footer_branch
    %12 = sbr.rel target = $region3
  $region8: #{tpu_custom_call.1} parent=0 // loop_exit
    _

</llo_original>
